<compile_context>
chip_gen: v6e
topology: v6e:2x2x1
jax: 0.10.0
libtpu: 0.0.40
codegen_flags: <defaults>
</compile_context>

<pallas_src>
import functools
import math

import jax
import jax.numpy as jnp
from jax import lax
from jax.experimental import pallas as pl
from jax.experimental.pallas import tpu as pltpu


# ----------------------------------------------------------------------------
# Kernel 1: one-shot batched "prep" kernel.
# ----------------------------------------------------------------------------
def _prep_kernel(gene_ref, gene_w_ref, gene_b_ref, wq_ref,
                 cell_ref, ew1_ref, eb1_ref, ew2_ref, eb2_ref, ew3_ref, eb3_ref,
                 pert_ref, pw_ref, pb_ref,
                 drug_ref,
                 wdrug_ref, wcell_ref, wpert_ref, bout_ref,
                 q_out_ref, cell_out_ref, bias_out_ref):
    f32 = jnp.float32
    relu = lambda t: jnp.maximum(t, 0.0)

    # gene embedding -> Q projection (batch-invariant, computed exactly once)
    gene_e = (jnp.dot(gene_ref[...], gene_w_ref[...],
                      preferred_element_type=f32) + gene_b_ref[...])
    q_out_ref[...] = jnp.dot(gene_e, wq_ref[...], preferred_element_type=f32)

    # LinearEncoder: cell_in -> 200 -> 100 -> 50, ReLU after each layer
    h = relu(jnp.dot(cell_ref[...], ew1_ref[...],
                     preferred_element_type=f32) + eb1_ref[...])
    h = relu(jnp.dot(h, ew2_ref[...],
                     preferred_element_type=f32) + eb2_ref[...])
    cell_hidden = relu(jnp.dot(h, ew3_ref[...],
                               preferred_element_type=f32) + eb3_ref[...])
    cell_out_ref[...] = cell_hidden

    # pert dose embedding
    pert_e = (jnp.dot(pert_ref[...], pw_ref[...],
                      preferred_element_type=f32) + pb_ref[...])

    # drug_embed = sum over atoms
    drug_sum = jnp.sum(drug_ref[...], axis=1)                      # (B, E)

    # per-batch broadcast part of linear_1 (batched over B in one shot)
    bias = jnp.dot(relu(drug_sum), wdrug_ref[...], preferred_element_type=f32)
    bias = bias + jnp.dot(relu(cell_hidden), wcell_ref[...],
                          preferred_element_type=f32)
    bias = bias + jnp.dot(relu(pert_e), wpert_ref[...],
                          preferred_element_type=f32)
    bias = bias + bout_ref[...]
    bias_out_ref[...] = bias[:, None, :]                           # (B, 1, hid)


def pallas_prep(params, input_gene, input_cell_gex, input_pert_idose,
                drug_atom_embed):
    G, gene_in = input_gene.shape
    B, C = input_cell_gex.shape
    P = input_pert_idose.shape[1]
    A, E = drug_atom_embed.shape[1], drug_atom_embed.shape[2]
    Pe = params["pert_w"].shape[1]
    hid = params["fuse"]["w_dg"].shape[1]          # static (weight shape)
    enc, attn, fuse = params["enc"], params["attn"], params["fuse"]

    full = lambda shape: pl.BlockSpec(shape, lambda i: (0,) * len(shape))

    return pl.pallas_call(
        _prep_kernel,
        out_shape=(
            jax.ShapeDtypeStruct((G, E), jnp.float32),       # Q (shared)
            jax.ShapeDtypeStruct((B, 50), jnp.float32),      # cell_hidden
            jax.ShapeDtypeStruct((B, 1, hid), jnp.float32),  # per-batch bias
        ),
        grid=(1,),
        in_specs=[
            full((G, gene_in)), full((gene_in, E)), full((1, E)), full((E, E)),
            full((B, C)), full((C, 200)), full((1, 200)),
            full((200, 100)), full((1, 100)), full((100, 50)), full((1, 50)),
            full((B, P)), full((P, Pe)), full((1, Pe)),
            full((B, A, E)),
            full((E, hid)), full((50, hid)), full((Pe, hid)), full((1, hid)),
        ],
        out_specs=(full((G, E)), full((B, 50)), full((B, 1, hid))),
        compiler_params=pltpu.CompilerParams(
            dimension_semantics=("arbitrary",)),
    )(input_gene, params["gene_w"], params["gene_b"], attn["wq"],
      input_cell_gex, enc["w1"], enc["b1"], enc["w2"], enc["b2"],
      enc["w3"], enc["b3"],
      input_pert_idose, params["pert_w"], params["pert_b"],
      drug_atom_embed,
      fuse["w_drug"], fuse["w_cell"], fuse["w_pert"], fuse["b1"])


# ----------------------------------------------------------------------------
# Kernel 2: masked multi-head cross attention + final linear, per batch row.
# ----------------------------------------------------------------------------
def _attn_fuse_kernel(q_ref, drug_ref, mask_ref,
                      wk_ref, wv_ref, wo_ref, bo_ref,
                      wdg_ref, bias_ref, o_ref, *, n_heads):
    f32, bf16 = jnp.float32, jnp.bfloat16
    G, E = q_ref.shape
    dk = E // n_heads
    scale = 1.0 / math.sqrt(dk)

    q_all = q_ref[...]                      # (G, E)  shared across batch
    d = drug_ref[0]                         # (A, E)  this batch element
    m = mask_ref[0]                         # (1, A)
    A = m.shape[-1]

    # Heads batched: single full-width (A,E)@(E,E) projections, bf16 on MXU.
    d16 = d.astype(bf16)
    k_all = jnp.dot(d16, wk_ref[...].astype(bf16), preferred_element_type=f32)
    v_all = jnp.dot(d16, wv_ref[...].astype(bf16), preferred_element_type=f32)

    # Additive mask bias, built & broadcast once (hoisted out of head loop).
    mask_bias = jnp.broadcast_to(jnp.where(m > 0.0, 0.0, -1e9), (G, A))

    q16 = (q_all * scale).astype(bf16)
    k16 = k_all.astype(bf16)
    v16 = v_all.astype(bf16)

    ctxs = []
    for h in range(n_heads):                # static unroll over heads
        qh = q16[:, h * dk:(h + 1) * dk]    # (G, dk) static lane slices
        kh = k16[:, h * dk:(h + 1) * dk]    # (A, dk)
        vh = v16[:, h * dk:(h + 1) * dk]    # (A, dk)
        # q @ k^T without an explicit transpose: contract dim 1 of both.
        s = lax.dot_general(qh, kh, (((1,), (1,)), ((), ())),
                            preferred_element_type=f32) + mask_bias   # (G, A)
        s = s - jnp.max(s, axis=-1, keepdims=True)
        p = jnp.exp(s)
        p = p * pl.reciprocal(jnp.sum(p, axis=-1, keepdims=True), approx=True)
        ctxs.append(jnp.dot(p.astype(bf16), vh, preferred_element_type=f32))

    # concat-of-heads, then one full-width (G,E)@(E,E) output projection.
    ctx = jnp.concatenate(ctxs, axis=-1)                               # (G, E)
    attn = (jnp.dot(ctx.astype(bf16), wo_ref[...].astype(bf16),
                    preferred_element_type=f32) + bo_ref[...])         # (G, E)

    # relu(attn) @ W1[:E] + precomputed per-batch bias (drug/cell/pert/b1).
    out = (jnp.dot(jnp.maximum(attn, 0.0).astype(bf16),
                   wdg_ref[...].astype(bf16),
                   preferred_element_type=f32) + bias_ref[0])          # (G, hid)
    o_ref[0] = out


def pallas_attn_fuse(q, drug_atom_embed, mask, bias, attn_p, fuse_p, n_heads):
    G, E = q.shape
    B, A, _ = drug_atom_embed.shape
    hid = fuse_p["w_dg"].shape[1]
    mask3 = mask.reshape(B, 1, A)

    kernel = functools.partial(_attn_fuse_kernel, n_heads=n_heads)
    return pl.pallas_call(
        kernel,
        out_shape=jax.ShapeDtypeStruct((B, G, hid), jnp.float32),
        grid=(B,),
        in_specs=[
            pl.BlockSpec((G, E), lambda i: (0, 0)),            # Q (shared)
            pl.BlockSpec((1, A, E), lambda i: (i, 0, 0)),      # drug atoms
            pl.BlockSpec((1, 1, A), lambda i: (i, 0, 0)),      # mask row
            pl.BlockSpec((E, E), lambda i: (0, 0)),            # Wk (all heads)
            pl.BlockSpec((E, E), lambda i: (0, 0)),            # Wv (all heads)
            pl.BlockSpec((E, E), lambda i: (0, 0)),            # Wo (all heads)
            pl.BlockSpec((1, E), lambda i: (0, 0)),            # bo
            pl.BlockSpec((E, hid), lambda i: (0, 0)),          # W1 attn rows
            pl.BlockSpec((1, 1, hid), lambda i: (i, 0, 0)),    # per-batch bias
        ],
        out_specs=pl.BlockSpec((1, G, hid), lambda i: (i, 0, 0)),
        compiler_params=pltpu.CompilerParams(
            dimension_semantics=("parallel",)),
    )(q, drug_atom_embed, mask3,
      attn_p["wk"], attn_p["wv"], attn_p["wo"], attn_p["bo"],
      fuse_p["w_dg"], bias)


# ----------------------------------------------------------------------------
# Full MultiDCP forward (2 pallas_calls; no HBM round-trip of the attention).
# ----------------------------------------------------------------------------
def multidcp_forward(params, drug_atom_embed, input_gene, mask,
                     input_cell_gex, input_pert_idose, *, n_heads):
    q, cell_hidden, bias = pallas_prep(
        params, input_gene, input_cell_gex, input_pert_idose, drug_atom_embed)
    out = pallas_attn_fuse(q, drug_atom_embed, mask, bias,
                           params["attn"], params["fuse"], n_heads)
    return out, cell_hidden


def init_params(key, *, gene_in, emb, cell_in, pert_in, pert_emb, hid):
    ks = iter(jax.random.split(key, 32))
    f = lambda shape, s=0.05: (
        s * jax.random.normal(next(ks), shape)).astype(jnp.float32)
    return {
        "gene_w": f((gene_in, emb)), "gene_b": f((1, emb)),
        "pert_w": f((pert_in, pert_emb)), "pert_b": f((1, pert_emb)),
        "enc": {
            "w1": f((cell_in, 200)), "b1": f((1, 200)),
            "w2": f((200, 100)), "b2": f((1, 100)),
            "w3": f((100, 50)), "b3": f((1, 50)),
        },
        # multi-head weights stored concatenated over heads -> full-width 2D
        "attn": {
            "wq": f((emb, emb)), "wk": f((emb, emb)),
            "wv": f((emb, emb)), "wo": f((emb, emb)),
            "bo": f((1, emb)),
        },
        # linear_1 stored as a row-split over the concat order
        # [attn(E) | drug(E) | cell(50) | pert(pert_emb)]
        "fuse": {
            "w_dg": f((emb, hid)), "w_drug": f((emb, hid)),
            "w_cell": f((50, hid)), "w_pert": f((pert_emb, hid)),
            "b1": f((1, hid)),
        },
    }


if __name__ == "__main__":
    B = 2          # batch
    G = 16         # num_gene (978 in the real model)
    GENE_IN = 32   # gene_input_dim
    E = 128        # drug_emb_dim == gene_emb_dim (lane-dense)
    A = 8          # max atoms per drug
    CELL_IN = 64   # cell_id_input_dim
    PERT_IN = 4    # pert_idose_input_dim
    PERT_EMB = 4   # pert_idose_emb_dim
    HID = 128      # hid_dim (lane-dense)
    NH = 4         # attention heads (dk = E // NH = 32)

    key = jax.random.PRNGKey(0)
    kp, k1, k2, k3, k4 = jax.random.split(key, 5)
    params = init_params(kp, gene_in=GENE_IN, emb=E, cell_in=CELL_IN,
                         pert_in=PERT_IN, pert_emb=PERT_EMB, hid=HID)

    # TODO(synk): NeuralFingerprint source not provided -> drug_atom_embed is an input.
    drug_atom_embed = jax.random.normal(k1, (B, A, E), jnp.float32)
    input_gene = jax.random.normal(k2, (G, GENE_IN), jnp.float32)
    lengths = jnp.array([A, 5], jnp.int32)
    mask = (jnp.arange(A)[None, :] < lengths[:, None]).astype(jnp.float32)  # (B, A)
    input_cell_gex = jax.random.normal(k3, (B, CELL_IN), jnp.float32)
    input_pert_idose = jax.random.normal(k4, (B, PERT_IN), jnp.float32)

    fwd = jax.jit(functools.partial(multidcp_forward, n_heads=NH))
    out, cell_hidden = fwd(params, drug_atom_embed, input_gene, mask,
                           input_cell_gex, input_pert_idose)
    jax.block_until_ready((out, cell_hidden))

    assert out.shape == (B, G, HID) and cell_hidden.shape == (B, 50)
    assert jnp.all(jnp.isfinite(out)) and jnp.all(jnp.isfinite(cell_hidden))
    print("KERNEL_OK")
</pallas_src>

<mosaic_0001>
module attributes {stable_mosaic.version = 11 : i64} {
  func.func @_prep_kernel(%arg0: i32, %arg1: memref<16x32xf32, #tpu.memory_space<vmem>>, %arg2: memref<32x128xf32, #tpu.memory_space<vmem>>, %arg3: memref<1x128xf32, #tpu.memory_space<vmem>>, %arg4: memref<128x128xf32, #tpu.memory_space<vmem>>, %arg5: memref<2x64xf32, #tpu.memory_space<vmem>>, %arg6: memref<64x200xf32, #tpu.memory_space<vmem>>, %arg7: memref<1x200xf32, #tpu.memory_space<vmem>>, %arg8: memref<200x100xf32, #tpu.memory_space<vmem>>, %arg9: memref<1x100xf32, #tpu.memory_space<vmem>>, %arg10: memref<100x50xf32, #tpu.memory_space<vmem>>, %arg11: memref<1x50xf32, #tpu.memory_space<vmem>>, %arg12: memref<2x4xf32, #tpu.memory_space<vmem>>, %arg13: memref<4x4xf32, #tpu.memory_space<vmem>>, %arg14: memref<1x4xf32, #tpu.memory_space<vmem>>, %arg15: memref<2x8x128xf32, #tpu.memory_space<vmem>>, %arg16: memref<128x128xf32, #tpu.memory_space<vmem>>, %arg17: memref<50x128xf32, #tpu.memory_space<vmem>>, %arg18: memref<4x128xf32, #tpu.memory_space<vmem>>, %arg19: memref<1x128xf32, #tpu.memory_space<vmem>>, %arg20: memref<16x128xf32, #tpu.memory_space<vmem>>, %arg21: memref<2x50xf32, #tpu.memory_space<vmem>>, %arg22: memref<2x1x128xf32, #tpu.memory_space<vmem>>) attributes {dimension_semantics = [#tpu.dimension_semantics<arbitrary>], iteration_bounds = array<i64: 1>, scalar_prefetch = 0 : i64, scratch_operands = 0 : i64, tpu.core_type = #tpu.core_type<tc>, window_params = [{pipeline_mode = #tpu.pipeline_mode<synchronous>, transform_indices = @transform_0, window_bounds = array<i64: 16, 32>}, {pipeline_mode = #tpu.pipeline_mode<synchronous>, transform_indices = @transform_1, window_bounds = array<i64: 32, 128>}, {pipeline_mode = #tpu.pipeline_mode<synchronous>, transform_indices = @transform_2, window_bounds = array<i64: 1, 128>}, {pipeline_mode = #tpu.pipeline_mode<synchronous>, transform_indices = @transform_3, window_bounds = array<i64: 128, 128>}, {pipeline_mode = #tpu.pipeline_mode<synchronous>, transform_indices = @transform_4, window_bounds = array<i64: 2, 64>}, {pipeline_mode = #tpu.pipeline_mode<synchronous>, transform_indices = @transform_5, window_bounds = array<i64: 64, 200>}, {pipeline_mode = #tpu.pipeline_mode<synchronous>, transform_indices = @transform_6, window_bounds = array<i64: 1, 200>}, {pipeline_mode = #tpu.pipeline_mode<synchronous>, transform_indices = @transform_7, window_bounds = array<i64: 200, 100>}, {pipeline_mode = #tpu.pipeline_mode<synchronous>, transform_indices = @transform_8, window_bounds = array<i64: 1, 100>}, {pipeline_mode = #tpu.pipeline_mode<synchronous>, transform_indices = @transform_9, window_bounds = array<i64: 100, 50>}, {pipeline_mode = #tpu.pipeline_mode<synchronous>, transform_indices = @transform_10, window_bounds = array<i64: 1, 50>}, {pipeline_mode = #tpu.pipeline_mode<synchronous>, transform_indices = @transform_11, window_bounds = array<i64: 2, 4>}, {pipeline_mode = #tpu.pipeline_mode<synchronous>, transform_indices = @transform_12, window_bounds = array<i64: 4, 4>}, {pipeline_mode = #tpu.pipeline_mode<synchronous>, transform_indices = @transform_13, window_bounds = array<i64: 1, 4>}, {pipeline_mode = #tpu.pipeline_mode<synchronous>, transform_indices = @transform_14, window_bounds = array<i64: 2, 8, 128>}, {pipeline_mode = #tpu.pipeline_mode<synchronous>, transform_indices = @transform_15, window_bounds = array<i64: 128, 128>}, {pipeline_mode = #tpu.pipeline_mode<synchronous>, transform_indices = @transform_16, window_bounds = array<i64: 50, 128>}, {pipeline_mode = #tpu.pipeline_mode<synchronous>, transform_indices = @transform_17, window_bounds = array<i64: 4, 128>}, {pipeline_mode = #tpu.pipeline_mode<synchronous>, transform_indices = @transform_18, window_bounds = array<i64: 1, 128>}, {pipeline_mode = #tpu.pipeline_mode<synchronous>, transform_indices = @transform_19, window_bounds = array<i64: 16, 128>}, {pipeline_mode = #tpu.pipeline_mode<synchronous>, transform_indices = @transform_20, window_bounds = array<i64: 2, 50>}, {pipeline_mode = #tpu.pipeline_mode<synchronous>, transform_indices = @transform_21, window_bounds = array<i64: 2, 1, 128>}]} {
    %c0 = arith.constant 0 : index
    %c0_0 = arith.constant 0 : index
    %0 = vector.load %arg1[%c0, %c0_0] : memref<16x32xf32, #tpu.memory_space<vmem>>, vector<16x32xf32>
    %c0_1 = arith.constant 0 : index
    %c0_2 = arith.constant 0 : index
    %1 = vector.load %arg2[%c0_1, %c0_2] : memref<32x128xf32, #tpu.memory_space<vmem>>, vector<32x128xf32>
    %cst = arith.constant dense<0.000000e+00> : vector<16x128xf32>
    %2 = tpu.matmul %0, %1, %cst {dimension_numbers = #tpu.dot_dimension_numbers<[1], [0], [0], [1], [0, 0, 1, 1], [], []>} : vector<16x32xf32>, vector<32x128xf32>, vector<16x128xf32> -> vector<16x128xf32>
    %c0_3 = arith.constant 0 : index
    %c0_4 = arith.constant 0 : index
    %3 = vector.load %arg3[%c0_3, %c0_4] : memref<1x128xf32, #tpu.memory_space<vmem>>, vector<1x128xf32>
    %4 = vector.broadcast %3 : vector<1x128xf32> to vector<16x128xf32>
    %5 = arith.addf %2, %4 : vector<16x128xf32>
    %c0_5 = arith.constant 0 : index
    %c0_6 = arith.constant 0 : index
    %6 = vector.load %arg4[%c0_5, %c0_6] : memref<128x128xf32, #tpu.memory_space<vmem>>, vector<128x128xf32>
    %cst_7 = arith.constant dense<0.000000e+00> : vector<16x128xf32>
    %7 = tpu.matmul %5, %6, %cst_7 {dimension_numbers = #tpu.dot_dimension_numbers<[1], [0], [0], [1], [0, 0, 1, 1], [], []>} : vector<16x128xf32>, vector<128x128xf32>, vector<16x128xf32> -> vector<16x128xf32>
    %c0_8 = arith.constant 0 : index
    %c0_9 = arith.constant 0 : index
    %8 = vector.load %arg20[%c0_8, %c0_9] : memref<16x128xf32, #tpu.memory_space<vmem>>, vector<16x128xf32>
    tpu.vector_store %arg20[%c0_8, %c0_9], %7 {strides = array<i32>} : memref<16x128xf32, #tpu.memory_space<vmem>>, vector<16x128xf32>,
    %c0_10 = arith.constant 0 : index
    %c0_11 = arith.constant 0 : index
    %9 = vector.load %arg5[%c0_10, %c0_11] : memref<2x64xf32, #tpu.memory_space<vmem>>, vector<2x64xf32>
    %c0_12 = arith.constant 0 : index
    %c0_13 = arith.constant 0 : index
    %10 = vector.load %arg6[%c0_12, %c0_13] : memref<64x200xf32, #tpu.memory_space<vmem>>, vector<64x200xf32>
    %cst_14 = arith.constant dense<0.000000e+00> : vector<2x200xf32>
    %11 = tpu.matmul %9, %10, %cst_14 {dimension_numbers = #tpu.dot_dimension_numbers<[1], [0], [0], [1], [0, 0, 1, 1], [], []>} : vector<2x64xf32>, vector<64x200xf32>, vector<2x200xf32> -> vector<2x200xf32>
    %c0_15 = arith.constant 0 : index
    %c0_16 = arith.constant 0 : index
    %12 = vector.load %arg7[%c0_15, %c0_16] : memref<1x200xf32, #tpu.memory_space<vmem>>, vector<1x200xf32>
    %13 = vector.broadcast %12 : vector<1x200xf32> to vector<2x200xf32>
    %14 = arith.addf %11, %13 : vector<2x200xf32>
    %cst_17 = arith.constant 0.000000e+00 : f32
    %15 = vector.broadcast %cst_17 : f32 to vector<2x200xf32>
    %16 = arith.maximumf %14, %15 : vector<2x200xf32>
    %c0_18 = arith.constant 0 : index
    %c0_19 = arith.constant 0 : index
    %17 = vector.load %arg8[%c0_18, %c0_19] : memref<200x100xf32, #tpu.memory_space<vmem>>, vector<200x100xf32>
    %cst_20 = arith.constant dense<0.000000e+00> : vector<2x100xf32>
    %18 = tpu.matmul %16, %17, %cst_20 {dimension_numbers = #tpu.dot_dimension_numbers<[1], [0], [0], [1], [0, 0, 1, 1], [], []>} : vector<2x200xf32>, vector<200x100xf32>, vector<2x100xf32> -> vector<2x100xf32>
    %c0_21 = arith.constant 0 : index
    %c0_22 = arith.constant 0 : index
    %19 = vector.load %arg9[%c0_21, %c0_22] : memref<1x100xf32, #tpu.memory_space<vmem>>, vector<1x100xf32>
    %20 = vector.broadcast %19 : vector<1x100xf32> to vector<2x100xf32>
    %21 = arith.addf %18, %20 : vector<2x100xf32>
    %cst_23 = arith.constant 0.000000e+00 : f32
    %22 = vector.broadcast %cst_23 : f32 to vector<2x100xf32>
    %23 = arith.maximumf %21, %22 : vector<2x100xf32>
    %c0_24 = arith.constant 0 : index
    %c0_25 = arith.constant 0 : index
    %24 = vector.load %arg10[%c0_24, %c0_25] : memref<100x50xf32, #tpu.memory_space<vmem>>, vector<100x50xf32>
    %cst_26 = arith.constant dense<0.000000e+00> : vector<2x50xf32>
    %25 = tpu.matmul %23, %24, %cst_26 {dimension_numbers = #tpu.dot_dimension_numbers<[1], [0], [0], [1], [0, 0, 1, 1], [], []>} : vector<2x100xf32>, vector<100x50xf32>, vector<2x50xf32> -> vector<2x50xf32>
    %c0_27 = arith.constant 0 : index
    %c0_28 = arith.constant 0 : index
    %26 = vector.load %arg11[%c0_27, %c0_28] : memref<1x50xf32, #tpu.memory_space<vmem>>, vector<1x50xf32>
    %27 = vector.broadcast %26 : vector<1x50xf32> to vector<2x50xf32>
    %28 = arith.addf %25, %27 : vector<2x50xf32>
    %cst_29 = arith.constant 0.000000e+00 : f32
    %29 = vector.broadcast %cst_29 : f32 to vector<2x50xf32>
    %30 = arith.maximumf %28, %29 : vector<2x50xf32>
    %c0_30 = arith.constant 0 : index
    %c0_31 = arith.constant 0 : index
    %31 = vector.load %arg21[%c0_30, %c0_31] : memref<2x50xf32, #tpu.memory_space<vmem>>, vector<2x50xf32>
    tpu.vector_store %arg21[%c0_30, %c0_31], %30 {strides = array<i32>} : memref<2x50xf32, #tpu.memory_space<vmem>>, vector<2x50xf32>,
    %c0_32 = arith.constant 0 : index
    %c0_33 = arith.constant 0 : index
    %32 = vector.load %arg12[%c0_32, %c0_33] : memref<2x4xf32, #tpu.memory_space<vmem>>, vector<2x4xf32>
    %c0_34 = arith.constant 0 : index
    %c0_35 = arith.constant 0 : index
    %33 = vector.load %arg13[%c0_34, %c0_35] : memref<4x4xf32, #tpu.memory_space<vmem>>, vector<4x4xf32>
    %cst_36 = arith.constant dense<0.000000e+00> : vector<2x4xf32>
    %34 = tpu.matmul %32, %33, %cst_36 {dimension_numbers = #tpu.dot_dimension_numbers<[1], [0], [0], [1], [0, 0, 1, 1], [], []>} : vector<2x4xf32>, vector<4x4xf32>, vector<2x4xf32> -> vector<2x4xf32>
    %c0_37 = arith.constant 0 : index
    %c0_38 = arith.constant 0 : index
    %35 = vector.load %arg14[%c0_37, %c0_38] : memref<1x4xf32, #tpu.memory_space<vmem>>, vector<1x4xf32>
    %36 = vector.broadcast %35 : vector<1x4xf32> to vector<2x4xf32>
    %37 = arith.addf %34, %36 : vector<2x4xf32>
    %c0_39 = arith.constant 0 : index
    %c0_40 = arith.constant 0 : index
    %c0_41 = arith.constant 0 : index
    %38 = vector.load %arg15[%c0_39, %c0_40, %c0_41] : memref<2x8x128xf32, #tpu.memory_space<vmem>>, vector<2x8x128xf32>
    %cst_42 = arith.constant dense<0.000000e+00> : vector<2x128xf32>
    %39 = vector.multi_reduction <add>, %38, %cst_42 [1] : vector<2x8x128xf32> to vector<2x128xf32>
    %cst_43 = arith.constant 0.000000e+00 : f32
    %40 = vector.broadcast %cst_43 : f32 to vector<2x128xf32>
    %41 = arith.maximumf %39, %40 : vector<2x128xf32>
    %c0_44 = arith.constant 0 : index
    %c0_45 = arith.constant 0 : index
    %42 = vector.load %arg16[%c0_44, %c0_45] : memref<128x128xf32, #tpu.memory_space<vmem>>, vector<128x128xf32>
    %cst_46 = arith.constant dense<0.000000e+00> : vector<2x128xf32>
    %43 = tpu.matmul %41, %42, %cst_46 {dimension_numbers = #tpu.dot_dimension_numbers<[1], [0], [0], [1], [0, 0, 1, 1], [], []>} : vector<2x128xf32>, vector<128x128xf32>, vector<2x128xf32> -> vector<2x128xf32>
    %cst_47 = arith.constant 0.000000e+00 : f32
    %44 = vector.broadcast %cst_47 : f32 to vector<2x50xf32>
    %45 = arith.maximumf %30, %44 : vector<2x50xf32>
    %c0_48 = arith.constant 0 : index
    %c0_49 = arith.constant 0 : index
    %46 = vector.load %arg17[%c0_48, %c0_49] : memref<50x128xf32, #tpu.memory_space<vmem>>, vector<50x128xf32>
    %cst_50 = arith.constant dense<0.000000e+00> : vector<2x128xf32>
    %47 = tpu.matmul %45, %46, %cst_50 {dimension_numbers = #tpu.dot_dimension_numbers<[1], [0], [0], [1], [0, 0, 1, 1], [], []>} : vector<2x50xf32>, vector<50x128xf32>, vector<2x128xf32> -> vector<2x128xf32>
    %48 = arith.addf %43, %47 : vector<2x128xf32>
    %cst_51 = arith.constant 0.000000e+00 : f32
    %49 = vector.broadcast %cst_51 : f32 to vector<2x4xf32>
    %50 = arith.maximumf %37, %49 : vector<2x4xf32>
    %c0_52 = arith.constant 0 : index
    %c0_53 = arith.constant 0 : index
    %51 = vector.load %arg18[%c0_52, %c0_53] : memref<4x128xf32, #tpu.memory_space<vmem>>, vector<4x128xf32>
    %cst_54 = arith.constant dense<0.000000e+00> : vector<2x128xf32>
    %52 = tpu.matmul %50, %51, %cst_54 {dimension_numbers = #tpu.dot_dimension_numbers<[1], [0], [0], [1], [0, 0, 1, 1], [], []>} : vector<2x4xf32>, vector<4x128xf32>, vector<2x128xf32> -> vector<2x128xf32>
    %53 = arith.addf %48, %52 : vector<2x128xf32>
    %c0_55 = arith.constant 0 : index
    %c0_56 = arith.constant 0 : index
    %54 = vector.load %arg19[%c0_55, %c0_56] : memref<1x128xf32, #tpu.memory_space<vmem>>, vector<1x128xf32>
    %55 = vector.broadcast %54 : vector<1x128xf32> to vector<2x128xf32>
    %56 = arith.addf %53, %55 : vector<2x128xf32>
    %57 = vector.shape_cast %56 : vector<2x128xf32> to vector<2x1x128xf32>
    %c0_57 = arith.constant 0 : index
    %c0_58 = arith.constant 0 : index
    %c0_59 = arith.constant 0 : index
    %58 = vector.load %arg22[%c0_57, %c0_58, %c0_59] : memref<2x1x128xf32, #tpu.memory_space<vmem>>, vector<2x1x128xf32>
    tpu.vector_store %arg22[%c0_57, %c0_58, %c0_59], %57 {strides = array<i32>} : memref<2x1x128xf32, #tpu.memory_space<vmem>>, vector<2x1x128xf32>,
    return
  }
  func.func @transform_0(%arg0: i32) -> (i32, i32) {
    %c0_i32 = arith.constant 0 : i32
    %c0_i32_0 = arith.constant 0 : i32
    %c0_i32_1 = arith.constant 0 : i32
    return %c0_i32, %c0_i32_0 : i32, i32
  }
  func.func @transform_1(%arg0: i32) -> (i32, i32) {
    %c0_i32 = arith.constant 0 : i32
    %c0_i32_0 = arith.constant 0 : i32
    %c0_i32_1 = arith.constant 0 : i32
    return %c0_i32, %c0_i32_0 : i32, i32
  }
  func.func @transform_2(%arg0: i32) -> (i32, i32) {
    %c0_i32 = arith.constant 0 : i32
    %c0_i32_0 = arith.constant 0 : i32
    %c0_i32_1 = arith.constant 0 : i32
    return %c0_i32, %c0_i32_0 : i32, i32
  }
  func.func @transform_3(%arg0: i32) -> (i32, i32) {
    %c0_i32 = arith.constant 0 : i32
    %c0_i32_0 = arith.constant 0 : i32
    %c0_i32_1 = arith.constant 0 : i32
    return %c0_i32, %c0_i32_0 : i32, i32
  }
  func.func @transform_4(%arg0: i32) -> (i32, i32) {
    %c0_i32 = arith.constant 0 : i32
    %c0_i32_0 = arith.constant 0 : i32
    %c0_i32_1 = arith.constant 0 : i32
    return %c0_i32, %c0_i32_0 : i32, i32
  }
  func.func @transform_5(%arg0: i32) -> (i32, i32) {
    %c0_i32 = arith.constant 0 : i32
    %c0_i32_0 = arith.constant 0 : i32
    %c0_i32_1 = arith.constant 0 : i32
    return %c0_i32, %c0_i32_0 : i32, i32
  }
  func.func @transform_6(%arg0: i32) -> (i32, i32) {
    %c0_i32 = arith.constant 0 : i32
    %c0_i32_0 = arith.constant 0 : i32
    %c0_i32_1 = arith.constant 0 : i32
    return %c0_i32, %c0_i32_0 : i32, i32
  }
  func.func @transform_7(%arg0: i32) -> (i32, i32) {
    %c0_i32 = arith.constant 0 : i32
    %c0_i32_0 = arith.constant 0 : i32
    %c0_i32_1 = arith.constant 0 : i32
    return %c0_i32, %c0_i32_0 : i32, i32
  }
  func.func @transform_8(%arg0: i32) -> (i32, i32) {
    %c0_i32 = arith.constant 0 : i32
    %c0_i32_0 = arith.constant 0 : i32
    %c0_i32_1 = arith.constant 0 : i32
    return %c0_i32, %c0_i32_0 : i32, i32
  }
  func.func @transform_9(%arg0: i32) -> (i32, i32) {
    %c0_i32 = arith.constant 0 : i32
    %c0_i32_0 = arith.constant 0 : i32
    %c0_i32_1 = arith.constant 0 : i32
    return %c0_i32, %c0_i32_0 : i32, i32
  }
  func.func @transform_10(%arg0: i32) -> (i32, i32) {
    %c0_i32 = arith.constant 0 : i32
    %c0_i32_0 = arith.constant 0 : i32
    %c0_i32_1 = arith.constant 0 : i32
    return %c0_i32, %c0_i32_0 : i32, i32
  }
  func.func @transform_11(%arg0: i32) -> (i32, i32) {
    %c0_i32 = arith.constant 0 : i32
    %c0_i32_0 = arith.constant 0 : i32
    %c0_i32_1 = arith.constant 0 : i32
    return %c0_i32, %c0_i32_0 : i32, i32
  }
  func.func @transform_12(%arg0: i32) -> (i32, i32) {
    %c0_i32 = arith.constant 0 : i32
    %c0_i32_0 = arith.constant 0 : i32
    %c0_i32_1 = arith.constant 0 : i32
    return %c0_i32, %c0_i32_0 : i32, i32
  }
  func.func @transform_13(%arg0: i32) -> (i32, i32) {
    %c0_i32 = arith.constant 0 : i32
    %c0_i32_0 = arith.constant 0 : i32
    %c0_i32_1 = arith.constant 0 : i32
    return %c0_i32, %c0_i32_0 : i32, i32
  }
  func.func @transform_14(%arg0: i32) -> (i32, i32, i32) {
    %c0_i32 = arith.constant 0 : i32
    %c0_i32_0 = arith.constant 0 : i32
    %c0_i32_1 = arith.constant 0 : i32
    %c0_i32_2 = arith.constant 0 : i32
    return %c0_i32, %c0_i32_0, %c0_i32_1 : i32, i32, i32
  }
  func.func @transform_15(%arg0: i32) -> (i32, i32) {
    %c0_i32 = arith.constant 0 : i32
    %c0_i32_0 = arith.constant 0 : i32
    %c0_i32_1 = arith.constant 0 : i32
    return %c0_i32, %c0_i32_0 : i32, i32
  }
  func.func @transform_16(%arg0: i32) -> (i32, i32) {
    %c0_i32 = arith.constant 0 : i32
    %c0_i32_0 = arith.constant 0 : i32
    %c0_i32_1 = arith.constant 0 : i32
    return %c0_i32, %c0_i32_0 : i32, i32
  }
  func.func @transform_17(%arg0: i32) -> (i32, i32) {
    %c0_i32 = arith.constant 0 : i32
    %c0_i32_0 = arith.constant 0 : i32
    %c0_i32_1 = arith.constant 0 : i32
    return %c0_i32, %c0_i32_0 : i32, i32
  }
  func.func @transform_18(%arg0: i32) -> (i32, i32) {
    %c0_i32 = arith.constant 0 : i32
    %c0_i32_0 = arith.constant 0 : i32
    %c0_i32_1 = arith.constant 0 : i32
    return %c0_i32, %c0_i32_0 : i32, i32
  }
  func.func @transform_19(%arg0: i32) -> (i32, i32) {
    %c0_i32 = arith.constant 0 : i32
    %c0_i32_0 = arith.constant 0 : i32
    %c0_i32_1 = arith.constant 0 : i32
    return %c0_i32, %c0_i32_0 : i32, i32
  }
  func.func @transform_20(%arg0: i32) -> (i32, i32) {
    %c0_i32 = arith.constant 0 : i32
    %c0_i32_0 = arith.constant 0 : i32
    %c0_i32_1 = arith.constant 0 : i32
    return %c0_i32, %c0_i32_0 : i32, i32
  }
  func.func @transform_21(%arg0: i32) -> (i32, i32, i32) {
    %c0_i32 = arith.constant 0 : i32
    %c0_i32_0 = arith.constant 0 : i32
    %c0_i32_1 = arith.constant 0 : i32
    %c0_i32_2 = arith.constant 0 : i32
    return %c0_i32, %c0_i32_0, %c0_i32_1 : i32, i32, i32
  }
}

module attributes {stable_mosaic.version = 11 : i64} {
  func.func @_attn_fuse_kernel(%arg0: i32, %arg1: memref<16x128xf32, #tpu.memory_space<vmem>>, %arg2: memref<1x8x128xf32, #tpu.memory_space<vmem>>, %arg3: memref<1x1x8xf32, #tpu.memory_space<vmem>>, %arg4: memref<128x128xf32, #tpu.memory_space<vmem>>, %arg5: memref<128x128xf32, #tpu.memory_space<vmem>>, %arg6: memref<128x128xf32, #tpu.memory_space<vmem>>, %arg7: memref<1x128xf32, #tpu.memory_space<vmem>>, %arg8: memref<128x128xf32, #tpu.memory_space<vmem>>, %arg9: memref<1x1x128xf32, #tpu.memory_space<vmem>>, %arg10: memref<1x16x128xf32, #tpu.memory_space<vmem>>) attributes {dimension_semantics = [#tpu.dimension_semantics<parallel>], iteration_bounds = array<i64: 2>, scalar_prefetch = 0 : i64, scratch_operands = 0 : i64, tpu.core_type = #tpu.core_type<tc>, window_params = [{pipeline_mode = #tpu.pipeline_mode<synchronous>, transform_indices = @transform_0, window_bounds = array<i64: 16, 128>}, {transform_indices = @transform_1, window_bounds = array<i64: 1, 8, 128>}, {transform_indices = @transform_2, window_bounds = array<i64: 1, 1, 8>}, {pipeline_mode = #tpu.pipeline_mode<synchronous>, transform_indices = @transform_3, window_bounds = array<i64: 128, 128>}, {pipeline_mode = #tpu.pipeline_mode<synchronous>, transform_indices = @transform_4, window_bounds = array<i64: 128, 128>}, {pipeline_mode = #tpu.pipeline_mode<synchronous>, transform_indices = @transform_5, window_bounds = array<i64: 128, 128>}, {pipeline_mode = #tpu.pipeline_mode<synchronous>, transform_indices = @transform_6, window_bounds = array<i64: 1, 128>}, {pipeline_mode = #tpu.pipeline_mode<synchronous>, transform_indices = @transform_7, window_bounds = array<i64: 128, 128>}, {transform_indices = @transform_8, window_bounds = array<i64: 1, 1, 128>}, {transform_indices = @transform_9, window_bounds = array<i64: 1, 16, 128>}]} {
    %c0 = arith.constant 0 : index
    %c0_0 = arith.constant 0 : index
    %0 = vector.load %arg1[%c0, %c0_0] : memref<16x128xf32, #tpu.memory_space<vmem>>, vector<16x128xf32>
    %c0_1 = arith.constant 0 : index
    %c0_2 = arith.constant 0 : index
    %c0_3 = arith.constant 0 : index
    %1 = vector.load %arg2[%c0_1, %c0_2, %c0_3] : memref<1x8x128xf32, #tpu.memory_space<vmem>>, vector<1x8x128xf32>
    %2 = vector.shape_cast %1 : vector<1x8x128xf32> to vector<8x128xf32>
    %c0_4 = arith.constant 0 : index
    %c0_5 = arith.constant 0 : index
    %c0_6 = arith.constant 0 : index
    %3 = vector.load %arg3[%c0_4, %c0_5, %c0_6] : memref<1x1x8xf32, #tpu.memory_space<vmem>>, vector<1x1x8xf32>
    %4 = vector.shape_cast %3 : vector<1x1x8xf32> to vector<1x8xf32>
    %5 = arith.truncf %2 : vector<8x128xf32> to vector<8x128xbf16>
    %c0_7 = arith.constant 0 : index
    %c0_8 = arith.constant 0 : index
    %6 = vector.load %arg4[%c0_7, %c0_8] : memref<128x128xf32, #tpu.memory_space<vmem>>, vector<128x128xf32>
    %7 = arith.truncf %6 : vector<128x128xf32> to vector<128x128xbf16>
    %cst = arith.constant dense<0.000000e+00> : vector<8x128xf32>
    %8 = tpu.matmul %5, %7, %cst {dimension_numbers = #tpu.dot_dimension_numbers<[1], [0], [0], [1], [0, 0, 1, 1], [], []>} : vector<8x128xbf16>, vector<128x128xbf16>, vector<8x128xf32> -> vector<8x128xf32>
    %c0_9 = arith.constant 0 : index
    %c0_10 = arith.constant 0 : index
    %9 = vector.load %arg5[%c0_9, %c0_10] : memref<128x128xf32, #tpu.memory_space<vmem>>, vector<128x128xf32>
    %10 = arith.truncf %9 : vector<128x128xf32> to vector<128x128xbf16>
    %cst_11 = arith.constant dense<0.000000e+00> : vector<8x128xf32>
    %11 = tpu.matmul %5, %10, %cst_11 {dimension_numbers = #tpu.dot_dimension_numbers<[1], [0], [0], [1], [0, 0, 1, 1], [], []>} : vector<8x128xbf16>, vector<128x128xbf16>, vector<8x128xf32> -> vector<8x128xf32>
    %cst_12 = arith.constant 0.000000e+00 : f32
    %12 = vector.broadcast %cst_12 : f32 to vector<1x8xf32>
    %13 = arith.cmpf ogt, %4, %12 : vector<1x8xf32>
    %cst_13 = arith.constant 0.000000e+00 : f32
    %cst_14 = arith.constant -1.000000e+09 : f32
    %14 = vector.broadcast %cst_13 : f32 to vector<1x8xf32>
    %15 = vector.broadcast %cst_14 : f32 to vector<1x8xf32>
    %16 = arith.select %13, %14, %15 : vector<1x8xi1>, vector<1x8xf32>
    %17 = vector.shape_cast %16 : vector<1x8xf32> to vector<1x8xf32>
    %18 = vector.broadcast %17 : vector<1x8xf32> to vector<16x8xf32>
    %cst_15 = arith.constant 0.176776692 : f32
    %19 = vector.broadcast %cst_15 : f32 to vector<16x128xf32>
    %20 = arith.mulf %0, %19 : vector<16x128xf32>
    %21 = arith.truncf %20 : vector<16x128xf32> to vector<16x128xbf16>
    %22 = arith.truncf %8 : vector<8x128xf32> to vector<8x128xbf16>
    %23 = arith.truncf %11 : vector<8x128xf32> to vector<8x128xbf16>
    %24 = vector.extract_strided_slice %21 {offsets = [0, 0], sizes = [16, 32], strides = [1, 1]} : vector<16x128xbf16> to vector<16x32xbf16>
    %25 = vector.extract_strided_slice %22 {offsets = [0, 0], sizes = [8, 32], strides = [1, 1]} : vector<8x128xbf16> to vector<8x32xbf16>
    %26 = vector.extract_strided_slice %23 {offsets = [0, 0], sizes = [8, 32], strides = [1, 1]} : vector<8x128xbf16> to vector<8x32xbf16>
    %cst_16 = arith.constant dense<0.000000e+00> : vector<16x8xf32>
    %27 = tpu.matmul %24, %25, %cst_16 {dimension_numbers = #tpu.dot_dimension_numbers<[1], [1], [0], [0], [0, 0, 1, 0], [], []>} : vector<16x32xbf16>, vector<8x32xbf16>, vector<16x8xf32> -> vector<16x8xf32>
    %28 = arith.addf %27, %18 : vector<16x8xf32>
    %cst_17 = arith.constant dense<0xFF800000> : vector<16xf32>
    %29 = vector.multi_reduction <maximumf>, %28, %cst_17 [1] : vector<16x8xf32> to vector<16xf32>
    %30 = vector.shape_cast %29 : vector<16xf32> to vector<16x1xf32>
    %31 = vector.broadcast %30 : vector<16x1xf32> to vector<16x8xf32>
    %32 = arith.subf %28, %31 : vector<16x8xf32>
    %33 = math.exp %32 : vector<16x8xf32>
    %cst_18 = arith.constant dense<0.000000e+00> : vector<16xf32>
    %34 = vector.multi_reduction <add>, %33, %cst_18 [1] : vector<16x8xf32> to vector<16xf32>
    %35 = vector.shape_cast %34 : vector<16xf32> to vector<16x1xf32>
    %36 = tpu.reciprocal %35 {approx = true} : vector<16x1xf32> -> vector<16x1xf32>
    %37 = vector.broadcast %36 : vector<16x1xf32> to vector<16x8xf32>
    %38 = arith.mulf %33, %37 : vector<16x8xf32>
    %39 = arith.truncf %38 : vector<16x8xf32> to vector<16x8xbf16>
    %cst_19 = arith.constant dense<0.000000e+00> : vector<16x32xf32>
    %40 = tpu.matmul %39, %26, %cst_19 {dimension_numbers = #tpu.dot_dimension_numbers<[1], [0], [0], [1], [0, 0, 1, 1], [], []>} : vector<16x8xbf16>, vector<8x32xbf16>, vector<16x32xf32> -> vector<16x32xf32>
    %41 = vector.extract_strided_slice %21 {offsets = [0, 32], sizes = [16, 32], strides = [1, 1]} : vector<16x128xbf16> to vector<16x32xbf16>
    %42 = vector.extract_strided_slice %22 {offsets = [0, 32], sizes = [8, 32], strides = [1, 1]} : vector<8x128xbf16> to vector<8x32xbf16>
    %43 = vector.extract_strided_slice %23 {offsets = [0, 32], sizes = [8, 32], strides = [1, 1]} : vector<8x128xbf16> to vector<8x32xbf16>
    %cst_20 = arith.constant dense<0.000000e+00> : vector<16x8xf32>
    %44 = tpu.matmul %41, %42, %cst_20 {dimension_numbers = #tpu.dot_dimension_numbers<[1], [1], [0], [0], [0, 0, 1, 0], [], []>} : vector<16x32xbf16>, vector<8x32xbf16>, vector<16x8xf32> -> vector<16x8xf32>
    %45 = arith.addf %44, %18 : vector<16x8xf32>
    %cst_21 = arith.constant dense<0xFF800000> : vector<16xf32>
    %46 = vector.multi_reduction <maximumf>, %45, %cst_21 [1] : vector<16x8xf32> to vector<16xf32>
    %47 = vector.shape_cast %46 : vector<16xf32> to vector<16x1xf32>
    %48 = vector.broadcast %47 : vector<16x1xf32> to vector<16x8xf32>
    %49 = arith.subf %45, %48 : vector<16x8xf32>
    %50 = math.exp %49 : vector<16x8xf32>
    %cst_22 = arith.constant dense<0.000000e+00> : vector<16xf32>
    %51 = vector.multi_reduction <add>, %50, %cst_22 [1] : vector<16x8xf32> to vector<16xf32>
    %52 = vector.shape_cast %51 : vector<16xf32> to vector<16x1xf32>
    %53 = tpu.reciprocal %52 {approx = true} : vector<16x1xf32> -> vector<16x1xf32>
    %54 = vector.broadcast %53 : vector<16x1xf32> to vector<16x8xf32>
    %55 = arith.mulf %50, %54 : vector<16x8xf32>
    %56 = arith.truncf %55 : vector<16x8xf32> to vector<16x8xbf16>
    %cst_23 = arith.constant dense<0.000000e+00> : vector<16x32xf32>
    %57 = tpu.matmul %56, %43, %cst_23 {dimension_numbers = #tpu.dot_dimension_numbers<[1], [0], [0], [1], [0, 0, 1, 1], [], []>} : vector<16x8xbf16>, vector<8x32xbf16>, vector<16x32xf32> -> vector<16x32xf32>
    %58 = vector.extract_strided_slice %21 {offsets = [0, 64], sizes = [16, 32], strides = [1, 1]} : vector<16x128xbf16> to vector<16x32xbf16>
    %59 = vector.extract_strided_slice %22 {offsets = [0, 64], sizes = [8, 32], strides = [1, 1]} : vector<8x128xbf16> to vector<8x32xbf16>
    %60 = vector.extract_strided_slice %23 {offsets = [0, 64], sizes = [8, 32], strides = [1, 1]} : vector<8x128xbf16> to vector<8x32xbf16>
    %cst_24 = arith.constant dense<0.000000e+00> : vector<16x8xf32>
    %61 = tpu.matmul %58, %59, %cst_24 {dimension_numbers = #tpu.dot_dimension_numbers<[1], [1], [0], [0], [0, 0, 1, 0], [], []>} : vector<16x32xbf16>, vector<8x32xbf16>, vector<16x8xf32> -> vector<16x8xf32>
    %62 = arith.addf %61, %18 : vector<16x8xf32>
    %cst_25 = arith.constant dense<0xFF800000> : vector<16xf32>
    %63 = vector.multi_reduction <maximumf>, %62, %cst_25 [1] : vector<16x8xf32> to vector<16xf32>
    %64 = vector.shape_cast %63 : vector<16xf32> to vector<16x1xf32>
    %65 = vector.broadcast %64 : vector<16x1xf32> to vector<16x8xf32>
    %66 = arith.subf %62, %65 : vector<16x8xf32>
    %67 = math.exp %66 : vector<16x8xf32>
    %cst_26 = arith.constant dense<0.000000e+00> : vector<16xf32>
    %68 = vector.multi_reduction <add>, %67, %cst_26 [1] : vector<16x8xf32> to vector<16xf32>
    %69 = vector.shape_cast %68 : vector<16xf32> to vector<16x1xf32>
    %70 = tpu.reciprocal %69 {approx = true} : vector<16x1xf32> -> vector<16x1xf32>
    %71 = vector.broadcast %70 : vector<16x1xf32> to vector<16x8xf32>
    %72 = arith.mulf %67, %71 : vector<16x8xf32>
    %73 = arith.truncf %72 : vector<16x8xf32> to vector<16x8xbf16>
    %cst_27 = arith.constant dense<0.000000e+00> : vector<16x32xf32>
    %74 = tpu.matmul %73, %60, %cst_27 {dimension_numbers = #tpu.dot_dimension_numbers<[1], [0], [0], [1], [0, 0, 1, 1], [], []>} : vector<16x8xbf16>, vector<8x32xbf16>, vector<16x32xf32> -> vector<16x32xf32>
    %75 = vector.extract_strided_slice %21 {offsets = [0, 96], sizes = [16, 32], strides = [1, 1]} : vector<16x128xbf16> to vector<16x32xbf16>
    %76 = vector.extract_strided_slice %22 {offsets = [0, 96], sizes = [8, 32], strides = [1, 1]} : vector<8x128xbf16> to vector<8x32xbf16>
    %77 = vector.extract_strided_slice %23 {offsets = [0, 96], sizes = [8, 32], strides = [1, 1]} : vector<8x128xbf16> to vector<8x32xbf16>
    %cst_28 = arith.constant dense<0.000000e+00> : vector<16x8xf32>
    %78 = tpu.matmul %75, %76, %cst_28 {dimension_numbers = #tpu.dot_dimension_numbers<[1], [1], [0], [0], [0, 0, 1, 0], [], []>} : vector<16x32xbf16>, vector<8x32xbf16>, vector<16x8xf32> -> vector<16x8xf32>
    %79 = arith.addf %78, %18 : vector<16x8xf32>
    %cst_29 = arith.constant dense<0xFF800000> : vector<16xf32>
    %80 = vector.multi_reduction <maximumf>, %79, %cst_29 [1] : vector<16x8xf32> to vector<16xf32>
    %81 = vector.shape_cast %80 : vector<16xf32> to vector<16x1xf32>
    %82 = vector.broadcast %81 : vector<16x1xf32> to vector<16x8xf32>
    %83 = arith.subf %79, %82 : vector<16x8xf32>
    %84 = math.exp %83 : vector<16x8xf32>
    %cst_30 = arith.constant dense<0.000000e+00> : vector<16xf32>
    %85 = vector.multi_reduction <add>, %84, %cst_30 [1] : vector<16x8xf32> to vector<16xf32>
    %86 = vector.shape_cast %85 : vector<16xf32> to vector<16x1xf32>
    %87 = tpu.reciprocal %86 {approx = true} : vector<16x1xf32> -> vector<16x1xf32>
    %88 = vector.broadcast %87 : vector<16x1xf32> to vector<16x8xf32>
    %89 = arith.mulf %84, %88 : vector<16x8xf32>
    %90 = arith.truncf %89 : vector<16x8xf32> to vector<16x8xbf16>
    %cst_31 = arith.constant dense<0.000000e+00> : vector<16x32xf32>
    %91 = tpu.matmul %90, %77, %cst_31 {dimension_numbers = #tpu.dot_dimension_numbers<[1], [0], [0], [1], [0, 0, 1, 1], [], []>} : vector<16x8xbf16>, vector<8x32xbf16>, vector<16x32xf32> -> vector<16x32xf32>
    %92 = tpu.concatenate %40, %57, %74, %91 in 1 : vector<16x32xf32>, vector<16x32xf32>, vector<16x32xf32>, vector<16x32xf32> -> vector<16x128xf32>
    %93 = arith.truncf %92 : vector<16x128xf32> to vector<16x128xbf16>
    %c0_32 = arith.constant 0 : index
    %c0_33 = arith.constant 0 : index
    %94 = vector.load %arg6[%c0_32, %c0_33] : memref<128x128xf32, #tpu.memory_space<vmem>>, vector<128x128xf32>
    %95 = arith.truncf %94 : vector<128x128xf32> to vector<128x128xbf16>
    %cst_34 = arith.constant dense<0.000000e+00> : vector<16x128xf32>
    %96 = tpu.matmul %93, %95, %cst_34 {dimension_numbers = #tpu.dot_dimension_numbers<[1], [0], [0], [1], [0, 0, 1, 1], [], []>} : vector<16x128xbf16>, vector<128x128xbf16>, vector<16x128xf32> -> vector<16x128xf32>
    %c0_35 = arith.constant 0 : index
    %c0_36 = arith.constant 0 : index
    %97 = vector.load %arg7[%c0_35, %c0_36] : memref<1x128xf32, #tpu.memory_space<vmem>>, vector<1x128xf32>
    %98 = vector.broadcast %97 : vector<1x128xf32> to vector<16x128xf32>
    %99 = arith.addf %96, %98 : vector<16x128xf32>
    %cst_37 = arith.constant 0.000000e+00 : f32
    %100 = vector.broadcast %cst_37 : f32 to vector<16x128xf32>
    %101 = arith.maximumf %99, %100 : vector<16x128xf32>
    %102 = arith.truncf %101 : vector<16x128xf32> to vector<16x128xbf16>
    %c0_38 = arith.constant 0 : index
    %c0_39 = arith.constant 0 : index
    %103 = vector.load %arg8[%c0_38, %c0_39] : memref<128x128xf32, #tpu.memory_space<vmem>>, vector<128x128xf32>
    %104 = arith.truncf %103 : vector<128x128xf32> to vector<128x128xbf16>
    %cst_40 = arith.constant dense<0.000000e+00> : vector<16x128xf32>
    %105 = tpu.matmul %102, %104, %cst_40 {dimension_numbers = #tpu.dot_dimension_numbers<[1], [0], [0], [1], [0, 0, 1, 1], [], []>} : vector<16x128xbf16>, vector<128x128xbf16>, vector<16x128xf32> -> vector<16x128xf32>
    %c0_41 = arith.constant 0 : index
    %c0_42 = arith.constant 0 : index
    %c0_43 = arith.constant 0 : index
    %106 = vector.load %arg9[%c0_41, %c0_42, %c0_43] : memref<1x1x128xf32, #tpu.memory_space<vmem>>, vector<1x1x128xf32>
    %107 = vector.shape_cast %106 : vector<1x1x128xf32> to vector<1x128xf32>
    %108 = vector.broadcast %107 : vector<1x128xf32> to vector<16x128xf32>
    %109 = arith.addf %105, %108 : vector<16x128xf32>
    %c0_44 = arith.constant 0 : index
    %c0_45 = arith.constant 0 : index
    %c0_46 = arith.constant 0 : index
    %110 = vector.load %arg10[%c0_44, %c0_45, %c0_46] : memref<1x16x128xf32, #tpu.memory_space<vmem>>, vector<1x16x128xf32>
    %111 = vector.shape_cast %110 : vector<1x16x128xf32> to vector<16x128xf32>
    %112 = vector.shape_cast %109 : vector<16x128xf32> to vector<1x16x128xf32>
    tpu.vector_store %arg10[%c0_44, %c0_45, %c0_46], %112 {strides = array<i32>} : memref<1x16x128xf32, #tpu.memory_space<vmem>>, vector<1x16x128xf32>,
    return
  }
  func.func @transform_0(%arg0: i32) -> (i32, i32) {
    %c0_i32 = arith.constant 0 : i32
    %c0_i32_0 = arith.constant 0 : i32
    %c0_i32_1 = arith.constant 0 : i32
    return %c0_i32, %c0_i32_0 : i32, i32
  }
  func.func @transform_1(%arg0: i32) -> (i32, i32, i32) {
    %c0_i32 = arith.constant 0 : i32
    %c0_i32_0 = arith.constant 0 : i32
    %c0_i32_1 = arith.constant 0 : i32
    return %arg0, %c0_i32, %c0_i32_0 : i32, i32, i32
  }
  func.func @transform_2(%arg0: i32) -> (i32, i32, i32) {
    %c0_i32 = arith.constant 0 : i32
    %c0_i32_0 = arith.constant 0 : i32
    %c0_i32_1 = arith.constant 0 : i32
    return %arg0, %c0_i32, %c0_i32_0 : i32, i32, i32
  }
  func.func @transform_3(%arg0: i32) -> (i32, i32) {
    %c0_i32 = arith.constant 0 : i32
    %c0_i32_0 = arith.constant 0 : i32
    %c0_i32_1 = arith.constant 0 : i32
    return %c0_i32, %c0_i32_0 : i32, i32
  }
  func.func @transform_4(%arg0: i32) -> (i32, i32) {
    %c0_i32 = arith.constant 0 : i32
    %c0_i32_0 = arith.constant 0 : i32
    %c0_i32_1 = arith.constant 0 : i32
    return %c0_i32, %c0_i32_0 : i32, i32
  }
  func.func @transform_5(%arg0: i32) -> (i32, i32) {
    %c0_i32 = arith.constant 0 : i32
    %c0_i32_0 = arith.constant 0 : i32
    %c0_i32_1 = arith.constant 0 : i32
    return %c0_i32, %c0_i32_0 : i32, i32
  }
  func.func @transform_6(%arg0: i32) -> (i32, i32) {
    %c0_i32 = arith.constant 0 : i32
    %c0_i32_0 = arith.constant 0 : i32
    %c0_i32_1 = arith.constant 0 : i32
    return %c0_i32, %c0_i32_0 : i32, i32
  }
  func.func @transform_7(%arg0: i32) -> (i32, i32) {
    %c0_i32 = arith.constant 0 : i32
    %c0_i32_0 = arith.constant 0 : i32
    %c0_i32_1 = arith.constant 0 : i32
    return %c0_i32, %c0_i32_0 : i32, i32
  }
  func.func @transform_8(%arg0: i32) -> (i32, i32, i32) {
    %c0_i32 = arith.constant 0 : i32
    %c0_i32_0 = arith.constant 0 : i32
    %c0_i32_1 = arith.constant 0 : i32
    return %arg0, %c0_i32, %c0_i32_0 : i32, i32, i32
  }
  func.func @transform_9(%arg0: i32) -> (i32, i32, i32) {
    %c0_i32 = arith.constant 0 : i32
    %c0_i32_0 = arith.constant 0 : i32
    %c0_i32_1 = arith.constant 0 : i32
    return %arg0, %c0_i32, %c0_i32_0 : i32, i32, i32
  }
}

</mosaic_0001>

<llo_original>
// kernel: multidcp_forward.2
$region0: #{multidcp_forward.2}
  #allocation0 [shape = 'u32[]', space=smem, size = 0x4, offset = 0x4, fixed_abs, tag = 'smem constant byte address 0x4 - core index']
  #allocation1 [shape = 'u32[144,128]{1,0:T(1,128)}', space=vmem, size = 0x12000, scoped, tag = 'internal scratch']
  %s0 = inlined_call_operand.vmem [shape: f32[16,32], index: 0, kind: input, shape index: {}]
  %s1 = inlined_call_operand.vmem [shape: f32[32,128], index: 1, kind: input, shape index: {}]
  %s2 = inlined_call_operand.hbm [shape: f32[1,128], index: 2, kind: input, shape index: {}]
  %s3 = inlined_call_operand.vmem [shape: f32[128,128], index: 3, kind: input, shape index: {}]
  %s4 = inlined_call_operand.vmem [shape: f32[2,64], index: 4, kind: input, shape index: {}]
  %s5 = inlined_call_operand.hbm [shape: f32[64,200], index: 5, kind: input, shape index: {}]
  %s6 = inlined_call_operand.hbm [shape: f32[1,200], index: 6, kind: input, shape index: {}]
  %s7 = inlined_call_operand.hbm [shape: f32[200,100], index: 7, kind: input, shape index: {}]
  %s8 = inlined_call_operand.hbm [shape: f32[1,100], index: 8, kind: input, shape index: {}]
  %s9 = inlined_call_operand.vmem [shape: f32[100,50], index: 9, kind: input, shape index: {}]
  %s10 = inlined_call_operand.hbm [shape: f32[1,50], index: 10, kind: input, shape index: {}]
  %s11 = inlined_call_operand.vmem [shape: f32[2,4], index: 11, kind: input, shape index: {}]
  %s12 = inlined_call_operand.vmem [shape: f32[4,4], index: 12, kind: input, shape index: {}]
  %s13 = inlined_call_operand.hbm [shape: f32[1,4], index: 13, kind: input, shape index: {}]
  %s14 = inlined_call_operand.vmem [shape: f32[2,8,128], index: 14, kind: input, shape index: {}]
  %s15 = inlined_call_operand.hbm [shape: f32[128,128], index: 15, kind: input, shape index: {}]
  %s16 = inlined_call_operand.hbm [shape: f32[50,128], index: 16, kind: input, shape index: {}]
  %s17 = inlined_call_operand.hbm [shape: f32[4,128], index: 17, kind: input, shape index: {}]
  %s18 = inlined_call_operand.hbm [shape: f32[1,128], index: 18, kind: input, shape index: {}]
  %s19 = inlined_call_operand.vmem [shape: f32[16,128], index: 19, kind: output, shape index: {0}]
  %s20 = inlined_call_operand.hbm [shape: f32[2,50], index: 20, kind: output, shape index: {1}]
  %s21 = inlined_call_operand.vmem [shape: f32[2,1,128], index: 21, kind: output, shape index: {2}]
  %22 = xla_tuple %s19, %s20, %s21
  %s23 = sld [smem:[#allocation0]]
  $region146: #{multidcp_forward.2} parent=0
    _
  %s25 = ssub.s32 1, %s23
  %s26 = scalar_select 0, %s25, %s23
  $region1: #{multidcp_forward.2} parent=0
    #allocation2 [shape = 'u8[512]{0}', space=vmem, size = 0x400, scoped, tag = 'input window, operand 2, single buffered']
    #allocation3 [shape = 's32[1]{0}', space=sflag, size = 0x4, scoped, tag = 'scoped memory for multidcp_forward.2']
    #allocation4 [shape = 's32[1]{0}', space=sflag, size = 0x4, scoped, tag = 'scoped memory for multidcp_forward.2']
    #allocation5 [shape = 'u8[65536]{0}', space=vmem, size = 0x10000, scoped, tag = 'input window, operand 5, single buffered']
    #allocation6 [shape = 's32[1]{0}', space=sflag, size = 0x4, scoped, tag = 'scoped memory for multidcp_forward.2']
    #allocation7 [shape = 'u8[1024]{0}', space=vmem, size = 0x400, scoped, tag = 'input window, operand 6, single buffered']
    #allocation8 [shape = 'u8[102400]{0}', space=vmem, size = 0x19000, scoped, tag = 'input window, operand 7, single buffered']
    #allocation9 [shape = 's32[1]{0}', space=sflag, size = 0x4, scoped, tag = 'scoped memory for multidcp_forward.2']
    #allocation10 [shape = 'u8[512]{0}', space=vmem, size = 0x400, scoped, tag = 'input window, operand 8, single buffered']
    #allocation11 [shape = 'u8[512]{0}', space=vmem, size = 0x400, scoped, tag = 'input window, operand 10, single buffered']
    #allocation12 [shape = 's32[1]{0}', space=sflag, size = 0x4, scoped, tag = 'scoped memory for multidcp_forward.2']
    #allocation13 [shape = 'u8[512]{0}', space=vmem, size = 0x400, scoped, tag = 'input window, operand 13, single buffered']
    #allocation14 [shape = 'u8[65536]{0}', space=vmem, size = 0x10000, scoped, tag = 'input window, operand 15, single buffered']
    #allocation15 [shape = 's32[1]{0}', space=sflag, size = 0x4, scoped, tag = 'scoped memory for multidcp_forward.2']
    #allocation16 [shape = 'u8[28672]{0}', space=vmem, size = 0x7000, scoped, tag = 'input window, operand 16, single buffered']
    #allocation17 [shape = 'u8[2048]{0}', space=vmem, size = 0x800, scoped, tag = 'input window, operand 17, single buffered']
    #allocation18 [shape = 's32[1]{0}', space=sflag, size = 0x4, scoped, tag = 'scoped memory for multidcp_forward.2']
    #allocation19 [shape = 'u8[512]{0}', space=vmem, size = 0x400, scoped, tag = 'input window, operand 18, single buffered']
    #allocation20 [shape = 'u8[1024]{0}', space=vmem, size = 0x400, scoped, tag = 'output window, operand 1, single buffered']
    %27 = vsyncpa [#allocation3], 0
    %28 = vsyncpa [#allocation6], 0
    %29 = vsyncpa [#allocation9], 0
    %30 = vsyncpa [#allocation12], 0
    %31 = vsyncpa [#allocation15], 0
    %32 = vsyncpa [#allocation18], 0
    %33 = vsyncpa [#allocation4], 0
    // Predicated region
    $region2: #{multidcp_forward.2} parent=1 // pred_check
      _
    $region3: #{multidcp_forward.2} parent=1 // pred_check_branch
      %35 = sbr.rel (0) target = $region5
    $region4: #{multidcp_forward.2} parent=1 // pred_region
      _
    $region5: #{multidcp_forward.2} parent=1 // pred_fallthru
      _
    // Predicated region
    $region6: #{multidcp_forward.2} parent=1 // pred_check
      _
    $region7: #{multidcp_forward.2} parent=1 // pred_check_branch
      %37 = sbr.rel (0) target = $region9
    $region8: #{multidcp_forward.2} parent=1 // pred_region
      _
    $region9: #{multidcp_forward.2} parent=1 // pred_fallthru
      _
    // Predicated region
    $region10: #{multidcp_forward.2} parent=1 // pred_check
      _
    $region11: #{multidcp_forward.2} parent=1 // pred_check_branch
      %39 = sbr.rel (0) target = $region13
    $region12: #{multidcp_forward.2} parent=1 // pred_region
      %s41 = ssub.s32 16, 16
      %42 = vsyncadd [#allocation3], %s41
      %s44 = sshll.u32 [#allocation2], 4
      %s45 = int_to_ptr.vmem [resolvable:$true] %s44
      %47 = dma.hbm_to_vmem [thread:$0]  %s2, 16, %s45, [#allocation3]
    $region13: #{multidcp_forward.2} parent=1 // pred_fallthru
      _
    // Predicated region
    $region14: #{multidcp_forward.2} parent=1 // pred_check
      _
    $region15: #{multidcp_forward.2} parent=1 // pred_check_branch
      %49 = sbr.rel (0) target = $region17
    $region16: #{multidcp_forward.2} parent=1 // pred_region
      _
    $region17: #{multidcp_forward.2} parent=1 // pred_fallthru
      _
    // Predicated region
    $region18: #{multidcp_forward.2} parent=1 // pred_check
      _
    $region19: #{multidcp_forward.2} parent=1 // pred_check_branch
      %51 = sbr.rel (0) target = $region21
    $region20: #{multidcp_forward.2} parent=1 // pred_region
      _
    $region21: #{multidcp_forward.2} parent=1 // pred_fallthru
      _
    // Predicated region
    $region22: #{multidcp_forward.2} parent=1 // pred_check
      _
    $region23: #{multidcp_forward.2} parent=1 // pred_check_branch
      %53 = sbr.rel (0) target = $region25
    $region24: #{multidcp_forward.2} parent=1 // pred_region
      %s55 = ssub.s32 2048, 2048
      %56 = vsyncadd [#allocation6], %s55
      %s57 = sshll.u32 [#allocation5], 4
      %s58 = int_to_ptr.vmem [resolvable:$true] %s57
      %63 = dma.hbm_to_vmem [thread:$0]  %s5, 2048, %s58, [#allocation6], 256, 256, 16
    $region25: #{multidcp_forward.2} parent=1 // pred_fallthru
      _
    // Predicated region
    $region26: #{multidcp_forward.2} parent=1 // pred_check
      _
    $region27: #{multidcp_forward.2} parent=1 // pred_check_branch
      %65 = sbr.rel (0) target = $region29
    $region28: #{multidcp_forward.2} parent=1 // pred_region
      %s67 = ssub.s32 32, 32
      %68 = vsyncadd [#allocation6], %s67
      %s70 = sshll.u32 [#allocation7], 4
      %s71 = int_to_ptr.vmem [resolvable:$true] %s70
      %73 = dma.hbm_to_vmem [thread:$0]  %s6, 32, %s71, [#allocation6]
    $region29: #{multidcp_forward.2} parent=1 // pred_fallthru
      _
    // Predicated region
    $region30: #{multidcp_forward.2} parent=1 // pred_check
      _
    $region31: #{multidcp_forward.2} parent=1 // pred_check_branch
      %75 = sbr.rel (0) target = $region33
    $region32: #{multidcp_forward.2} parent=1 // pred_region
      %s77 = ssub.s32 3200, 3200
      %78 = vsyncadd [#allocation9], %s77
      %s79 = sshll.u32 [#allocation8], 4
      %s80 = int_to_ptr.vmem [resolvable:$true] %s79
      %85 = dma.hbm_to_vmem [thread:$0]  %s7, 3200, %s80, [#allocation9], 128, 128, 8
    $region33: #{multidcp_forward.2} parent=1 // pred_fallthru
      _
    // Predicated region
    $region34: #{multidcp_forward.2} parent=1 // pred_check
      _
    $region35: #{multidcp_forward.2} parent=1 // pred_check_branch
      %87 = sbr.rel (0) target = $region37
    $region36: #{multidcp_forward.2} parent=1 // pred_region
      %s89 = ssub.s32 16, 16
      %90 = vsyncadd [#allocation9], %s89
      %s92 = sshll.u32 [#allocation10], 4
      %s93 = int_to_ptr.vmem [resolvable:$true] %s92
      %95 = dma.hbm_to_vmem [thread:$0]  %s8, 16, %s93, [#allocation9]
    $region37: #{multidcp_forward.2} parent=1 // pred_fallthru
      _
    // Predicated region
    $region38: #{multidcp_forward.2} parent=1 // pred_check
      _
    $region39: #{multidcp_forward.2} parent=1 // pred_check_branch
      %97 = sbr.rel (0) target = $region41
    $region40: #{multidcp_forward.2} parent=1 // pred_region
      _
    $region41: #{multidcp_forward.2} parent=1 // pred_fallthru
      _
    // Predicated region
    $region42: #{multidcp_forward.2} parent=1 // pred_check
      _
    $region43: #{multidcp_forward.2} parent=1 // pred_check_branch
      %99 = sbr.rel (0) target = $region45
    $region44: #{multidcp_forward.2} parent=1 // pred_region
      %s101 = ssub.s32 16, 16
      %102 = vsyncadd [#allocation12], %s101
      %s104 = sshll.u32 [#allocation11], 4
      %s105 = int_to_ptr.vmem [resolvable:$true] %s104
      %107 = dma.hbm_to_vmem [thread:$0]  %s10, 16, %s105, [#allocation12]
    $region45: #{multidcp_forward.2} parent=1 // pred_fallthru
      _
    // Predicated region
    $region46: #{multidcp_forward.2} parent=1 // pred_check
      _
    $region47: #{multidcp_forward.2} parent=1 // pred_check_branch
      %109 = sbr.rel (0) target = $region49
    $region48: #{multidcp_forward.2} parent=1 // pred_region
      _
    $region49: #{multidcp_forward.2} parent=1 // pred_fallthru
      _
    // Predicated region
    $region50: #{multidcp_forward.2} parent=1 // pred_check
      _
    $region51: #{multidcp_forward.2} parent=1 // pred_check_branch
      %111 = sbr.rel (0) target = $region53
    $region52: #{multidcp_forward.2} parent=1 // pred_region
      _
    $region53: #{multidcp_forward.2} parent=1 // pred_fallthru
      _
    // Predicated region
    $region54: #{multidcp_forward.2} parent=1 // pred_check
      _
    $region55: #{multidcp_forward.2} parent=1 // pred_check_branch
      %113 = sbr.rel (0) target = $region57
    $region56: #{multidcp_forward.2} parent=1 // pred_region
      %s115 = ssub.s32 16, 16
      %116 = vsyncadd [#allocation12], %s115
      %s118 = sshll.u32 [#allocation13], 4
      %s119 = int_to_ptr.vmem [resolvable:$true] %s118
      %121 = dma.hbm_to_vmem [thread:$0]  %s13, 16, %s119, [#allocation12]
    $region57: #{multidcp_forward.2} parent=1 // pred_fallthru
      _
    // Predicated region
    $region58: #{multidcp_forward.2} parent=1 // pred_check
      _
    $region59: #{multidcp_forward.2} parent=1 // pred_check_branch
      %123 = sbr.rel (0) target = $region61
    $region60: #{multidcp_forward.2} parent=1 // pred_region
      _
    $region61: #{multidcp_forward.2} parent=1 // pred_fallthru
      _
    // Predicated region
    $region62: #{multidcp_forward.2} parent=1 // pred_check
      _
    $region63: #{multidcp_forward.2} parent=1 // pred_check_branch
      %125 = sbr.rel (0) target = $region65
    $region64: #{multidcp_forward.2} parent=1 // pred_region
      %s127 = ssub.s32 2048, 2048
      %128 = vsyncadd [#allocation15], %s127
      %s129 = sshll.u32 [#allocation14], 4
      %s130 = int_to_ptr.vmem [resolvable:$true] %s129
      %135 = dma.hbm_to_vmem [thread:$0]  %s15, 2048, %s130, [#allocation15], 128, 128, 8
    $region65: #{multidcp_forward.2} parent=1 // pred_fallthru
      _
    // Predicated region
    $region66: #{multidcp_forward.2} parent=1 // pred_check
      _
    $region67: #{multidcp_forward.2} parent=1 // pred_check_branch
      %137 = sbr.rel (0) target = $region69
    $region68: #{multidcp_forward.2} parent=1 // pred_region
      %s139 = ssub.s32 896, 896
      %140 = vsyncadd [#allocation15], %s139
      %s141 = sshll.u32 [#allocation16], 4
      %s142 = int_to_ptr.vmem [resolvable:$true] %s141
      %147 = dma.hbm_to_vmem [thread:$0]  %s16, 896, %s142, [#allocation15], 128, 128, 8
    $region69: #{multidcp_forward.2} parent=1 // pred_fallthru
      _
    // Predicated region
    $region70: #{multidcp_forward.2} parent=1 // pred_check
      _
    $region71: #{multidcp_forward.2} parent=1 // pred_check_branch
      %149 = sbr.rel (0) target = $region73
    $region72: #{multidcp_forward.2} parent=1 // pred_region
      %s151 = ssub.s32 64, 64
      %152 = vsyncadd [#allocation18], %s151
      %s154 = sshll.u32 [#allocation17], 4
      %s155 = int_to_ptr.vmem [resolvable:$true] %s154
      %157 = dma.hbm_to_vmem [thread:$0]  %s17, 64, %s155, [#allocation18]
    $region73: #{multidcp_forward.2} parent=1 // pred_fallthru
      _
    // Predicated region
    $region74: #{multidcp_forward.2} parent=1 // pred_check
      _
    $region75: #{multidcp_forward.2} parent=1 // pred_check_branch
      %159 = sbr.rel (0) target = $region77
    $region76: #{multidcp_forward.2} parent=1 // pred_region
      %s161 = ssub.s32 16, 16
      %162 = vsyncadd [#allocation18], %s161
      %s164 = sshll.u32 [#allocation19], 4
      %s165 = int_to_ptr.vmem [resolvable:$true] %s164
      %167 = dma.hbm_to_vmem [thread:$0]  %s18, 16, %s165, [#allocation18]
    $region77: #{multidcp_forward.2} parent=1 // pred_fallthru
      _
    // Predicated region
    $region78: #{multidcp_forward.2} parent=1 // pred_check
      _
    $region79: #{multidcp_forward.2} parent=1 // pred_check_branch
      %169 = sbr.rel (0) target = $region81
    $region80: #{multidcp_forward.2} parent=1 // pred_region
      %170 = dma.done [#allocation3], 16
    $region81: #{multidcp_forward.2} parent=1 // pred_fallthru
      _
    // Predicated region
    $region82: #{multidcp_forward.2} parent=1 // pred_check
      _
    $region83: #{multidcp_forward.2} parent=1 // pred_check_branch
      %172 = sbr.rel (0) target = $region85
    $region84: #{multidcp_forward.2} parent=1 // pred_region
      %173 = dma.done [#allocation6], 2048
    $region85: #{multidcp_forward.2} parent=1 // pred_fallthru
      _
    // Predicated region
    $region86: #{multidcp_forward.2} parent=1 // pred_check
      _
    $region87: #{multidcp_forward.2} parent=1 // pred_check_branch
      %175 = sbr.rel (0) target = $region89
    $region88: #{multidcp_forward.2} parent=1 // pred_region
      %176 = dma.done [#allocation6], 32
    $region89: #{multidcp_forward.2} parent=1 // pred_fallthru
      _
    // Predicated region
    $region90: #{multidcp_forward.2} parent=1 // pred_check
      _
    $region91: #{multidcp_forward.2} parent=1 // pred_check_branch
      %178 = sbr.rel (0) target = $region93
    $region92: #{multidcp_forward.2} parent=1 // pred_region
      %179 = dma.done [#allocation9], 3200
    $region93: #{multidcp_forward.2} parent=1 // pred_fallthru
      _
    // Predicated region
    $region94: #{multidcp_forward.2} parent=1 // pred_check
      _
    $region95: #{multidcp_forward.2} parent=1 // pred_check_branch
      %181 = sbr.rel (0) target = $region97
    $region96: #{multidcp_forward.2} parent=1 // pred_region
      %182 = dma.done [#allocation9], 16
    $region97: #{multidcp_forward.2} parent=1 // pred_fallthru
      _
    // Predicated region
    $region98: #{multidcp_forward.2} parent=1 // pred_check
      _
    $region99: #{multidcp_forward.2} parent=1 // pred_check_branch
      %184 = sbr.rel (0) target = $region101
    $region100: #{multidcp_forward.2} parent=1 // pred_region
      %185 = dma.done [#allocation12], 16
    $region101: #{multidcp_forward.2} parent=1 // pred_fallthru
      _
    // Predicated region
    $region102: #{multidcp_forward.2} parent=1 // pred_check
      _
    $region103: #{multidcp_forward.2} parent=1 // pred_check_branch
      %187 = sbr.rel (0) target = $region105
    $region104: #{multidcp_forward.2} parent=1 // pred_region
      %188 = dma.done [#allocation12], 16
    $region105: #{multidcp_forward.2} parent=1 // pred_fallthru
      _
    // Predicated region
    $region106: #{multidcp_forward.2} parent=1 // pred_check
      _
    $region107: #{multidcp_forward.2} parent=1 // pred_check_branch
      %190 = sbr.rel (0) target = $region109
    $region108: #{multidcp_forward.2} parent=1 // pred_region
      %191 = dma.done [#allocation15], 2048
    $region109: #{multidcp_forward.2} parent=1 // pred_fallthru
      _
    // Predicated region
    $region110: #{multidcp_forward.2} parent=1 // pred_check
      _
    $region111: #{multidcp_forward.2} parent=1 // pred_check_branch
      %193 = sbr.rel (0) target = $region113
    $region112: #{multidcp_forward.2} parent=1 // pred_region
      %194 = dma.done [#allocation15], 896
    $region113: #{multidcp_forward.2} parent=1 // pred_fallthru
      _
    // Predicated region
    $region114: #{multidcp_forward.2} parent=1 // pred_check
      _
    $region115: #{multidcp_forward.2} parent=1 // pred_check_branch
      %196 = sbr.rel (0) target = $region117
    $region116: #{multidcp_forward.2} parent=1 // pred_region
      %197 = dma.done [#allocation18], 64
    $region117: #{multidcp_forward.2} parent=1 // pred_fallthru
      _
    // Predicated region
    $region118: #{multidcp_forward.2} parent=1 // pred_check
      _
    $region119: #{multidcp_forward.2} parent=1 // pred_check_branch
      %199 = sbr.rel (0) target = $region121
    $region120: #{multidcp_forward.2} parent=1 // pred_region
      %200 = dma.done [#allocation18], 16
    $region121: #{multidcp_forward.2} parent=1 // pred_fallthru
      _
    %v201 = vld [vmem:[%s0] sm:$0xff]
    %v202 = vld [vmem:[%s0 + $0x8] sm:$0xff]
    %v203 = vld [vmem:[%s1] sm:$0xff]
    %v204 = vld [vmem:[%s1 + $0x8] sm:$0xff]
    %v205 = vld [vmem:[%s1 + $0x10] sm:$0xff]
    %v206 = vld [vmem:[%s1 + $0x18] sm:$0xff]
    %v207 = vld [vmem:[#allocation2] sm:$0x1]
    %v209 = vlaneseq
    %v210 = vshrl.u32 %v209, 7
    %v211 = vsub.s32 0, %v210
    %v212 = vrot.slane %v207, %v211
    %vm214 = vcmask 261120
    %v216 = vsel %vm214, %v201, 0
    %v219 = vsel %vm214, %v202, 0
    %221 = vmatprep.subr.mxu0 0.0
    %222 = vmatpush1.msra.mxu0 0.0
    %223 = vmatprep.subr.mxu0 0.0
    %224 = vmatpush1.msra.mxu0 0.0
    %225 = vmatprep.subr.mxu0 0.0
    %226 = vmatpush1.msra.mxu0 0.0
    %227 = vmatprep.subr.mxu0 0.0
    %228 = vmatpush1.msra.mxu0 0.0
    %229 = vmatprep.subr.mxu0 0.0
    %230 = vmatpush1.msra.mxu0 0.0
    %231 = vmatprep.subr.mxu0 0.0
    %232 = vmatpush1.msra.mxu0 0.0
    %233 = vmatprep.subr.mxu0 0.0
    %234 = vmatpush1.msra.mxu0 0.0
    %235 = vmatprep.subr.mxu0 0.0
    %236 = vmatpush1.msra.mxu0 0.0
    %237 = vmatprep.subr.mxu0 0.0
    %238 = vmatpush1.msra.mxu0 0.0
    %239 = vmatprep.subr.mxu0 0.0
    %240 = vmatpush1.msra.mxu0 0.0
    %241 = vmatprep.subr.mxu0 0.0
    %242 = vmatpush1.msra.mxu0 0.0
    %243 = vmatprep.subr.mxu0 0.0
    %244 = vmatpush1.msra.mxu0 0.0
    %245 = vmatprep.subr.mxu0 0.0
    %246 = vmatpush1.msra.mxu0 %v206
    %247 = vmatprep.subr.mxu0 0.0
    %248 = vmatpush1.msra.mxu0 %v205
    %249 = vmatprep.subr.mxu0 0.0
    %250 = vmatpush1.msra.mxu0 %v204
    %251 = vmatprep.subr.mxu0 0.0
    %252 = vmatpush1.msra.mxu0 %v203
    %253 = vmatprep.subr.mxu0 0.0
    %254 = vmatpush2.msra.mxu0 0.0
    %255 = vmatprep.subr.mxu0 0.0
    %256 = vmatpush2.msra.mxu0 0.0
    %257 = vmatprep.subr.mxu0 0.0
    %258 = vmatpush2.msra.mxu0 0.0
    %259 = vmatprep.subr.mxu0 0.0
    %260 = vmatpush2.msra.mxu0 0.0
    %261 = vmatprep.subr.mxu0 0.0
    %262 = vmatpush2.msra.mxu0 0.0
    %263 = vmatprep.subr.mxu0 0.0
    %264 = vmatpush2.msra.mxu0 0.0
    %265 = vmatprep.subr.mxu0 0.0
    %266 = vmatpush2.msra.mxu0 0.0
    %267 = vmatprep.subr.mxu0 0.0
    %268 = vmatpush2.msra.mxu0 0.0
    %269 = vmatprep.subr.mxu0 0.0
    %270 = vmatpush2.msra.mxu0 0.0
    %271 = vmatprep.subr.mxu0 0.0
    %272 = vmatpush2.msra.mxu0 0.0
    %273 = vmatprep.subr.mxu0 0.0
    %274 = vmatpush2.msra.mxu0 0.0
    %275 = vmatprep.subr.mxu0 0.0
    %276 = vmatpush2.msra.mxu0 0.0
    %277 = vmatprep.subr.mxu0 0.0
    %278 = vmatpush2.msra.mxu0 0.0
    %279 = vmatprep.subr.mxu0 0.0
    %280 = vmatpush2.msra.mxu0 0.0
    %281 = vmatprep.subr.mxu0 0.0
    %282 = vmatpush2.msra.mxu0 0.0
    %283 = vmatprep.subr.mxu0 0.0
    %284 = vmatpush2.msra.mxu0 0.0
    %285 = vmatprep.mubr.f32.mxu0 0.0
    %286 = vmatmul.mubr.f32.gmra.mxu0 %v216
    %v287 = vpop.f32.mrf.mxu0
    %v288 = vadd.f32 %v212, %v287
    %v289 = vpop.f32.mrf.mxu0
    %290 = vmatprep.mubr.f32.mxu0 0.0
    %291 = vmatmul.mubr.f32.gmra.mxu0 %v219
    %v292 = vpop.f32.mrf.mxu0
    %v293 = vadd.f32 %v212, %v292
    %v294 = vpop.f32.mrf.mxu0
    %295 = vdwg.mxu0
    %v296 = vld [vmem:[%s3] sm:$0xff]
    %v297 = vld [vmem:[%s3 + $0x8] sm:$0xff]
    %v298 = vld [vmem:[%s3 + $0x10] sm:$0xff]
    %v299 = vld [vmem:[%s3 + $0x18] sm:$0xff]
    %v300 = vld [vmem:[%s3 + $0x20] sm:$0xff]
    %v301 = vld [vmem:[%s3 + $0x28] sm:$0xff]
    %v302 = vld [vmem:[%s3 + $0x30] sm:$0xff]
    %v303 = vld [vmem:[%s3 + $0x38] sm:$0xff]
    %v304 = vld [vmem:[%s3 + $0x40] sm:$0xff]
    %v305 = vld [vmem:[%s3 + $0x48] sm:$0xff]
    %v306 = vld [vmem:[%s3 + $0x50] sm:$0xff]
    %v307 = vld [vmem:[%s3 + $0x58] sm:$0xff]
    %v308 = vld [vmem:[%s3 + $0x60] sm:$0xff]
    %v309 = vld [vmem:[%s3 + $0x68] sm:$0xff]
    %v310 = vld [vmem:[%s3 + $0x70] sm:$0xff]
    %v311 = vld [vmem:[%s3 + $0x78] sm:$0xff]
    %312 = vmatprep.subr.mxu0 0.0
    %313 = vmatpush1.msra.mxu0 %v311
    %314 = vmatprep.subr.mxu0 0.0
    %315 = vmatpush1.msra.mxu0 %v310
    %316 = vmatprep.subr.mxu0 0.0
    %317 = vmatpush1.msra.mxu0 %v309
    %318 = vmatprep.subr.mxu0 0.0
    %319 = vmatpush1.msra.mxu0 %v308
    %320 = vmatprep.subr.mxu0 0.0
    %321 = vmatpush1.msra.mxu0 %v307
    %322 = vmatprep.subr.mxu0 0.0
    %323 = vmatpush1.msra.mxu0 %v306
    %324 = vmatprep.subr.mxu0 0.0
    %325 = vmatpush1.msra.mxu0 %v305
    %326 = vmatprep.subr.mxu0 0.0
    %327 = vmatpush1.msra.mxu0 %v304
    %328 = vmatprep.subr.mxu0 0.0
    %329 = vmatpush1.msra.mxu0 %v303
    %330 = vmatprep.subr.mxu0 0.0
    %331 = vmatpush1.msra.mxu0 %v302
    %332 = vmatprep.subr.mxu0 0.0
    %333 = vmatpush1.msra.mxu0 %v301
    %334 = vmatprep.subr.mxu0 0.0
    %335 = vmatpush1.msra.mxu0 %v300
    %336 = vmatprep.subr.mxu0 0.0
    %337 = vmatpush1.msra.mxu0 %v299
    %338 = vmatprep.subr.mxu0 0.0
    %339 = vmatpush1.msra.mxu0 %v298
    %340 = vmatprep.subr.mxu0 0.0
    %341 = vmatpush1.msra.mxu0 %v297
    %342 = vmatprep.subr.mxu0 0.0
    %343 = vmatpush1.msra.mxu0 %v296
    %344 = vmatprep.subr.mxu0 0.0
    %345 = vmatpush2.msra.mxu0 0.0
    %346 = vmatprep.subr.mxu0 0.0
    %347 = vmatpush2.msra.mxu0 0.0
    %348 = vmatprep.subr.mxu0 0.0
    %349 = vmatpush2.msra.mxu0 0.0
    %350 = vmatprep.subr.mxu0 0.0
    %351 = vmatpush2.msra.mxu0 0.0
    %352 = vmatprep.subr.mxu0 0.0
    %353 = vmatpush2.msra.mxu0 0.0
    %354 = vmatprep.subr.mxu0 0.0
    %355 = vmatpush2.msra.mxu0 0.0
    %356 = vmatprep.subr.mxu0 0.0
    %357 = vmatpush2.msra.mxu0 0.0
    %358 = vmatprep.subr.mxu0 0.0
    %359 = vmatpush2.msra.mxu0 0.0
    %360 = vmatprep.subr.mxu0 0.0
    %361 = vmatpush2.msra.mxu0 0.0
    %362 = vmatprep.subr.mxu0 0.0
    %363 = vmatpush2.msra.mxu0 0.0
    %364 = vmatprep.subr.mxu0 0.0
    %365 = vmatpush2.msra.mxu0 0.0
    %366 = vmatprep.subr.mxu0 0.0
    %367 = vmatpush2.msra.mxu0 0.0
    %368 = vmatprep.subr.mxu0 0.0
    %369 = vmatpush2.msra.mxu0 0.0
    %370 = vmatprep.subr.mxu0 0.0
    %371 = vmatpush2.msra.mxu0 0.0
    %372 = vmatprep.subr.mxu0 0.0
    %373 = vmatpush2.msra.mxu0 0.0
    %374 = vmatprep.subr.mxu0 0.0
    %375 = vmatpush2.msra.mxu0 0.0
    %376 = vmatprep.mubr.f32.mxu0 0.0
    %377 = vmatmul.mubr.f32.gmra.mxu0 %v288
    %v378 = vpop.f32.mrf.mxu0
    %v379 = vadd.f32 0.0, %v378
    %v380 = vpop.f32.mrf.mxu0
    %381 = vmatprep.mubr.f32.mxu0 0.0
    %382 = vmatmul.mubr.f32.gmra.mxu0 %v293
    %v383 = vpop.f32.mrf.mxu0
    %v384 = vadd.f32 0.0, %v383
    %v385 = vpop.f32.mrf.mxu0
    %386 = vdwg.mxu0
    %387 = vst [vmem:[%s19] sm:$0xff] %v379
    %388 = vst [vmem:[%s19 + $0x8] sm:$0xff] %v384
    %v389 = vld [vmem:[%s4] sm:$0x3]
    %v390 = vld [vmem:[#allocation5] sm:$0xff]
    %v391 = vld [vmem:[#allocation5 + $0x8] sm:$0xff]
    %v392 = vld [vmem:[#allocation5 + $0x10] sm:$0xff]
    %v393 = vld [vmem:[#allocation5 + $0x18] sm:$0xff]
    %v394 = vld [vmem:[#allocation5 + $0x20] sm:$0xff]
    %v395 = vld [vmem:[#allocation5 + $0x28] sm:$0xff]
    %v396 = vld [vmem:[#allocation5 + $0x30] sm:$0xff]
    %v397 = vld [vmem:[#allocation5 + $0x38] sm:$0xff]
    %v398 = vld [vmem:[#allocation5 + $0x40] sm:$0xff]
    %v399 = vld [vmem:[#allocation5 + $0x48] sm:$0xff]
    %v400 = vld [vmem:[#allocation5 + $0x50] sm:$0xff]
    %v401 = vld [vmem:[#allocation5 + $0x58] sm:$0xff]
    %v402 = vld [vmem:[#allocation5 + $0x60] sm:$0xff]
    %v403 = vld [vmem:[#allocation5 + $0x68] sm:$0xff]
    %v404 = vld [vmem:[#allocation5 + $0x70] sm:$0xff]
    %v405 = vld [vmem:[#allocation5 + $0x78] sm:$0xff]
    %v406 = vld [vmem:[#allocation7] sm:$0x3]
    %v408 = vlaneseq
    %v409 = vshrl.u32 %v408, 7
    %v410 = vsub.s32 0, %v409
    %v411 = vrot.slane %v406, %v410
    %v412 = vlaneseq
    %v413 = vshrl.u32 %v412, 7
    %v414 = vsub.s32 1, %v413
    %v415 = vrot.slane %v406, %v414
    %vm418 = vcmask 523264
    %v420 = vsel %vm418, %v389, 0
    %422 = vmatprep.subr.mxu0 0.0
    %423 = vmatpush1.msra.mxu0 0.0
    %424 = vmatprep.subr.mxu0 0.0
    %425 = vmatpush1.msra.mxu0 0.0
    %426 = vmatprep.subr.mxu0 0.0
    %427 = vmatpush1.msra.mxu0 0.0
    %428 = vmatprep.subr.mxu0 0.0
    %429 = vmatpush1.msra.mxu0 0.0
    %430 = vmatprep.subr.mxu0 0.0
    %431 = vmatpush1.msra.mxu0 0.0
    %432 = vmatprep.subr.mxu0 0.0
    %433 = vmatpush1.msra.mxu0 0.0
    %434 = vmatprep.subr.mxu0 0.0
    %435 = vmatpush1.msra.mxu0 0.0
    %436 = vmatprep.subr.mxu0 0.0
    %437 = vmatpush1.msra.mxu0 0.0
    %438 = vmatprep.subr.mxu0 %v405
    %439 = vmatpush1.msra.mxu0 %v404
    %440 = vmatprep.subr.mxu0 %v403
    %441 = vmatpush1.msra.mxu0 %v402
    %442 = vmatprep.subr.mxu0 %v401
    %443 = vmatpush1.msra.mxu0 %v400
    %444 = vmatprep.subr.mxu0 %v399
    %445 = vmatpush1.msra.mxu0 %v398
    %446 = vmatprep.subr.mxu0 %v397
    %447 = vmatpush1.msra.mxu0 %v396
    %448 = vmatprep.subr.mxu0 %v395
    %449 = vmatpush1.msra.mxu0 %v394
    %450 = vmatprep.subr.mxu0 %v393
    %451 = vmatpush1.msra.mxu0 %v392
    %452 = vmatprep.subr.mxu0 %v391
    %453 = vmatpush1.msra.mxu0 %v390
    %454 = vmatprep.subr.mxu0 0.0
    %455 = vmatpush2.msra.mxu0 0.0
    %456 = vmatprep.subr.mxu0 0.0
    %457 = vmatpush2.msra.mxu0 0.0
    %458 = vmatprep.subr.mxu0 0.0
    %459 = vmatpush2.msra.mxu0 0.0
    %460 = vmatprep.subr.mxu0 0.0
    %461 = vmatpush2.msra.mxu0 0.0
    %462 = vmatprep.subr.mxu0 0.0
    %463 = vmatpush2.msra.mxu0 0.0
    %464 = vmatprep.subr.mxu0 0.0
    %465 = vmatpush2.msra.mxu0 0.0
    %466 = vmatprep.subr.mxu0 0.0
    %467 = vmatpush2.msra.mxu0 0.0
    %468 = vmatprep.subr.mxu0 0.0
    %469 = vmatpush2.msra.mxu0 0.0
    %470 = vmatprep.subr.mxu0 0.0
    %471 = vmatpush2.msra.mxu0 0.0
    %472 = vmatprep.subr.mxu0 0.0
    %473 = vmatpush2.msra.mxu0 0.0
    %474 = vmatprep.subr.mxu0 0.0
    %475 = vmatpush2.msra.mxu0 0.0
    %476 = vmatprep.subr.mxu0 0.0
    %477 = vmatpush2.msra.mxu0 0.0
    %478 = vmatprep.subr.mxu0 0.0
    %479 = vmatpush2.msra.mxu0 0.0
    %480 = vmatprep.subr.mxu0 0.0
    %481 = vmatpush2.msra.mxu0 0.0
    %482 = vmatprep.subr.mxu0 0.0
    %483 = vmatpush2.msra.mxu0 0.0
    %484 = vmatprep.subr.mxu0 0.0
    %485 = vmatpush2.msra.mxu0 0.0
    %486 = vmatprep.mubr.f32.mxu0 0.0
    %487 = vmatmul.mubr.f32.gmra.mxu0 %v420
    %v488 = vpop.f32.mrf.mxu0
    %v489 = vadd.f32 %v411, %v488
    %v490 = vpop.f32.mrf.mxu0
    %v491 = vadd.f32 %v415, %v490
    %492 = vdwg.mxu0
    %v493 = vmax.f32 %v489, 0.0
    %v494 = vmax.f32 %v491, 0.0
    %v495 = vld [vmem:[#allocation8] sm:$0xff]
    %v496 = vld [vmem:[#allocation8 + $0x8] sm:$0xff]
    %v497 = vld [vmem:[#allocation8 + $0x10] sm:$0xff]
    %v498 = vld [vmem:[#allocation8 + $0x18] sm:$0xff]
    %v499 = vld [vmem:[#allocation8 + $0x20] sm:$0xff]
    %v500 = vld [vmem:[#allocation8 + $0x28] sm:$0xff]
    %v501 = vld [vmem:[#allocation8 + $0x30] sm:$0xff]
    %v502 = vld [vmem:[#allocation8 + $0x38] sm:$0xff]
    %v503 = vld [vmem:[#allocation8 + $0x40] sm:$0xff]
    %v504 = vld [vmem:[#allocation8 + $0x48] sm:$0xff]
    %v505 = vld [vmem:[#allocation8 + $0x50] sm:$0xff]
    %v506 = vld [vmem:[#allocation8 + $0x58] sm:$0xff]
    %v507 = vld [vmem:[#allocation8 + $0x60] sm:$0xff]
    %v508 = vld [vmem:[#allocation8 + $0x68] sm:$0xff]
    %v509 = vld [vmem:[#allocation8 + $0x70] sm:$0xff]
    %v510 = vld [vmem:[#allocation8 + $0x78] sm:$0xff]
    %v511 = vld [vmem:[#allocation8 + $0x80] sm:$0xff]
    %v512 = vld [vmem:[#allocation8 + $0x88] sm:$0xff]
    %v513 = vld [vmem:[#allocation8 + $0x90] sm:$0xff]
    %v514 = vld [vmem:[#allocation8 + $0x98] sm:$0xff]
    %v515 = vld [vmem:[#allocation8 + $0xa0] sm:$0xff]
    %v516 = vld [vmem:[#allocation8 + $0xa8] sm:$0xff]
    %v517 = vld [vmem:[#allocation8 + $0xb0] sm:$0xff]
    %v518 = vld [vmem:[#allocation8 + $0xb8] sm:$0xff]
    %v519 = vld [vmem:[#allocation8 + $0xc0] sm:$0xff]
    %v520 = vld [vmem:[#allocation10] sm:$0x1]
    %v522 = vlaneseq
    %v523 = vshrl.u32 %v522, 7
    %v524 = vsub.s32 0, %v523
    %v525 = vrot.slane %v520, %v524
    %vm527 = vcmask 588800
    %v529 = vsel %vm527, %v494, 0
    %531 = vmatprep.subr.mxu0 0.0
    %532 = vmatpush1.msra.mxu0 %v510
    %533 = vmatprep.subr.mxu0 0.0
    %534 = vmatpush1.msra.mxu0 %v509
    %535 = vmatprep.subr.mxu0 0.0
    %536 = vmatpush1.msra.mxu0 %v508
    %537 = vmatprep.subr.mxu0 0.0
    %538 = vmatpush1.msra.mxu0 %v507
    %539 = vmatprep.subr.mxu0 0.0
    %540 = vmatpush1.msra.mxu0 %v506
    %541 = vmatprep.subr.mxu0 0.0
    %542 = vmatpush1.msra.mxu0 %v505
    %543 = vmatprep.subr.mxu0 0.0
    %544 = vmatpush1.msra.mxu0 %v504
    %545 = vmatprep.subr.mxu0 0.0
    %546 = vmatpush1.msra.mxu0 %v503
    %547 = vmatprep.subr.mxu0 0.0
    %548 = vmatpush1.msra.mxu0 %v502
    %549 = vmatprep.subr.mxu0 0.0
    %550 = vmatpush1.msra.mxu0 %v501
    %551 = vmatprep.subr.mxu0 0.0
    %552 = vmatpush1.msra.mxu0 %v500
    %553 = vmatprep.subr.mxu0 0.0
    %554 = vmatpush1.msra.mxu0 %v499
    %555 = vmatprep.subr.mxu0 0.0
    %556 = vmatpush1.msra.mxu0 %v498
    %557 = vmatprep.subr.mxu0 0.0
    %558 = vmatpush1.msra.mxu0 %v497
    %559 = vmatprep.subr.mxu0 0.0
    %560 = vmatpush1.msra.mxu0 %v496
    %561 = vmatprep.subr.mxu0 0.0
    %562 = vmatpush1.msra.mxu0 %v495
    %563 = vmatprep.subr.mxu0 0.0
    %564 = vmatpush2.msra.mxu0 0.0
    %565 = vmatprep.subr.mxu0 0.0
    %566 = vmatpush2.msra.mxu0 0.0
    %567 = vmatprep.subr.mxu0 0.0
    %568 = vmatpush2.msra.mxu0 0.0
    %569 = vmatprep.subr.mxu0 0.0
    %570 = vmatpush2.msra.mxu0 0.0
    %571 = vmatprep.subr.mxu0 0.0
    %572 = vmatpush2.msra.mxu0 0.0
    %573 = vmatprep.subr.mxu0 0.0
    %574 = vmatpush2.msra.mxu0 0.0
    %575 = vmatprep.subr.mxu0 0.0
    %576 = vmatpush2.msra.mxu0 0.0
    %577 = vmatprep.subr.mxu0 0.0
    %578 = vmatpush2.msra.mxu0 %v519
    %579 = vmatprep.subr.mxu0 0.0
    %580 = vmatpush2.msra.mxu0 %v518
    %581 = vmatprep.subr.mxu0 0.0
    %582 = vmatpush2.msra.mxu0 %v517
    %583 = vmatprep.subr.mxu0 0.0
    %584 = vmatpush2.msra.mxu0 %v516
    %585 = vmatprep.subr.mxu0 0.0
    %586 = vmatpush2.msra.mxu0 %v515
    %587 = vmatprep.subr.mxu0 0.0
    %588 = vmatpush2.msra.mxu0 %v514
    %589 = vmatprep.subr.mxu0 0.0
    %590 = vmatpush2.msra.mxu0 %v513
    %591 = vmatprep.subr.mxu0 0.0
    %592 = vmatpush2.msra.mxu0 %v512
    %593 = vmatprep.subr.mxu0 0.0
    %594 = vmatpush2.msra.mxu0 %v511
    %595 = vmatprep.mubr.f32.mxu0 %v529
    %596 = vmatmul.mubr.f32.gmra.mxu0 %v493
    %v597 = vpop.f32.mrf.mxu0
    %v598 = vadd.f32 %v525, %v597
    %v599 = vpop.f32.mrf.mxu0
    %600 = vdwg.mxu0
    %v601 = vmax.f32 %v598, 0.0
    %v602 = vld [vmem:[%s9] sm:$0xff]
    %v603 = vld [vmem:[%s9 + $0x8] sm:$0xff]
    %v604 = vld [vmem:[%s9 + $0x10] sm:$0xff]
    %v605 = vld [vmem:[%s9 + $0x18] sm:$0xff]
    %v606 = vld [vmem:[%s9 + $0x20] sm:$0xff]
    %v607 = vld [vmem:[%s9 + $0x28] sm:$0xff]
    %v608 = vld [vmem:[%s9 + $0x30] sm:$0xff]
    %v609 = vld [vmem:[%s9 + $0x38] sm:$0xff]
    %v610 = vld [vmem:[%s9 + $0x40] sm:$0xff]
    %v611 = vld [vmem:[%s9 + $0x48] sm:$0xff]
    %v612 = vld [vmem:[%s9 + $0x50] sm:$0xff]
    %v613 = vld [vmem:[%s9 + $0x58] sm:$0xff]
    %v614 = vld [vmem:[%s9 + $0x60] sm:$0xf]
    %v615 = vld [vmem:[#allocation11] sm:$0x1]
    %v617 = vlaneseq
    %v618 = vshrl.u32 %v617, 7
    %v619 = vsub.s32 0, %v618
    %v620 = vrot.slane %v615, %v619
    %vm622 = vcmask 818176
    %v624 = vsel %vm622, %v601, 0
    %vm626 = vcmask 1043456
    %v628 = vsel %vm626, %v614, 0
    %630 = vmatprep.subr.mxu0 0.0
    %631 = vmatpush1.msra.mxu0 0.0
    %632 = vmatprep.subr.mxu0 0.0
    %633 = vmatpush1.msra.mxu0 0.0
    %634 = vmatprep.subr.mxu0 0.0
    %635 = vmatpush1.msra.mxu0 0.0
    %636 = vmatprep.subr.mxu0 0.0
    %637 = vmatpush1.msra.mxu0 %v628
    %638 = vmatprep.subr.mxu0 0.0
    %639 = vmatpush1.msra.mxu0 %v613
    %640 = vmatprep.subr.mxu0 0.0
    %641 = vmatpush1.msra.mxu0 %v612
    %642 = vmatprep.subr.mxu0 0.0
    %643 = vmatpush1.msra.mxu0 %v611
    %644 = vmatprep.subr.mxu0 0.0
    %645 = vmatpush1.msra.mxu0 %v610
    %646 = vmatprep.subr.mxu0 0.0
    %647 = vmatpush1.msra.mxu0 %v609
    %648 = vmatprep.subr.mxu0 0.0
    %649 = vmatpush1.msra.mxu0 %v608
    %650 = vmatprep.subr.mxu0 0.0
    %651 = vmatpush1.msra.mxu0 %v607
    %652 = vmatprep.subr.mxu0 0.0
    %653 = vmatpush1.msra.mxu0 %v606
    %654 = vmatprep.subr.mxu0 0.0
    %655 = vmatpush1.msra.mxu0 %v605
    %656 = vmatprep.subr.mxu0 0.0
    %657 = vmatpush1.msra.mxu0 %v604
    %658 = vmatprep.subr.mxu0 0.0
    %659 = vmatpush1.msra.mxu0 %v603
    %660 = vmatprep.subr.mxu0 0.0
    %661 = vmatpush1.msra.mxu0 %v602
    %662 = vmatprep.subr.mxu0 0.0
    %663 = vmatpush2.msra.mxu0 0.0
    %664 = vmatprep.subr.mxu0 0.0
    %665 = vmatpush2.msra.mxu0 0.0
    %666 = vmatprep.subr.mxu0 0.0
    %667 = vmatpush2.msra.mxu0 0.0
    %668 = vmatprep.subr.mxu0 0.0
    %669 = vmatpush2.msra.mxu0 0.0
    %670 = vmatprep.subr.mxu0 0.0
    %671 = vmatpush2.msra.mxu0 0.0
    %672 = vmatprep.subr.mxu0 0.0
    %673 = vmatpush2.msra.mxu0 0.0
    %674 = vmatprep.subr.mxu0 0.0
    %675 = vmatpush2.msra.mxu0 0.0
    %676 = vmatprep.subr.mxu0 0.0
    %677 = vmatpush2.msra.mxu0 0.0
    %678 = vmatprep.subr.mxu0 0.0
    %679 = vmatpush2.msra.mxu0 0.0
    %680 = vmatprep.subr.mxu0 0.0
    %681 = vmatpush2.msra.mxu0 0.0
    %682 = vmatprep.subr.mxu0 0.0
    %683 = vmatpush2.msra.mxu0 0.0
    %684 = vmatprep.subr.mxu0 0.0
    %685 = vmatpush2.msra.mxu0 0.0
    %686 = vmatprep.subr.mxu0 0.0
    %687 = vmatpush2.msra.mxu0 0.0
    %688 = vmatprep.subr.mxu0 0.0
    %689 = vmatpush2.msra.mxu0 0.0
    %690 = vmatprep.subr.mxu0 0.0
    %691 = vmatpush2.msra.mxu0 0.0
    %692 = vmatprep.subr.mxu0 0.0
    %693 = vmatpush2.msra.mxu0 0.0
    %694 = vmatprep.mubr.f32.mxu0 0.0
    %695 = vmatmul.mubr.f32.gmra.mxu0 %v624
    %v696 = vpop.f32.mrf.mxu0
    %v697 = vadd.f32 %v620, %v696
    %v698 = vpop.f32.mrf.mxu0
    %699 = vdwg.mxu0
    %v700 = vmax.f32 %v697, 0.0
    %vm701 = vcmask 402432
    %702 = vst.msk [vmem:[#allocation20] sm:$0x3] %vm701, %v700
    %v703 = vld [vmem:[%s11] sm:$0x3]
    %v704 = vld [vmem:[%s12] sm:$0xf]
    %v705 = vld [vmem:[#allocation13] sm:$0x1]
    %v707 = vlaneseq
    %v708 = vshrl.u32 %v707, 7
    %v709 = vsub.s32 0, %v708
    %v710 = vrot.slane %v705, %v709
    %vm712 = vcmask 31744
    %v714 = vsel %vm712, %v703, 0
    %v717 = vsel %vm626, %v704, 0
    %719 = vmatprep.subr.mxu0 0.0
    %720 = vmatpush1.msra.mxu0 0.0
    %721 = vmatprep.subr.mxu0 0.0
    %722 = vmatpush1.msra.mxu0 0.0
    %723 = vmatprep.subr.mxu0 0.0
    %724 = vmatpush1.msra.mxu0 0.0
    %725 = vmatprep.subr.mxu0 0.0
    %726 = vmatpush1.msra.mxu0 0.0
    %727 = vmatprep.subr.mxu0 0.0
    %728 = vmatpush1.msra.mxu0 0.0
    %729 = vmatprep.subr.mxu0 0.0
    %730 = vmatpush1.msra.mxu0 0.0
    %731 = vmatprep.subr.mxu0 0.0
    %732 = vmatpush1.msra.mxu0 0.0
    %733 = vmatprep.subr.mxu0 0.0
    %734 = vmatpush1.msra.mxu0 0.0
    %735 = vmatprep.subr.mxu0 0.0
    %736 = vmatpush1.msra.mxu0 0.0
    %737 = vmatprep.subr.mxu0 0.0
    %738 = vmatpush1.msra.mxu0 0.0
    %739 = vmatprep.subr.mxu0 0.0
    %740 = vmatpush1.msra.mxu0 0.0
    %741 = vmatprep.subr.mxu0 0.0
    %742 = vmatpush1.msra.mxu0 0.0
    %743 = vmatprep.subr.mxu0 0.0
    %744 = vmatpush1.msra.mxu0 0.0
    %745 = vmatprep.subr.mxu0 0.0
    %746 = vmatpush1.msra.mxu0 0.0
    %747 = vmatprep.subr.mxu0 0.0
    %748 = vmatpush1.msra.mxu0 0.0
    %749 = vmatprep.subr.mxu0 0.0
    %750 = vmatpush1.msra.mxu0 %v717
    %751 = vmatprep.subr.mxu0 0.0
    %752 = vmatpush2.msra.mxu0 0.0
    %753 = vmatprep.subr.mxu0 0.0
    %754 = vmatpush2.msra.mxu0 0.0
    %755 = vmatprep.subr.mxu0 0.0
    %756 = vmatpush2.msra.mxu0 0.0
    %757 = vmatprep.subr.mxu0 0.0
    %758 = vmatpush2.msra.mxu0 0.0
    %759 = vmatprep.subr.mxu0 0.0
    %760 = vmatpush2.msra.mxu0 0.0
    %761 = vmatprep.subr.mxu0 0.0
    %762 = vmatpush2.msra.mxu0 0.0
    %763 = vmatprep.subr.mxu0 0.0
    %764 = vmatpush2.msra.mxu0 0.0
    %765 = vmatprep.subr.mxu0 0.0
    %766 = vmatpush2.msra.mxu0 0.0
    %767 = vmatprep.subr.mxu0 0.0
    %768 = vmatpush2.msra.mxu0 0.0
    %769 = vmatprep.subr.mxu0 0.0
    %770 = vmatpush2.msra.mxu0 0.0
    %771 = vmatprep.subr.mxu0 0.0
    %772 = vmatpush2.msra.mxu0 0.0
    %773 = vmatprep.subr.mxu0 0.0
    %774 = vmatpush2.msra.mxu0 0.0
    %775 = vmatprep.subr.mxu0 0.0
    %776 = vmatpush2.msra.mxu0 0.0
    %777 = vmatprep.subr.mxu0 0.0
    %778 = vmatpush2.msra.mxu0 0.0
    %779 = vmatprep.subr.mxu0 0.0
    %780 = vmatpush2.msra.mxu0 0.0
    %781 = vmatprep.subr.mxu0 0.0
    %782 = vmatpush2.msra.mxu0 0.0
    %783 = vmatprep.mubr.f32.mxu0 0.0
    %784 = vmatmul.mubr.f32.gmra.mxu0 %v714
    %v785 = vpop.f32.mrf.mxu0
    %v786 = vadd.f32 %v710, %v785
    %v787 = vpop.f32.mrf.mxu0
    %788 = vdwg.mxu0
    %v789 = vld [vmem:[%s14] sm:$0xff]
    %v790 = vld [vmem:[%s14 + $0x8] sm:$0xff]
    %v791 = vrot.slane %v789, 4
    %v792 = vadd.f32 %v789, %v791
    %v793 = vrot.slane %v792, 2
    %v794 = vadd.f32 %v792, %v793
    %v795 = vrot.slane %v794, 1
    %v796 = vadd.f32 %v794, %v795
    %v797 = vrot.slane %v790, 4
    %v798 = vadd.f32 %v790, %v797
    %v799 = vrot.slane %v798, 2
    %v800 = vadd.f32 %v798, %v799
    %v801 = vrot.slane %v800, 1
    %v802 = vadd.f32 %v800, %v801
    %v803 = vmax.f32 %v796, 0.0
    %v804 = vmax.f32 %v802, 0.0
    %v805 = vld [vmem:[#allocation14] sm:$0xff]
    %v806 = vld [vmem:[#allocation14 + $0x8] sm:$0xff]
    %v807 = vld [vmem:[#allocation14 + $0x10] sm:$0xff]
    %v808 = vld [vmem:[#allocation14 + $0x18] sm:$0xff]
    %v809 = vld [vmem:[#allocation14 + $0x20] sm:$0xff]
    %v810 = vld [vmem:[#allocation14 + $0x28] sm:$0xff]
    %v811 = vld [vmem:[#allocation14 + $0x30] sm:$0xff]
    %v812 = vld [vmem:[#allocation14 + $0x38] sm:$0xff]
    %v813 = vld [vmem:[#allocation14 + $0x40] sm:$0xff]
    %v814 = vld [vmem:[#allocation14 + $0x48] sm:$0xff]
    %v815 = vld [vmem:[#allocation14 + $0x50] sm:$0xff]
    %v816 = vld [vmem:[#allocation14 + $0x58] sm:$0xff]
    %v817 = vld [vmem:[#allocation14 + $0x60] sm:$0xff]
    %v818 = vld [vmem:[#allocation14 + $0x68] sm:$0xff]
    %v819 = vld [vmem:[#allocation14 + $0x70] sm:$0xff]
    %v820 = vld [vmem:[#allocation14 + $0x78] sm:$0xff]
    %v821 = vmax.f32 %v700, 0.0
    %v822 = vld [vmem:[#allocation16] sm:$0xff]
    %v823 = vld [vmem:[#allocation16 + $0x8] sm:$0xff]
    %v824 = vld [vmem:[#allocation16 + $0x10] sm:$0xff]
    %v825 = vld [vmem:[#allocation16 + $0x18] sm:$0xff]
    %v826 = vld [vmem:[#allocation16 + $0x20] sm:$0xff]
    %v827 = vld [vmem:[#allocation16 + $0x28] sm:$0xff]
    %v828 = vld [vmem:[#allocation16 + $0x30] sm:$0x3]
    %vm829 = vcmask 408576
    %v831 = vsel %vm829, %v821, 0
    %vm833 = vcmask 1041408
    %v835 = vsel %vm833, %v828, 0
    %837 = vmatprep.subr.mxu0 0.0
    %838 = vmatpush1.msra.mxu0 0.0
    %839 = vmatprep.subr.mxu0 0.0
    %840 = vmatpush1.msra.mxu0 0.0
    %841 = vmatprep.subr.mxu0 0.0
    %842 = vmatpush1.msra.mxu0 0.0
    %843 = vmatprep.subr.mxu0 0.0
    %844 = vmatpush1.msra.mxu0 0.0
    %845 = vmatprep.subr.mxu0 0.0
    %846 = vmatpush1.msra.mxu0 0.0
    %847 = vmatprep.subr.mxu0 0.0
    %848 = vmatpush1.msra.mxu0 0.0
    %849 = vmatprep.subr.mxu0 0.0
    %850 = vmatpush1.msra.mxu0 0.0
    %851 = vmatprep.subr.mxu0 0.0
    %852 = vmatpush1.msra.mxu0 0.0
    %853 = vmatprep.subr.mxu0 0.0
    %854 = vmatpush1.msra.mxu0 0.0
    %855 = vmatprep.subr.mxu0 0.0
    %856 = vmatpush1.msra.mxu0 %v835
    %857 = vmatprep.subr.mxu0 0.0
    %858 = vmatpush1.msra.mxu0 %v827
    %859 = vmatprep.subr.mxu0 0.0
    %860 = vmatpush1.msra.mxu0 %v826
    %861 = vmatprep.subr.mxu0 0.0
    %862 = vmatpush1.msra.mxu0 %v825
    %863 = vmatprep.subr.mxu0 0.0
    %864 = vmatpush1.msra.mxu0 %v824
    %865 = vmatprep.subr.mxu0 0.0
    %866 = vmatpush1.msra.mxu0 %v823
    %867 = vmatprep.subr.mxu0 0.0
    %868 = vmatpush1.msra.mxu0 %v822
    %869 = vmatprep.subr.mxu0 0.0
    %870 = vmatpush2.msra.mxu0 0.0
    %871 = vmatprep.subr.mxu0 0.0
    %872 = vmatpush2.msra.mxu0 0.0
    %873 = vmatprep.subr.mxu0 0.0
    %874 = vmatpush2.msra.mxu0 0.0
    %875 = vmatprep.subr.mxu0 0.0
    %876 = vmatpush2.msra.mxu0 0.0
    %877 = vmatprep.subr.mxu0 0.0
    %878 = vmatpush2.msra.mxu0 0.0
    %879 = vmatprep.subr.mxu0 0.0
    %880 = vmatpush2.msra.mxu0 0.0
    %881 = vmatprep.subr.mxu0 0.0
    %882 = vmatpush2.msra.mxu0 0.0
    %883 = vmatprep.subr.mxu0 0.0
    %884 = vmatpush2.msra.mxu0 0.0
    %885 = vmatprep.subr.mxu0 0.0
    %886 = vmatpush2.msra.mxu0 0.0
    %887 = vmatprep.subr.mxu0 0.0
    %888 = vmatpush2.msra.mxu0 0.0
    %889 = vmatprep.subr.mxu0 0.0
    %890 = vmatpush2.msra.mxu0 0.0
    %891 = vmatprep.subr.mxu0 0.0
    %892 = vmatpush2.msra.mxu0 0.0
    %893 = vmatprep.subr.mxu0 0.0
    %894 = vmatpush2.msra.mxu0 0.0
    %895 = vmatprep.subr.mxu0 0.0
    %896 = vmatpush2.msra.mxu0 0.0
    %897 = vmatprep.subr.mxu0 0.0
    %898 = vmatpush2.msra.mxu0 0.0
    %899 = vmatprep.subr.mxu0 0.0
    %900 = vmatpush2.msra.mxu0 0.0
    %901 = vmatprep.mubr.f32.mxu0 0.0
    %902 = vmatmul.mubr.f32.gmra.mxu0 %v831
    %v903 = vpop.f32.mrf.mxu0
    %v904 = vadd.f32 0.0, %v903
    %v905 = vpop.f32.mrf.mxu0
    %906 = vdwg.mxu0
    %vm909 = vcmask 1041409
    %v910 = vsel %vm909, %v804, %v803
    %912 = vmatprep.subr.mxu0 0.0
    %913 = vmatpush1.msra.mxu0 %v820
    %914 = vmatprep.subr.mxu0 0.0
    %915 = vmatpush1.msra.mxu0 %v819
    %916 = vmatprep.subr.mxu0 0.0
    %917 = vmatpush1.msra.mxu0 %v818
    %918 = vmatprep.subr.mxu0 0.0
    %919 = vmatpush1.msra.mxu0 %v817
    %920 = vmatprep.subr.mxu0 0.0
    %921 = vmatpush1.msra.mxu0 %v816
    %922 = vmatprep.subr.mxu0 0.0
    %923 = vmatpush1.msra.mxu0 %v815
    %924 = vmatprep.subr.mxu0 0.0
    %925 = vmatpush1.msra.mxu0 %v814
    %926 = vmatprep.subr.mxu0 0.0
    %927 = vmatpush1.msra.mxu0 %v813
    %928 = vmatprep.subr.mxu0 0.0
    %929 = vmatpush1.msra.mxu0 %v812
    %930 = vmatprep.subr.mxu0 0.0
    %931 = vmatpush1.msra.mxu0 %v811
    %932 = vmatprep.subr.mxu0 0.0
    %933 = vmatpush1.msra.mxu0 %v810
    %934 = vmatprep.subr.mxu0 0.0
    %935 = vmatpush1.msra.mxu0 %v809
    %936 = vmatprep.subr.mxu0 0.0
    %937 = vmatpush1.msra.mxu0 %v808
    %938 = vmatprep.subr.mxu0 0.0
    %939 = vmatpush1.msra.mxu0 %v807
    %940 = vmatprep.subr.mxu0 0.0
    %941 = vmatpush1.msra.mxu0 %v806
    %942 = vmatprep.subr.mxu0 0.0
    %943 = vmatpush1.msra.mxu0 %v805
    %944 = vmatprep.subr.mxu0 0.0
    %945 = vmatpush2.msra.mxu0 0.0
    %946 = vmatprep.subr.mxu0 0.0
    %947 = vmatpush2.msra.mxu0 0.0
    %948 = vmatprep.subr.mxu0 0.0
    %949 = vmatpush2.msra.mxu0 0.0
    %950 = vmatprep.subr.mxu0 0.0
    %951 = vmatpush2.msra.mxu0 0.0
    %952 = vmatprep.subr.mxu0 0.0
    %953 = vmatpush2.msra.mxu0 0.0
    %954 = vmatprep.subr.mxu0 0.0
    %955 = vmatpush2.msra.mxu0 0.0
    %956 = vmatprep.subr.mxu0 0.0
    %957 = vmatpush2.msra.mxu0 0.0
    %958 = vmatprep.subr.mxu0 0.0
    %959 = vmatpush2.msra.mxu0 0.0
    %960 = vmatprep.subr.mxu0 0.0
    %961 = vmatpush2.msra.mxu0 0.0
    %962 = vmatprep.subr.mxu0 0.0
    %963 = vmatpush2.msra.mxu0 0.0
    %964 = vmatprep.subr.mxu0 0.0
    %965 = vmatpush2.msra.mxu0 0.0
    %966 = vmatprep.subr.mxu0 0.0
    %967 = vmatpush2.msra.mxu0 0.0
    %968 = vmatprep.subr.mxu0 0.0
    %969 = vmatpush2.msra.mxu0 0.0
    %970 = vmatprep.subr.mxu0 0.0
    %971 = vmatpush2.msra.mxu0 0.0
    %972 = vmatprep.subr.mxu0 0.0
    %973 = vmatpush2.msra.mxu0 0.0
    %974 = vmatprep.subr.mxu0 0.0
    %975 = vmatpush2.msra.mxu0 0.0
    %976 = vmatprep.mubr.f32.mxu0 0.0
    %977 = vmatmul.mubr.f32.gmra.mxu0 %v910
    %v978 = vpop.f32.mrf.mxu0
    %v979 = vadd.f32 %v904, %v978
    %v980 = vpop.f32.mrf.mxu0
    %981 = vdwg.mxu0
    %v982 = vmax.f32 %v786, 0.0
    %v983 = vld [vmem:[#allocation17] sm:$0xf]
    %v985 = vsel %vm712, %v982, 0
    %v988 = vsel %vm626, %v983, 0
    %990 = vmatprep.subr.mxu0 0.0
    %991 = vmatpush1.msra.mxu0 0.0
    %992 = vmatprep.subr.mxu0 0.0
    %993 = vmatpush1.msra.mxu0 0.0
    %994 = vmatprep.subr.mxu0 0.0
    %995 = vmatpush1.msra.mxu0 0.0
    %996 = vmatprep.subr.mxu0 0.0
    %997 = vmatpush1.msra.mxu0 0.0
    %998 = vmatprep.subr.mxu0 0.0
    %999 = vmatpush1.msra.mxu0 0.0
    %1000 = vmatprep.subr.mxu0 0.0
    %1001 = vmatpush1.msra.mxu0 0.0
    %1002 = vmatprep.subr.mxu0 0.0
    %1003 = vmatpush1.msra.mxu0 0.0
    %1004 = vmatprep.subr.mxu0 0.0
    %1005 = vmatpush1.msra.mxu0 0.0
    %1006 = vmatprep.subr.mxu0 0.0
    %1007 = vmatpush1.msra.mxu0 0.0
    %1008 = vmatprep.subr.mxu0 0.0
    %1009 = vmatpush1.msra.mxu0 0.0
    %1010 = vmatprep.subr.mxu0 0.0
    %1011 = vmatpush1.msra.mxu0 0.0
    %1012 = vmatprep.subr.mxu0 0.0
    %1013 = vmatpush1.msra.mxu0 0.0
    %1014 = vmatprep.subr.mxu0 0.0
    %1015 = vmatpush1.msra.mxu0 0.0
    %1016 = vmatprep.subr.mxu0 0.0
    %1017 = vmatpush1.msra.mxu0 0.0
    %1018 = vmatprep.subr.mxu0 0.0
    %1019 = vmatpush1.msra.mxu0 0.0
    %1020 = vmatprep.subr.mxu0 0.0
    %1021 = vmatpush1.msra.mxu0 %v988
    %1022 = vmatprep.subr.mxu0 0.0
    %1023 = vmatpush2.msra.mxu0 0.0
    %1024 = vmatprep.subr.mxu0 0.0
    %1025 = vmatpush2.msra.mxu0 0.0
    %1026 = vmatprep.subr.mxu0 0.0
    %1027 = vmatpush2.msra.mxu0 0.0
    %1028 = vmatprep.subr.mxu0 0.0
    %1029 = vmatpush2.msra.mxu0 0.0
    %1030 = vmatprep.subr.mxu0 0.0
    %1031 = vmatpush2.msra.mxu0 0.0
    %1032 = vmatprep.subr.mxu0 0.0
    %1033 = vmatpush2.msra.mxu0 0.0
    %1034 = vmatprep.subr.mxu0 0.0
    %1035 = vmatpush2.msra.mxu0 0.0
    %1036 = vmatprep.subr.mxu0 0.0
    %1037 = vmatpush2.msra.mxu0 0.0
    %1038 = vmatprep.subr.mxu0 0.0
    %1039 = vmatpush2.msra.mxu0 0.0
    %1040 = vmatprep.subr.mxu0 0.0
    %1041 = vmatpush2.msra.mxu0 0.0
    %1042 = vmatprep.subr.mxu0 0.0
    %1043 = vmatpush2.msra.mxu0 0.0
    %1044 = vmatprep.subr.mxu0 0.0
    %1045 = vmatpush2.msra.mxu0 0.0
    %1046 = vmatprep.subr.mxu0 0.0
    %1047 = vmatpush2.msra.mxu0 0.0
    %1048 = vmatprep.subr.mxu0 0.0
    %1049 = vmatpush2.msra.mxu0 0.0
    %1050 = vmatprep.subr.mxu0 0.0
    %1051 = vmatpush2.msra.mxu0 0.0
    %1052 = vmatprep.subr.mxu0 0.0
    %1053 = vmatpush2.msra.mxu0 0.0
    %1054 = vmatprep.mubr.f32.mxu0 0.0
    %1055 = vmatmul.mubr.f32.gmra.mxu0 %v985
    %v1056 = vpop.f32.mrf.mxu0
    %v1057 = vadd.f32 0.0, %v1056
    %v1058 = vpop.f32.mrf.mxu0
    %1059 = vdwg.mxu0
    %v1060 = vadd.f32 %v979, %v1057
    %v1061 = vld [vmem:[#allocation19] sm:$0x1]
    %v1063 = vlaneseq
    %v1064 = vshrl.u32 %v1063, 7
    %v1065 = vsub.s32 0, %v1064
    %v1066 = vrot.slane %v1061, %v1065
    %v1068 = vadd.f32 %v1060, %v1066
    %v1071 = vunpack.c.l.s4 1966171168
    %v1072 = vunpack.c.0.s8 %v1071
    %v1073 = vlaneseq
    %v1074 = vshrl.u32 %v1073, 7
    %v1075 = vsub.s32 %v1072, %v1074
    %v1076 = vrot.slane %v1068, %v1075
    %v1077 = vcombine.high %v1076, %v1076
    %v1079 = vunpack.c.l.s4 1966171168
    %v1080 = vunpack.c.0.s8 %v1079
    %v1081 = vlaneseq
    %v1082 = vshrl.u32 %v1081, 7
    %v1083 = vsub.s32 %v1080, %v1082
    %v1084 = vrot.slane %v1076, %v1083
    %v1086 = vunpack.c.l.s4 1966171168
    %v1087 = vunpack.c.0.s8 %v1086
    %v1088 = vlaneseq
    %v1089 = vshrl.u32 %v1088, 7
    %v1090 = vsub.s32 %v1087, %v1089
    %v1091 = vrot.slane %v1077, %v1090
    %1094 = vst [vmem:[%s21] sm:$0x1] %v1084
    %1095 = vst [vmem:[%s21 + $0x1] sm:$0x1] %v1091
    // Predicated region
    $region122: #{multidcp_forward.2} parent=1 // pred_check
      _
    $region123: #{multidcp_forward.2} parent=1 // pred_check_branch
      %1097 = sbr.rel (0) target = $region125
    $region124: #{multidcp_forward.2} parent=1 // pred_region
      _
    $region125: #{multidcp_forward.2} parent=1 // pred_fallthru
      _
    // Predicated region
    $region126: #{multidcp_forward.2} parent=1 // pred_check
      _
    $region127: #{multidcp_forward.2} parent=1 // pred_check_branch
      %1099 = sbr.rel (0) target = $region129
    $region128: #{multidcp_forward.2} parent=1 // pred_region
      %s1101 = ssub.s32 32, 32
      %1102 = vsyncadd [#allocation4], %s1101
      %s1104 = sshll.u32 [#allocation20], 4
      %s1105 = int_to_ptr.vmem [resolvable:$true] %s1104
      %1107 = dma.vmem_to_hbm [thread:$0]  %s1105, 32, %s20, [#allocation4]
    $region129: #{multidcp_forward.2} parent=1 // pred_fallthru
      _
    // Predicated region
    $region130: #{multidcp_forward.2} parent=1 // pred_check
      _
    $region131: #{multidcp_forward.2} parent=1 // pred_check_branch
      %1109 = sbr.rel (0) target = $region133
    $region132: #{multidcp_forward.2} parent=1 // pred_region
      _
    $region133: #{multidcp_forward.2} parent=1 // pred_fallthru
      _
    // Predicated region
    $region134: #{multidcp_forward.2} parent=1 // pred_check
      _
    $region135: #{multidcp_forward.2} parent=1 // pred_check_branch
      %1111 = sbr.rel (0) target = $region137
    $region136: #{multidcp_forward.2} parent=1 // pred_region
      _
    $region137: #{multidcp_forward.2} parent=1 // pred_fallthru
      _
    // Predicated region
    $region138: #{multidcp_forward.2} parent=1 // pred_check
      _
    $region139: #{multidcp_forward.2} parent=1 // pred_check_branch
      %1113 = sbr.rel (0) target = $region141
    $region140: #{multidcp_forward.2} parent=1 // pred_region
      %1114 = dma.done [#allocation4], 32
    $region141: #{multidcp_forward.2} parent=1 // pred_fallthru
      _
    // Predicated region
    $region142: #{multidcp_forward.2} parent=1 // pred_check
      _
    $region143: #{multidcp_forward.2} parent=1 // pred_check_branch
      %1116 = sbr.rel (0) target = $region145
    $region144: #{multidcp_forward.2} parent=1 // pred_region
      _
    $region145: #{multidcp_forward.2} parent=1 // pred_fallthru
      _
    %1117 = vsyncpa [#allocation3], 1
    %1118 = vsyncpa [#allocation6], 1
    %1119 = vsyncpa [#allocation9], 1
    %1120 = vsyncpa [#allocation12], 1
    %1121 = vsyncpa [#allocation15], 1
    %1122 = vsyncpa [#allocation18], 1
    %1123 = vsyncpa [#allocation4], 1

// kernel: multidcp_forward.3
$region0: #{multidcp_forward.3}
  #allocation0 [shape = 'u32[]', space=smem, size = 0x4, offset = 0x4, fixed_abs, tag = 'smem constant byte address 0x4 - core index']
  #allocation1 [shape = 'u32[144,128]{1,0:T(1,128)}', space=vmem, size = 0x12000, scoped, tag = 'internal scratch']
  %s0 = inlined_call_operand.vmem [shape: f32[16,128], index: 0, kind: input, shape index: {}]
  %s1 = inlined_call_operand.vmem [shape: f32[2,8,128], index: 1, kind: input, shape index: {}]
  %s2 = inlined_call_operand.vmem [shape: f32[2,1,8], index: 2, kind: input, shape index: {}]
  %s3 = inlined_call_operand.vmem [shape: f32[128,128], index: 3, kind: input, shape index: {}]
  %s4 = inlined_call_operand.vmem [shape: f32[128,128], index: 4, kind: input, shape index: {}]
  %s5 = inlined_call_operand.vmem [shape: f32[128,128], index: 5, kind: input, shape index: {}]
  %s6 = inlined_call_operand.vmem [shape: f32[1,128], index: 6, kind: input, shape index: {}]
  %s7 = inlined_call_operand.vmem [shape: f32[128,128], index: 7, kind: input, shape index: {}]
  %s8 = inlined_call_operand.vmem [shape: f32[2,1,128], index: 8, kind: input, shape index: {}]
  %s9 = inlined_call_operand.hbm [shape: f32[2,16,128], index: 9, kind: output, shape index: {}]
  %s10 = sld [smem:[#allocation0]]
  $region69: #{multidcp_forward.3} parent=0
    _
  %s12 = ssub.s32 1, %s10
  %s13 = scalar_select 0, %s12, %s10
  $region1: #{multidcp_forward.3} parent=0
    #allocation2 [shape = 'u8[16384]{0}', space=vmem, size = 0x4000, scoped, tag = 'output window, operand 0']
    #allocation3 [shape = 's32[2]{0}', space=sflag, size = 0x8, scoped, tag = 'scoped memory for multidcp_forward.3']
    %14 = vsyncpa [#allocation3], 0
    %s15 = scalar_lea.sflag [#allocation3], 1
    %16 = vsyncpa %s15, 0
    loop: start=0, step=1, limit=4
    $region2: #{multidcp_forward.3} parent=1 // loop_pre_header
      _
    $region3: #{multidcp_forward.3} parent=1 // loop_header
      %s18 = sphi 0, %s22
      %p19 = scmp.ge.s32.totalorder %s18, 4
      %s26 = sphi 0, %s26
      %s28 = sphi 0, %s26
      %s29 = sphi 0, %s28
      %s43 = sphi 0, %s29
      %s49 = sphi 0, %s51
      %s52 = sphi 0, %s49
      %s53 = sphi 0, %s52
      %s69 = sphi 0, %s53
      %s75 = sphi 0, %s77
      %s78 = sphi 0, %s75
      %s79 = sphi 0, %s78
      %s95 = sphi 0, %s79
      %s99 = sphi 0, %s99
      %s101 = sphi 0, %s99
      %s102 = sphi 0, %s101
      %s116 = sphi 0, %s102
      %s120 = sphi 0, %s120
      %s122 = sphi 0, %s120
      %s123 = sphi 0, %s122
      %s137 = sphi 0, %s123
      %s141 = sphi 0, %s141
      %s143 = sphi 0, %s141
      %s144 = sphi 0, %s143
      %s158 = sphi 0, %s144
      %s162 = sphi 0, %s162
      %s164 = sphi 0, %s162
      %s165 = sphi 0, %s164
      %s179 = sphi 0, %s165
      %s183 = sphi 0, %s183
      %s185 = sphi 0, %s183
      %s186 = sphi 0, %s185
      %s200 = sphi 0, %s186
      %s206 = sphi 0, %s208
      %s209 = sphi 0, %s206
      %s210 = sphi 0, %s209
      %s226 = sphi 0, %s210
      %s232 = sphi 0, %s234
      %s235 = sphi 0, %s232
      %s236 = sphi 0, %s235
      %s252 = sphi 0, %s236
    $region4: #{multidcp_forward.3} parent=1 // loop_header_branch
      %21 = sbr.rel (%p19) target = $region8
    $region5: #{multidcp_forward.3} parent=1 // loop_body
      %s23 = ssub.s32 %s18, 1
      %s24 = ssub.s32 %s18, 2
      %s25 = sadd.s32 %s18, 1
      %s27 = sadd.s32 %s26, 1
      %p30 = scmp.eq.s32.totalorder %s18, 1
      %p31 = scmp.ne.s32.totalorder %s26, %s28
      %p32 = scmp.eq.s32.totalorder %s18, 0
      %p33 = por %p31, %p32
      %p34 = scmp.ne.s32.totalorder %s26, %s28
      %p35 = scmp.eq.s32.totalorder %s23, 1
      %p36 = por %p34, %p35
      %p37 = scmp.ne.s32.totalorder %s28, %s29
      %p38 = scmp.eq.s32.totalorder %s23, 0
      %p39 = por %p37, %p38
      %p40 = scmp.ne.s32.totalorder %s28, %s29
      %p41 = scmp.eq.s32.totalorder %s24, 1
      %p42 = por %p40, %p41
      %p44 = scmp.ne.s32.totalorder %s29, %s43
      %p45 = scmp.eq.s32.totalorder %s24, 0
      %p46 = por %p44, %p45
      %s47 = ssub.s32 %s18, %s25
      %p48 = scmp.eq.s32.totalorder %s47, 0
      %s50 = sadd.s32 %s49, 1
      %s51 = scalar_select %p48, %s49, %s50
      %p54 = pneg %p48
      %p55 = scmp.eq.s32.totalorder %s18, 1
      %p56 = por %p54, %p55
      %p57 = scmp.ne.s32.totalorder %s49, %s52
      %p58 = scmp.eq.s32.totalorder %s18, 0
      %p59 = por %p57, %p58
      %p60 = scmp.ne.s32.totalorder %s49, %s52
      %p61 = scmp.eq.s32.totalorder %s23, 1
      %p62 = por %p60, %p61
      %p63 = scmp.ne.s32.totalorder %s52, %s53
      %p64 = scmp.eq.s32.totalorder %s23, 0
      %p65 = por %p63, %p64
      %p66 = scmp.ne.s32.totalorder %s52, %s53
      %p67 = scmp.eq.s32.totalorder %s24, 1
      %p68 = por %p66, %p67
      %p70 = scmp.ne.s32.totalorder %s53, %s69
      %p71 = scmp.eq.s32.totalorder %s24, 0
      %p72 = por %p70, %p71
      %s73 = ssub.s32 %s18, %s25
      %p74 = scmp.eq.s32.totalorder %s73, 0
      %s76 = sadd.s32 %s75, 1
      %s77 = scalar_select %p74, %s75, %s76
      %p80 = pneg %p74
      %p81 = scmp.eq.s32.totalorder %s18, 1
      %p82 = por %p80, %p81
      %p83 = scmp.ne.s32.totalorder %s75, %s78
      %p84 = scmp.eq.s32.totalorder %s18, 0
      %p85 = por %p83, %p84
      %p86 = scmp.ne.s32.totalorder %s75, %s78
      %p87 = scmp.eq.s32.totalorder %s23, 1
      %p88 = por %p86, %p87
      %p89 = scmp.ne.s32.totalorder %s78, %s79
      %p90 = scmp.eq.s32.totalorder %s23, 0
      %p91 = por %p89, %p90
      %p92 = scmp.ne.s32.totalorder %s78, %s79
      %p93 = scmp.eq.s32.totalorder %s24, 1
      %p94 = por %p92, %p93
      %p96 = scmp.ne.s32.totalorder %s79, %s95
      %p97 = scmp.eq.s32.totalorder %s24, 0
      %p98 = por %p96, %p97
      %s100 = sadd.s32 %s99, 1
      %p103 = scmp.eq.s32.totalorder %s18, 1
      %p104 = scmp.ne.s32.totalorder %s99, %s101
      %p105 = scmp.eq.s32.totalorder %s18, 0
      %p106 = por %p104, %p105
      %p107 = scmp.ne.s32.totalorder %s99, %s101
      %p108 = scmp.eq.s32.totalorder %s23, 1
      %p109 = por %p107, %p108
      %p110 = scmp.ne.s32.totalorder %s101, %s102
      %p111 = scmp.eq.s32.totalorder %s23, 0
      %p112 = por %p110, %p111
      %p113 = scmp.ne.s32.totalorder %s101, %s102
      %p114 = scmp.eq.s32.totalorder %s24, 1
      %p115 = por %p113, %p114
      %p117 = scmp.ne.s32.totalorder %s102, %s116
      %p118 = scmp.eq.s32.totalorder %s24, 0
      %p119 = por %p117, %p118
      %s121 = sadd.s32 %s120, 1
      %p124 = scmp.eq.s32.totalorder %s18, 1
      %p125 = scmp.ne.s32.totalorder %s120, %s122
      %p126 = scmp.eq.s32.totalorder %s18, 0
      %p127 = por %p125, %p126
      %p128 = scmp.ne.s32.totalorder %s120, %s122
      %p129 = scmp.eq.s32.totalorder %s23, 1
      %p130 = por %p128, %p129
      %p131 = scmp.ne.s32.totalorder %s122, %s123
      %p132 = scmp.eq.s32.totalorder %s23, 0
      %p133 = por %p131, %p132
      %p134 = scmp.ne.s32.totalorder %s122, %s123
      %p135 = scmp.eq.s32.totalorder %s24, 1
      %p136 = por %p134, %p135
      %p138 = scmp.ne.s32.totalorder %s123, %s137
      %p139 = scmp.eq.s32.totalorder %s24, 0
      %p140 = por %p138, %p139
      %s142 = sadd.s32 %s141, 1
      %p145 = scmp.eq.s32.totalorder %s18, 1
      %p146 = scmp.ne.s32.totalorder %s141, %s143
      %p147 = scmp.eq.s32.totalorder %s18, 0
      %p148 = por %p146, %p147
      %p149 = scmp.ne.s32.totalorder %s141, %s143
      %p150 = scmp.eq.s32.totalorder %s23, 1
      %p151 = por %p149, %p150
      %p152 = scmp.ne.s32.totalorder %s143, %s144
      %p153 = scmp.eq.s32.totalorder %s23, 0
      %p154 = por %p152, %p153
      %p155 = scmp.ne.s32.totalorder %s143, %s144
      %p156 = scmp.eq.s32.totalorder %s24, 1
      %p157 = por %p155, %p156
      %p159 = scmp.ne.s32.totalorder %s144, %s158
      %p160 = scmp.eq.s32.totalorder %s24, 0
      %p161 = por %p159, %p160
      %s163 = sadd.s32 %s162, 1
      %p166 = scmp.eq.s32.totalorder %s18, 1
      %p167 = scmp.ne.s32.totalorder %s162, %s164
      %p168 = scmp.eq.s32.totalorder %s18, 0
      %p169 = por %p167, %p168
      %p170 = scmp.ne.s32.totalorder %s162, %s164
      %p171 = scmp.eq.s32.totalorder %s23, 1
      %p172 = por %p170, %p171
      %p173 = scmp.ne.s32.totalorder %s164, %s165
      %p174 = scmp.eq.s32.totalorder %s23, 0
      %p175 = por %p173, %p174
      %p176 = scmp.ne.s32.totalorder %s164, %s165
      %p177 = scmp.eq.s32.totalorder %s24, 1
      %p178 = por %p176, %p177
      %p180 = scmp.ne.s32.totalorder %s165, %s179
      %p181 = scmp.eq.s32.totalorder %s24, 0
      %p182 = por %p180, %p181
      %s184 = sadd.s32 %s183, 1
      %p187 = scmp.eq.s32.totalorder %s18, 1
      %p188 = scmp.ne.s32.totalorder %s183, %s185
      %p189 = scmp.eq.s32.totalorder %s18, 0
      %p190 = por %p188, %p189
      %p191 = scmp.ne.s32.totalorder %s183, %s185
      %p192 = scmp.eq.s32.totalorder %s23, 1
      %p193 = por %p191, %p192
      %p194 = scmp.ne.s32.totalorder %s185, %s186
      %p195 = scmp.eq.s32.totalorder %s23, 0
      %p196 = por %p194, %p195
      %p197 = scmp.ne.s32.totalorder %s185, %s186
      %p198 = scmp.eq.s32.totalorder %s24, 1
      %p199 = por %p197, %p198
      %p201 = scmp.ne.s32.totalorder %s186, %s200
      %p202 = scmp.eq.s32.totalorder %s24, 0
      %p203 = por %p201, %p202
      %s204 = ssub.s32 %s18, %s25
      %p205 = scmp.eq.s32.totalorder %s204, 0
      %s207 = sadd.s32 %s206, 1
      %s208 = scalar_select %p205, %s206, %s207
      %p211 = pneg %p205
      %p212 = scmp.eq.s32.totalorder %s18, 1
      %p213 = por %p211, %p212
      %p214 = scmp.ne.s32.totalorder %s206, %s209
      %p215 = scmp.eq.s32.totalorder %s18, 0
      %p216 = por %p214, %p215
      %p217 = scmp.ne.s32.totalorder %s206, %s209
      %p218 = scmp.eq.s32.totalorder %s23, 1
      %p219 = por %p217, %p218
      %p220 = scmp.ne.s32.totalorder %s209, %s210
      %p221 = scmp.eq.s32.totalorder %s23, 0
      %p222 = por %p220, %p221
      %p223 = scmp.ne.s32.totalorder %s209, %s210
      %p224 = scmp.eq.s32.totalorder %s24, 1
      %p225 = por %p223, %p224
      %p227 = scmp.ne.s32.totalorder %s210, %s226
      %p228 = scmp.eq.s32.totalorder %s24, 0
      %p229 = por %p227, %p228
      %s230 = ssub.s32 %s18, %s25
      %p231 = scmp.eq.s32.totalorder %s230, 0
      %s233 = sadd.s32 %s232, 1
      %s234 = scalar_select %p231, %s232, %s233
      %p237 = pneg %p231
      %p238 = scmp.eq.s32.totalorder %s18, 1
      %p239 = por %p237, %p238
      %p240 = scmp.ne.s32.totalorder %s232, %s235
      %p241 = scmp.eq.s32.totalorder %s18, 0
      %p242 = por %p240, %p241
      %p243 = scmp.ne.s32.totalorder %s232, %s235
      %p244 = scmp.eq.s32.totalorder %s23, 1
      %p245 = por %p243, %p244
      %p246 = scmp.ne.s32.totalorder %s235, %s236
      %p247 = scmp.eq.s32.totalorder %s23, 0
      %p248 = por %p246, %p247
      %p249 = scmp.ne.s32.totalorder %s235, %s236
      %p250 = scmp.eq.s32.totalorder %s24, 1
      %p251 = por %p249, %p250
      %p253 = scmp.ne.s32.totalorder %s236, %s252
      %p254 = scmp.eq.s32.totalorder %s24, 0
      %p255 = por %p253, %p254
      %p256 = scmp.le.s32.totalorder 1, %s18
      %p257 = scmp.lt.s32.totalorder %s18, 3
      %p258 = pnand %p256, %p257
      %p259 = pneg %p258
      // Predicated region
      $region9: #{multidcp_forward.3} parent=5 // pred_check
        _
      $region10: #{multidcp_forward.3} parent=5 // pred_check_branch
        %261 = sbr.rel (%p258) target = $region12
      $region11: #{multidcp_forward.3} parent=5 // pred_region
        %s262 = ssub.s32 %s18, 1
        // Predicated region
        $region13: #{multidcp_forward.3} parent=11 // pred_check
          %p263 = pneg %p39
        $region14: #{multidcp_forward.3} parent=11 // pred_check_branch
          %265 = sbr.rel (%p263) target = $region16
        $region15: #{multidcp_forward.3} parent=11 // pred_region
          _
        $region16: #{multidcp_forward.3} parent=11 // pred_fallthru
          _
        // Predicated region
        $region17: #{multidcp_forward.3} parent=11 // pred_check
          %p266 = pneg %p112
        $region18: #{multidcp_forward.3} parent=11 // pred_check_branch
          %268 = sbr.rel (%p266) target = $region20
        $region19: #{multidcp_forward.3} parent=11 // pred_region
          _
        $region20: #{multidcp_forward.3} parent=11 // pred_fallthru
          _
        // Predicated region
        $region21: #{multidcp_forward.3} parent=11 // pred_check
          %p269 = pneg %p133
        $region22: #{multidcp_forward.3} parent=11 // pred_check_branch
          %271 = sbr.rel (%p269) target = $region24
        $region23: #{multidcp_forward.3} parent=11 // pred_region
          _
        $region24: #{multidcp_forward.3} parent=11 // pred_fallthru
          _
        // Predicated region
        $region25: #{multidcp_forward.3} parent=11 // pred_check
          %p272 = pneg %p154
        $region26: #{multidcp_forward.3} parent=11 // pred_check_branch
          %274 = sbr.rel (%p272) target = $region28
        $region27: #{multidcp_forward.3} parent=11 // pred_region
          _
        $region28: #{multidcp_forward.3} parent=11 // pred_fallthru
          _
        // Predicated region
        $region29: #{multidcp_forward.3} parent=11 // pred_check
          %p275 = pneg %p175
        $region30: #{multidcp_forward.3} parent=11 // pred_check_branch
          %277 = sbr.rel (%p275) target = $region32
        $region31: #{multidcp_forward.3} parent=11 // pred_region
          _
        $region32: #{multidcp_forward.3} parent=11 // pred_fallthru
          _
        // Predicated region
        $region33: #{multidcp_forward.3} parent=11 // pred_check
          %p278 = pneg %p196
        $region34: #{multidcp_forward.3} parent=11 // pred_check_branch
          %280 = sbr.rel (%p278) target = $region36
        $region35: #{multidcp_forward.3} parent=11 // pred_region
          _
        $region36: #{multidcp_forward.3} parent=11 // pred_fallthru
          _
      $region12: #{multidcp_forward.3} parent=5 // pred_fallthru
        _
      %p281 = scmp.lt.s32.totalorder %s18, 2
      // Predicated region
      $region37: #{multidcp_forward.3} parent=5 // pred_check
        %p282 = pneg %p281
      $region38: #{multidcp_forward.3} parent=5 // pred_check_branch
        %284 = sbr.rel (%p282) target = $region40
      $region39: #{multidcp_forward.3} parent=5 // pred_region
        // Predicated region
        $region41: #{multidcp_forward.3} parent=39 // pred_check
          %p285 = pneg %p59
        $region42: #{multidcp_forward.3} parent=39 // pred_check_branch
          %287 = sbr.rel (%p285) target = $region44
        $region43: #{multidcp_forward.3} parent=39 // pred_region
          %p288 = scmp.lt.s32.totalorder %s18, 1
          %s289 = scalar_select %p288, %s18, 1
          %s290 = smul.addr %s289, 8
          %s291 = scalar_lea.vmem %s1, %s290
        $region44: #{multidcp_forward.3} parent=39 // pred_fallthru
          _
        // Predicated region
        $region45: #{multidcp_forward.3} parent=39 // pred_check
          %p292 = pneg %p85
        $region46: #{multidcp_forward.3} parent=39 // pred_check_branch
          %294 = sbr.rel (%p292) target = $region48
        $region47: #{multidcp_forward.3} parent=39 // pred_region
          %p295 = scmp.lt.s32.totalorder %s18, 1
          %s296 = scalar_select %p295, %s18, 1
          %s297 = scalar_lea.vmem %s2, %s296
        $region48: #{multidcp_forward.3} parent=39 // pred_fallthru
          _
        // Predicated region
        $region49: #{multidcp_forward.3} parent=39 // pred_check
          %p298 = pneg %p216
        $region50: #{multidcp_forward.3} parent=39 // pred_check_branch
          %300 = sbr.rel (%p298) target = $region52
        $region51: #{multidcp_forward.3} parent=39 // pred_region
          %p301 = scmp.lt.s32.totalorder %s18, 1
          %s302 = scalar_select %p301, %s18, 1
          %s303 = scalar_lea.vmem %s8, %s302
        $region52: #{multidcp_forward.3} parent=39 // pred_fallthru
          _
      $region40: #{multidcp_forward.3} parent=5 // pred_fallthru
        _
      %p304 = scmp.le.s32.totalorder 1, %s18
      %p305 = scmp.lt.s32.totalorder %s18, 3
      %p306 = pnand %p304, %p305
      %p307 = pneg %p306
      // Predicated region
      $region53: #{multidcp_forward.3} parent=5 // pred_check
        _
      $region54: #{multidcp_forward.3} parent=5 // pred_check_branch
        %309 = sbr.rel (%p306) target = $region56
      $region55: #{multidcp_forward.3} parent=5 // pred_region
        %s310 = ssub.s32 %s18, 1
        %p311 = pneg %p39
        %p312 = pneg %p36
        %p313 = scmp.lt.s32.totalorder %s23, 1
        %s314 = scalar_select %p313, %s23, 1
        %s315 = smul.addr %s314, 8
        %s316 = scalar_lea.vmem %s1, %s315
        %p317 = pneg %p65
        %p318 = pneg %p62
        %p319 = scmp.lt.s32.totalorder %s23, 1
        %s320 = scalar_select %p319, %s23, 1
        %s321 = scalar_lea.vmem %s2, %s320
        %p322 = pneg %p91
        %p323 = pneg %p88
        %p324 = pneg %p112
        %p325 = pneg %p109
        %p326 = pneg %p133
        %p327 = pneg %p130
        %p328 = pneg %p154
        %p329 = pneg %p151
        %p330 = pneg %p175
        %p331 = pneg %p172
        %p332 = pneg %p196
        %p333 = pneg %p193
        %p334 = scmp.lt.s32.totalorder %s23, 1
        %s335 = scalar_select %p334, %s23, 1
        %s336 = scalar_lea.vmem %s8, %s335
        %p337 = pneg %p222
        %p338 = pneg %p219
        %p339 = pneg %p248
        %p340 = pneg %p245
        %s341 = sand.u32 %s235, 1
        %s342 = scalar_lea.sflag [#allocation3], %s341
        %s343 = sand.u32 %s235, 1
        %s344 = smul.addr %s343, 16
        %s345 = scalar_lea.vmem [#allocation2], %s344
        %p346 = scmp.lt.s32.totalorder %s23, 1
        %s347 = scalar_select %p346, %s23, 1
        %s348 = smul.addr %s347, 8
        %s349 = scalar_lea.vmem %s1, %s348
        %p350 = scmp.lt.s32.totalorder %s23, 1
        %s351 = scalar_select %p350, %s23, 1
        %s352 = scalar_lea.vmem %s2, %s351
        %p353 = scmp.lt.s32.totalorder %s23, 1
        %s354 = scalar_select %p353, %s23, 1
        %s355 = scalar_lea.vmem %s8, %s354
        %v357 = vld [vmem:[%s0] sm:$0xff]
        %v358 = vld [vmem:[%s0 + $0x8] sm:$0xff]
        %v359 = vld [vmem:[%s349] sm:$0xff]
        %v360 = vld [vmem:[%s352] sm:$0x1]
        %v361 = vpack.c.bf16 %v359, %v359
        %v362 = vld [vmem:[%s3] sm:$0xff]
        %v363 = vld [vmem:[%s3 + $0x8] sm:$0xff]
        %v364 = vld [vmem:[%s3 + $0x10] sm:$0xff]
        %v365 = vld [vmem:[%s3 + $0x18] sm:$0xff]
        %v366 = vld [vmem:[%s3 + $0x20] sm:$0xff]
        %v367 = vld [vmem:[%s3 + $0x28] sm:$0xff]
        %v368 = vld [vmem:[%s3 + $0x30] sm:$0xff]
        %v369 = vld [vmem:[%s3 + $0x38] sm:$0xff]
        %v370 = vld [vmem:[%s3 + $0x40] sm:$0xff]
        %v371 = vld [vmem:[%s3 + $0x48] sm:$0xff]
        %v372 = vld [vmem:[%s3 + $0x50] sm:$0xff]
        %v373 = vld [vmem:[%s3 + $0x58] sm:$0xff]
        %v374 = vld [vmem:[%s3 + $0x60] sm:$0xff]
        %v375 = vld [vmem:[%s3 + $0x68] sm:$0xff]
        %v376 = vld [vmem:[%s3 + $0x70] sm:$0xff]
        %v377 = vld [vmem:[%s3 + $0x78] sm:$0xff]
        %v378 = vpack.c.bf16 %v363, %v362
        %v379 = vpack.c.bf16 %v365, %v364
        %v380 = vpack.c.bf16 %v367, %v366
        %v381 = vpack.c.bf16 %v369, %v368
        %v382 = vpack.c.bf16 %v371, %v370
        %v383 = vpack.c.bf16 %v373, %v372
        %v384 = vpack.c.bf16 %v375, %v374
        %v385 = vpack.c.bf16 %v377, %v376
        %386 = vmatprep.subr.bf16.mxu0 0
        %387 = vmatpush1.bf16.msra.mxu0 %v385
        %388 = vmatprep.subr.bf16.mxu0 0
        %389 = vmatpush1.bf16.msra.mxu0 %v384
        %390 = vmatprep.subr.bf16.mxu0 0
        %391 = vmatpush1.bf16.msra.mxu0 %v383
        %392 = vmatprep.subr.bf16.mxu0 0
        %393 = vmatpush1.bf16.msra.mxu0 %v382
        %394 = vmatprep.subr.bf16.mxu0 0
        %395 = vmatpush1.bf16.msra.mxu0 %v381
        %396 = vmatprep.subr.bf16.mxu0 0
        %397 = vmatpush1.bf16.msra.mxu0 %v380
        %398 = vmatprep.subr.bf16.mxu0 0
        %399 = vmatpush1.bf16.msra.mxu0 %v379
        %400 = vmatprep.subr.bf16.mxu0 0
        %401 = vmatpush1.bf16.msra.mxu0 %v378
        %402 = vmatprep.subr.bf16.mxu0 0
        %403 = vmatpush2.bf16.msra.mxu0 0
        %404 = vmatprep.subr.bf16.mxu0 0
        %405 = vmatpush2.bf16.msra.mxu0 0
        %406 = vmatprep.subr.bf16.mxu0 0
        %407 = vmatpush2.bf16.msra.mxu0 0
        %408 = vmatprep.subr.bf16.mxu0 0
        %409 = vmatpush2.bf16.msra.mxu0 0
        %410 = vmatprep.subr.bf16.mxu0 0
        %411 = vmatpush2.bf16.msra.mxu0 0
        %412 = vmatprep.subr.bf16.mxu0 0
        %413 = vmatpush2.bf16.msra.mxu0 0
        %414 = vmatprep.subr.bf16.mxu0 0
        %415 = vmatpush2.bf16.msra.mxu0 0
        %416 = vmatprep.subr.bf16.mxu0 0
        %417 = vmatpush2.bf16.msra.mxu0 0
        %418 = vmatprep.mubr.bf16.mxu0 0
        %419 = vmatmul.mubr.bf16.gmra.mxu0 %v361
        %v420 = vpop.f32.mrf.mxu0
        %v421 = vadd.f32 0.0, %v420
        %v422 = vpop.f32.mrf.mxu0
        %v423 = vpop.f32.mrf.mxu0
        %v424 = vpop.f32.mrf.mxu0
        %425 = vdwg.mxu0
        %v426 = vld [vmem:[%s4] sm:$0xff]
        %v427 = vld [vmem:[%s4 + $0x8] sm:$0xff]
        %v428 = vld [vmem:[%s4 + $0x10] sm:$0xff]
        %v429 = vld [vmem:[%s4 + $0x18] sm:$0xff]
        %v430 = vld [vmem:[%s4 + $0x20] sm:$0xff]
        %v431 = vld [vmem:[%s4 + $0x28] sm:$0xff]
        %v432 = vld [vmem:[%s4 + $0x30] sm:$0xff]
        %v433 = vld [vmem:[%s4 + $0x38] sm:$0xff]
        %v434 = vld [vmem:[%s4 + $0x40] sm:$0xff]
        %v435 = vld [vmem:[%s4 + $0x48] sm:$0xff]
        %v436 = vld [vmem:[%s4 + $0x50] sm:$0xff]
        %v437 = vld [vmem:[%s4 + $0x58] sm:$0xff]
        %v438 = vld [vmem:[%s4 + $0x60] sm:$0xff]
        %v439 = vld [vmem:[%s4 + $0x68] sm:$0xff]
        %v440 = vld [vmem:[%s4 + $0x70] sm:$0xff]
        %v441 = vld [vmem:[%s4 + $0x78] sm:$0xff]
        %v442 = vpack.c.bf16 %v427, %v426
        %v443 = vpack.c.bf16 %v429, %v428
        %v444 = vpack.c.bf16 %v431, %v430
        %v445 = vpack.c.bf16 %v433, %v432
        %v446 = vpack.c.bf16 %v435, %v434
        %v447 = vpack.c.bf16 %v437, %v436
        %v448 = vpack.c.bf16 %v439, %v438
        %v449 = vpack.c.bf16 %v441, %v440
        %450 = vmatprep.subr.bf16.mxu0 0
        %451 = vmatpush1.bf16.msra.mxu0 %v449
        %452 = vmatprep.subr.bf16.mxu0 0
        %453 = vmatpush1.bf16.msra.mxu0 %v448
        %454 = vmatprep.subr.bf16.mxu0 0
        %455 = vmatpush1.bf16.msra.mxu0 %v447
        %456 = vmatprep.subr.bf16.mxu0 0
        %457 = vmatpush1.bf16.msra.mxu0 %v446
        %458 = vmatprep.subr.bf16.mxu0 0
        %459 = vmatpush1.bf16.msra.mxu0 %v445
        %460 = vmatprep.subr.bf16.mxu0 0
        %461 = vmatpush1.bf16.msra.mxu0 %v444
        %462 = vmatprep.subr.bf16.mxu0 0
        %463 = vmatpush1.bf16.msra.mxu0 %v443
        %464 = vmatprep.subr.bf16.mxu0 0
        %465 = vmatpush1.bf16.msra.mxu0 %v442
        %466 = vmatprep.subr.bf16.mxu0 0
        %467 = vmatpush2.bf16.msra.mxu0 0
        %468 = vmatprep.subr.bf16.mxu0 0
        %469 = vmatpush2.bf16.msra.mxu0 0
        %470 = vmatprep.subr.bf16.mxu0 0
        %471 = vmatpush2.bf16.msra.mxu0 0
        %472 = vmatprep.subr.bf16.mxu0 0
        %473 = vmatpush2.bf16.msra.mxu0 0
        %474 = vmatprep.subr.bf16.mxu0 0
        %475 = vmatpush2.bf16.msra.mxu0 0
        %476 = vmatprep.subr.bf16.mxu0 0
        %477 = vmatpush2.bf16.msra.mxu0 0
        %478 = vmatprep.subr.bf16.mxu0 0
        %479 = vmatpush2.bf16.msra.mxu0 0
        %480 = vmatprep.subr.bf16.mxu0 0
        %481 = vmatpush2.bf16.msra.mxu0 0
        %482 = vmatprep.mubr.bf16.mxu0 0
        %483 = vmatmul.mubr.bf16.gmra.mxu0 %v361
        %v484 = vpop.f32.mrf.mxu0
        %v485 = vadd.f32 0.0, %v484
        %v486 = vpop.f32.mrf.mxu0
        %v487 = vpop.f32.mrf.mxu0
        %v488 = vpop.f32.mrf.mxu0
        %489 = vdwg.mxu0
        %vm490 = vcmp.gt.f32.partialorder %v360, 0.0
        %v491 = vsel %vm490, 0.0, -1e+09
        %v493 = vlaneseq
        %v494 = vshrl.u32 %v493, 7
        %v495 = vsub.s32 0, %v494
        %v496 = vrot.slane %v491, %v495
        %v498 = vmul.f32 %v357, 0.17677669
        %v499 = vmul.f32 %v358, 0.17677669
        %v500 = vpack.c.bf16 %v499, %v498
        %v501 = vpack.c.bf16 %v421, %v421
        %v502 = vpack.c.bf16 %v485, %v485
        %vm503 = vcmask 261120
        %v505 = vsel %vm503, %v500, 0
        %v508 = vsel %vm503, %v501, 0
        %510 = vmatprep.subr.bf16.mxu0 0
        %511 = vmatpush1.bf16.xpose.msra.mxu0 0
        %512 = vmatprep.subr.bf16.mxu0 0
        %513 = vmatpush1.bf16.xpose.msra.mxu0 0
        %514 = vmatprep.subr.bf16.mxu0 0
        %515 = vmatpush1.bf16.xpose.msra.mxu0 0
        %516 = vmatprep.subr.bf16.mxu0 0
        %517 = vmatpush1.bf16.xpose.msra.mxu0 0
        %518 = vmatprep.subr.bf16.mxu0 0
        %519 = vmatpush1.bf16.xpose.msra.mxu0 0
        %520 = vmatprep.subr.bf16.mxu0 0
        %521 = vmatpush1.bf16.xpose.msra.mxu0 0
        %522 = vmatprep.subr.bf16.mxu0 0
        %523 = vmatpush1.bf16.xpose.msra.mxu0 0
        %524 = vmatprep.subr.bf16.mxu0 0
        %525 = vmatpush1.bf16.xpose.msra.mxu0 %v508
        %526 = vmatprep.subr.bf16.mxu0 0
        %527 = vmatpush2.bf16.xpose.msra.mxu0 0
        %528 = vmatprep.subr.bf16.mxu0 0
        %529 = vmatpush2.bf16.xpose.msra.mxu0 0
        %530 = vmatprep.subr.bf16.mxu0 0
        %531 = vmatpush2.bf16.xpose.msra.mxu0 0
        %532 = vmatprep.subr.bf16.mxu0 0
        %533 = vmatpush2.bf16.xpose.msra.mxu0 0
        %534 = vmatprep.subr.bf16.mxu0 0
        %535 = vmatpush2.bf16.xpose.msra.mxu0 0
        %536 = vmatprep.subr.bf16.mxu0 0
        %537 = vmatpush2.bf16.xpose.msra.mxu0 0
        %538 = vmatprep.subr.bf16.mxu0 0
        %539 = vmatpush2.bf16.xpose.msra.mxu0 0
        %540 = vmatprep.subr.bf16.mxu0 0
        %541 = vmatpush2.bf16.xpose.msra.mxu0 0
        %542 = vmatprep.mubr.bf16.mxu0 0
        %543 = vmatmul.mubr.bf16.gmra.mxu0 %v505
        %v544 = vpop.f32.mrf.mxu0
        %v545 = vadd.f32 %v496, %v544
        %v546 = vpop.f32.mrf.mxu0
        %v547 = vpop.f32.mrf.mxu0
        %v548 = vadd.f32 %v496, %v547
        %v549 = vpop.f32.mrf.mxu0
        %550 = vdwg.mxu0
        %vm551 = vcmask 64512
        %v552 = vsel %vm551, %v545, -inf
        %553 = vmax.xlane.f32.xlu0 %v552
        %v554 = vpop.xlane.xlu0 %553
        %v555 = vsel %vm551, %v548, -inf
        %556 = vmax.xlane.f32.xlu0 %v555
        %v557 = vpop.xlane.xlu0 %556
        %v558 = vsub.f32 %v545, %v554
        %v559 = vsub.f32 %v548, %v557
        %v560 = vmul.f32 %v558, 1.442695
        %v561 = vpow.pop %v560
        %v562 = vmul.f32 %v559, 1.442695
        %v563 = vpow.pop %v562
        %v564 = vsel %vm551, %v561, 0.0
        %565 = vadd.xlane.f32.xlu0 %v564
        %v566 = vpop.xlane.xlu0 %565
        %v567 = vsel %vm551, %v563, 0.0
        %568 = vadd.xlane.f32.xlu0 %v567
        %v569 = vpop.xlane.xlu0 %568
        %v570 = vrcp.pop %v566
        %v571 = vrcp.pop %v569
        %v572 = vmul.f32 %v561, %v570
        %v573 = vmul.f32 %v563, %v571
        %v574 = vpack.c.bf16 %v573, %v572
        %v576 = vsel %vm551, %v574, 0
        %vm578 = vcmask 1043456
        %v580 = vsel %vm578, %v502, 0
        %582 = vmatprep.subr.bf16.mxu0 0
        %583 = vmatpush1.bf16.msra.mxu0 0
        %584 = vmatprep.subr.bf16.mxu0 0
        %585 = vmatpush1.bf16.msra.mxu0 0
        %586 = vmatprep.subr.bf16.mxu0 0
        %587 = vmatpush1.bf16.msra.mxu0 0
        %588 = vmatprep.subr.bf16.mxu0 0
        %589 = vmatpush1.bf16.msra.mxu0 0
        %590 = vmatprep.subr.bf16.mxu0 0
        %591 = vmatpush1.bf16.msra.mxu0 0
        %592 = vmatprep.subr.bf16.mxu0 0
        %593 = vmatpush1.bf16.msra.mxu0 0
        %594 = vmatprep.subr.bf16.mxu0 0
        %595 = vmatpush1.bf16.msra.mxu0 0
        %596 = vmatprep.subr.bf16.mxu0 0
        %597 = vmatpush1.bf16.msra.mxu0 %v580
        %598 = vmatprep.subr.bf16.mxu0 0
        %599 = vmatpush2.bf16.msra.mxu0 0
        %600 = vmatprep.subr.bf16.mxu0 0
        %601 = vmatpush2.bf16.msra.mxu0 0
        %602 = vmatprep.subr.bf16.mxu0 0
        %603 = vmatpush2.bf16.msra.mxu0 0
        %604 = vmatprep.subr.bf16.mxu0 0
        %605 = vmatpush2.bf16.msra.mxu0 0
        %606 = vmatprep.subr.bf16.mxu0 0
        %607 = vmatpush2.bf16.msra.mxu0 0
        %608 = vmatprep.subr.bf16.mxu0 0
        %609 = vmatpush2.bf16.msra.mxu0 0
        %610 = vmatprep.subr.bf16.mxu0 0
        %611 = vmatpush2.bf16.msra.mxu0 0
        %612 = vmatprep.subr.bf16.mxu0 0
        %613 = vmatpush2.bf16.msra.mxu0 0
        %614 = vmatprep.mubr.bf16.mxu0 0
        %615 = vmatmul.mubr.bf16.gmra.mxu0 %v576
        %v616 = vpop.f32.mrf.mxu0
        %v617 = vadd.f32 0.0, %v616
        %v618 = vpop.f32.mrf.mxu0
        %v619 = vpop.f32.mrf.mxu0
        %v620 = vadd.f32 0.0, %v619
        %v621 = vpop.f32.mrf.mxu0
        %622 = vdwg.mxu0
        %624 = vrot.lane.b32.xlu0 %v500, 96
        %v625 = vpop.permute.xlu0 %624
        %627 = vrot.lane.b32.xlu0 %v501, 96
        %v628 = vpop.permute.xlu0 %627
        %v630 = vsel %vm503, %v625, 0
        %v633 = vsel %vm503, %v628, 0
        %635 = vmatprep.subr.bf16.mxu0 0
        %636 = vmatpush1.bf16.xpose.msra.mxu0 0
        %637 = vmatprep.subr.bf16.mxu0 0
        %638 = vmatpush1.bf16.xpose.msra.mxu0 0
        %639 = vmatprep.subr.bf16.mxu0 0
        %640 = vmatpush1.bf16.xpose.msra.mxu0 0
        %641 = vmatprep.subr.bf16.mxu0 0
        %642 = vmatpush1.bf16.xpose.msra.mxu0 0
        %643 = vmatprep.subr.bf16.mxu0 0
        %644 = vmatpush1.bf16.xpose.msra.mxu0 0
        %645 = vmatprep.subr.bf16.mxu0 0
        %646 = vmatpush1.bf16.xpose.msra.mxu0 0
        %647 = vmatprep.subr.bf16.mxu0 0
        %648 = vmatpush1.bf16.xpose.msra.mxu0 0
        %649 = vmatprep.subr.bf16.mxu0 0
        %650 = vmatpush1.bf16.xpose.msra.mxu0 %v633
        %651 = vmatprep.subr.bf16.mxu0 0
        %652 = vmatpush2.bf16.xpose.msra.mxu0 0
        %653 = vmatprep.subr.bf16.mxu0 0
        %654 = vmatpush2.bf16.xpose.msra.mxu0 0
        %655 = vmatprep.subr.bf16.mxu0 0
        %656 = vmatpush2.bf16.xpose.msra.mxu0 0
        %657 = vmatprep.subr.bf16.mxu0 0
        %658 = vmatpush2.bf16.xpose.msra.mxu0 0
        %659 = vmatprep.subr.bf16.mxu0 0
        %660 = vmatpush2.bf16.xpose.msra.mxu0 0
        %661 = vmatprep.subr.bf16.mxu0 0
        %662 = vmatpush2.bf16.xpose.msra.mxu0 0
        %663 = vmatprep.subr.bf16.mxu0 0
        %664 = vmatpush2.bf16.xpose.msra.mxu0 0
        %665 = vmatprep.subr.bf16.mxu0 0
        %666 = vmatpush2.bf16.xpose.msra.mxu0 0
        %667 = vmatprep.mubr.bf16.mxu0 0
        %668 = vmatmul.mubr.bf16.gmra.mxu0 %v630
        %v669 = vpop.f32.mrf.mxu0
        %v670 = vadd.f32 %v496, %v669
        %v671 = vpop.f32.mrf.mxu0
        %v672 = vpop.f32.mrf.mxu0
        %v673 = vadd.f32 %v496, %v672
        %v674 = vpop.f32.mrf.mxu0
        %675 = vdwg.mxu0
        %v676 = vsel %vm551, %v670, -inf
        %677 = vmax.xlane.f32.xlu0 %v676
        %v678 = vpop.xlane.xlu0 %677
        %v679 = vsel %vm551, %v673, -inf
        %680 = vmax.xlane.f32.xlu0 %v679
        %v681 = vpop.xlane.xlu0 %680
        %v682 = vsub.f32 %v670, %v678
        %v683 = vsub.f32 %v673, %v681
        %v684 = vmul.f32 %v682, 1.442695
        %v685 = vpow.pop %v684
        %v686 = vmul.f32 %v683, 1.442695
        %v687 = vpow.pop %v686
        %v688 = vsel %vm551, %v685, 0.0
        %689 = vadd.xlane.f32.xlu0 %v688
        %v690 = vpop.xlane.xlu0 %689
        %v691 = vsel %vm551, %v687, 0.0
        %692 = vadd.xlane.f32.xlu0 %v691
        %v693 = vpop.xlane.xlu0 %692
        %v694 = vrcp.pop %v690
        %v695 = vrcp.pop %v693
        %v696 = vmul.f32 %v685, %v694
        %v697 = vmul.f32 %v687, %v695
        %v698 = vpack.c.bf16 %v697, %v696
        %700 = vrot.lane.b32.xlu0 %v502, 96
        %v701 = vpop.permute.xlu0 %700
        %v703 = vsel %vm551, %v698, 0
        %v706 = vsel %vm578, %v701, 0
        %708 = vmatprep.subr.bf16.mxu0 0
        %709 = vmatpush1.bf16.msra.mxu0 0
        %710 = vmatprep.subr.bf16.mxu0 0
        %711 = vmatpush1.bf16.msra.mxu0 0
        %712 = vmatprep.subr.bf16.mxu0 0
        %713 = vmatpush1.bf16.msra.mxu0 0
        %714 = vmatprep.subr.bf16.mxu0 0
        %715 = vmatpush1.bf16.msra.mxu0 0
        %716 = vmatprep.subr.bf16.mxu0 0
        %717 = vmatpush1.bf16.msra.mxu0 0
        %718 = vmatprep.subr.bf16.mxu0 0
        %719 = vmatpush1.bf16.msra.mxu0 0
        %720 = vmatprep.subr.bf16.mxu0 0
        %721 = vmatpush1.bf16.msra.mxu0 0
        %722 = vmatprep.subr.bf16.mxu0 0
        %723 = vmatpush1.bf16.msra.mxu0 %v706
        %724 = vmatprep.subr.bf16.mxu0 0
        %725 = vmatpush2.bf16.msra.mxu0 0
        %726 = vmatprep.subr.bf16.mxu0 0
        %727 = vmatpush2.bf16.msra.mxu0 0
        %728 = vmatprep.subr.bf16.mxu0 0
        %729 = vmatpush2.bf16.msra.mxu0 0
        %730 = vmatprep.subr.bf16.mxu0 0
        %731 = vmatpush2.bf16.msra.mxu0 0
        %732 = vmatprep.subr.bf16.mxu0 0
        %733 = vmatpush2.bf16.msra.mxu0 0
        %734 = vmatprep.subr.bf16.mxu0 0
        %735 = vmatpush2.bf16.msra.mxu0 0
        %736 = vmatprep.subr.bf16.mxu0 0
        %737 = vmatpush2.bf16.msra.mxu0 0
        %738 = vmatprep.subr.bf16.mxu0 0
        %739 = vmatpush2.bf16.msra.mxu0 0
        %740 = vmatprep.mubr.bf16.mxu0 0
        %741 = vmatmul.mubr.bf16.gmra.mxu0 %v703
        %v742 = vpop.f32.mrf.mxu0
        %v743 = vadd.f32 0.0, %v742
        %v744 = vpop.f32.mrf.mxu0
        %v745 = vpop.f32.mrf.mxu0
        %v746 = vadd.f32 0.0, %v745
        %v747 = vpop.f32.mrf.mxu0
        %748 = vdwg.mxu0
        %749 = vrot.lane.b32.xlu0 %v500, 64
        %v750 = vpop.permute.xlu0 %749
        %751 = vrot.lane.b32.xlu0 %v501, 64
        %v752 = vpop.permute.xlu0 %751
        %v754 = vsel %vm503, %v750, 0
        %v757 = vsel %vm503, %v752, 0
        %759 = vmatprep.subr.bf16.mxu0 0
        %760 = vmatpush1.bf16.xpose.msra.mxu0 0
        %761 = vmatprep.subr.bf16.mxu0 0
        %762 = vmatpush1.bf16.xpose.msra.mxu0 0
        %763 = vmatprep.subr.bf16.mxu0 0
        %764 = vmatpush1.bf16.xpose.msra.mxu0 0
        %765 = vmatprep.subr.bf16.mxu0 0
        %766 = vmatpush1.bf16.xpose.msra.mxu0 0
        %767 = vmatprep.subr.bf16.mxu0 0
        %768 = vmatpush1.bf16.xpose.msra.mxu0 0
        %769 = vmatprep.subr.bf16.mxu0 0
        %770 = vmatpush1.bf16.xpose.msra.mxu0 0
        %771 = vmatprep.subr.bf16.mxu0 0
        %772 = vmatpush1.bf16.xpose.msra.mxu0 0
        %773 = vmatprep.subr.bf16.mxu0 0
        %774 = vmatpush1.bf16.xpose.msra.mxu0 %v757
        %775 = vmatprep.subr.bf16.mxu0 0
        %776 = vmatpush2.bf16.xpose.msra.mxu0 0
        %777 = vmatprep.subr.bf16.mxu0 0
        %778 = vmatpush2.bf16.xpose.msra.mxu0 0
        %779 = vmatprep.subr.bf16.mxu0 0
        %780 = vmatpush2.bf16.xpose.msra.mxu0 0
        %781 = vmatprep.subr.bf16.mxu0 0
        %782 = vmatpush2.bf16.xpose.msra.mxu0 0
        %783 = vmatprep.subr.bf16.mxu0 0
        %784 = vmatpush2.bf16.xpose.msra.mxu0 0
        %785 = vmatprep.subr.bf16.mxu0 0
        %786 = vmatpush2.bf16.xpose.msra.mxu0 0
        %787 = vmatprep.subr.bf16.mxu0 0
        %788 = vmatpush2.bf16.xpose.msra.mxu0 0
        %789 = vmatprep.subr.bf16.mxu0 0
        %790 = vmatpush2.bf16.xpose.msra.mxu0 0
        %791 = vmatprep.mubr.bf16.mxu0 0
        %792 = vmatmul.mubr.bf16.gmra.mxu0 %v754
        %v793 = vpop.f32.mrf.mxu0
        %v794 = vadd.f32 %v496, %v793
        %v795 = vpop.f32.mrf.mxu0
        %v796 = vpop.f32.mrf.mxu0
        %v797 = vadd.f32 %v496, %v796
        %v798 = vpop.f32.mrf.mxu0
        %799 = vdwg.mxu0
        %v800 = vsel %vm551, %v794, -inf
        %801 = vmax.xlane.f32.xlu0 %v800
        %v802 = vpop.xlane.xlu0 %801
        %v803 = vsel %vm551, %v797, -inf
        %804 = vmax.xlane.f32.xlu0 %v803
        %v805 = vpop.xlane.xlu0 %804
        %v806 = vsub.f32 %v794, %v802
        %v807 = vsub.f32 %v797, %v805
        %v808 = vmul.f32 %v806, 1.442695
        %v809 = vpow.pop %v808
        %v810 = vmul.f32 %v807, 1.442695
        %v811 = vpow.pop %v810
        %v812 = vsel %vm551, %v809, 0.0
        %813 = vadd.xlane.f32.xlu0 %v812
        %v814 = vpop.xlane.xlu0 %813
        %v815 = vsel %vm551, %v811, 0.0
        %816 = vadd.xlane.f32.xlu0 %v815
        %v817 = vpop.xlane.xlu0 %816
        %v818 = vrcp.pop %v814
        %v819 = vrcp.pop %v817
        %v820 = vmul.f32 %v809, %v818
        %v821 = vmul.f32 %v811, %v819
        %v822 = vpack.c.bf16 %v821, %v820
        %823 = vrot.lane.b32.xlu0 %v502, 64
        %v824 = vpop.permute.xlu0 %823
        %v826 = vsel %vm551, %v822, 0
        %v829 = vsel %vm578, %v824, 0
        %831 = vmatprep.subr.bf16.mxu0 0
        %832 = vmatpush1.bf16.msra.mxu0 0
        %833 = vmatprep.subr.bf16.mxu0 0
        %834 = vmatpush1.bf16.msra.mxu0 0
        %835 = vmatprep.subr.bf16.mxu0 0
        %836 = vmatpush1.bf16.msra.mxu0 0
        %837 = vmatprep.subr.bf16.mxu0 0
        %838 = vmatpush1.bf16.msra.mxu0 0
        %839 = vmatprep.subr.bf16.mxu0 0
        %840 = vmatpush1.bf16.msra.mxu0 0
        %841 = vmatprep.subr.bf16.mxu0 0
        %842 = vmatpush1.bf16.msra.mxu0 0
        %843 = vmatprep.subr.bf16.mxu0 0
        %844 = vmatpush1.bf16.msra.mxu0 0
        %845 = vmatprep.subr.bf16.mxu0 0
        %846 = vmatpush1.bf16.msra.mxu0 %v829
        %847 = vmatprep.subr.bf16.mxu0 0
        %848 = vmatpush2.bf16.msra.mxu0 0
        %849 = vmatprep.subr.bf16.mxu0 0
        %850 = vmatpush2.bf16.msra.mxu0 0
        %851 = vmatprep.subr.bf16.mxu0 0
        %852 = vmatpush2.bf16.msra.mxu0 0
        %853 = vmatprep.subr.bf16.mxu0 0
        %854 = vmatpush2.bf16.msra.mxu0 0
        %855 = vmatprep.subr.bf16.mxu0 0
        %856 = vmatpush2.bf16.msra.mxu0 0
        %857 = vmatprep.subr.bf16.mxu0 0
        %858 = vmatpush2.bf16.msra.mxu0 0
        %859 = vmatprep.subr.bf16.mxu0 0
        %860 = vmatpush2.bf16.msra.mxu0 0
        %861 = vmatprep.subr.bf16.mxu0 0
        %862 = vmatpush2.bf16.msra.mxu0 0
        %863 = vmatprep.mubr.bf16.mxu0 0
        %864 = vmatmul.mubr.bf16.gmra.mxu0 %v826
        %v865 = vpop.f32.mrf.mxu0
        %v866 = vadd.f32 0.0, %v865
        %v867 = vpop.f32.mrf.mxu0
        %v868 = vpop.f32.mrf.mxu0
        %v869 = vadd.f32 0.0, %v868
        %v870 = vpop.f32.mrf.mxu0
        %871 = vdwg.mxu0
        %872 = vrot.lane.b32.xlu0 %v500, 32
        %v873 = vpop.permute.xlu0 %872
        %874 = vrot.lane.b32.xlu0 %v501, 32
        %v875 = vpop.permute.xlu0 %874
        %v877 = vsel %vm503, %v873, 0
        %v880 = vsel %vm503, %v875, 0
        %882 = vmatprep.subr.bf16.mxu0 0
        %883 = vmatpush1.bf16.xpose.msra.mxu0 0
        %884 = vmatprep.subr.bf16.mxu0 0
        %885 = vmatpush1.bf16.xpose.msra.mxu0 0
        %886 = vmatprep.subr.bf16.mxu0 0
        %887 = vmatpush1.bf16.xpose.msra.mxu0 0
        %888 = vmatprep.subr.bf16.mxu0 0
        %889 = vmatpush1.bf16.xpose.msra.mxu0 0
        %890 = vmatprep.subr.bf16.mxu0 0
        %891 = vmatpush1.bf16.xpose.msra.mxu0 0
        %892 = vmatprep.subr.bf16.mxu0 0
        %893 = vmatpush1.bf16.xpose.msra.mxu0 0
        %894 = vmatprep.subr.bf16.mxu0 0
        %895 = vmatpush1.bf16.xpose.msra.mxu0 0
        %896 = vmatprep.subr.bf16.mxu0 0
        %897 = vmatpush1.bf16.xpose.msra.mxu0 %v880
        %898 = vmatprep.subr.bf16.mxu0 0
        %899 = vmatpush2.bf16.xpose.msra.mxu0 0
        %900 = vmatprep.subr.bf16.mxu0 0
        %901 = vmatpush2.bf16.xpose.msra.mxu0 0
        %902 = vmatprep.subr.bf16.mxu0 0
        %903 = vmatpush2.bf16.xpose.msra.mxu0 0
        %904 = vmatprep.subr.bf16.mxu0 0
        %905 = vmatpush2.bf16.xpose.msra.mxu0 0
        %906 = vmatprep.subr.bf16.mxu0 0
        %907 = vmatpush2.bf16.xpose.msra.mxu0 0
        %908 = vmatprep.subr.bf16.mxu0 0
        %909 = vmatpush2.bf16.xpose.msra.mxu0 0
        %910 = vmatprep.subr.bf16.mxu0 0
        %911 = vmatpush2.bf16.xpose.msra.mxu0 0
        %912 = vmatprep.subr.bf16.mxu0 0
        %913 = vmatpush2.bf16.xpose.msra.mxu0 0
        %914 = vmatprep.mubr.bf16.mxu0 0
        %915 = vmatmul.mubr.bf16.gmra.mxu0 %v877
        %v916 = vpop.f32.mrf.mxu0
        %v917 = vadd.f32 %v496, %v916
        %v918 = vpop.f32.mrf.mxu0
        %v919 = vpop.f32.mrf.mxu0
        %v920 = vadd.f32 %v496, %v919
        %v921 = vpop.f32.mrf.mxu0
        %922 = vdwg.mxu0
        %v923 = vsel %vm551, %v917, -inf
        %924 = vmax.xlane.f32.xlu0 %v923
        %v925 = vpop.xlane.xlu0 %924
        %v926 = vsel %vm551, %v920, -inf
        %927 = vmax.xlane.f32.xlu0 %v926
        %v928 = vpop.xlane.xlu0 %927
        %v929 = vsub.f32 %v917, %v925
        %v930 = vsub.f32 %v920, %v928
        %v931 = vmul.f32 %v929, 1.442695
        %v932 = vpow.pop %v931
        %v933 = vmul.f32 %v930, 1.442695
        %v934 = vpow.pop %v933
        %v935 = vsel %vm551, %v932, 0.0
        %936 = vadd.xlane.f32.xlu0 %v935
        %v937 = vpop.xlane.xlu0 %936
        %v938 = vsel %vm551, %v934, 0.0
        %939 = vadd.xlane.f32.xlu0 %v938
        %v940 = vpop.xlane.xlu0 %939
        %v941 = vrcp.pop %v937
        %v942 = vrcp.pop %v940
        %v943 = vmul.f32 %v932, %v941
        %v944 = vmul.f32 %v934, %v942
        %v945 = vpack.c.bf16 %v944, %v943
        %946 = vrot.lane.b32.xlu0 %v502, 32
        %v947 = vpop.permute.xlu0 %946
        %v949 = vsel %vm551, %v945, 0
        %v952 = vsel %vm578, %v947, 0
        %954 = vmatprep.subr.bf16.mxu0 0
        %955 = vmatpush1.bf16.msra.mxu0 0
        %956 = vmatprep.subr.bf16.mxu0 0
        %957 = vmatpush1.bf16.msra.mxu0 0
        %958 = vmatprep.subr.bf16.mxu0 0
        %959 = vmatpush1.bf16.msra.mxu0 0
        %960 = vmatprep.subr.bf16.mxu0 0
        %961 = vmatpush1.bf16.msra.mxu0 0
        %962 = vmatprep.subr.bf16.mxu0 0
        %963 = vmatpush1.bf16.msra.mxu0 0
        %964 = vmatprep.subr.bf16.mxu0 0
        %965 = vmatpush1.bf16.msra.mxu0 0
        %966 = vmatprep.subr.bf16.mxu0 0
        %967 = vmatpush1.bf16.msra.mxu0 0
        %968 = vmatprep.subr.bf16.mxu0 0
        %969 = vmatpush1.bf16.msra.mxu0 %v952
        %970 = vmatprep.subr.bf16.mxu0 0
        %971 = vmatpush2.bf16.msra.mxu0 0
        %972 = vmatprep.subr.bf16.mxu0 0
        %973 = vmatpush2.bf16.msra.mxu0 0
        %974 = vmatprep.subr.bf16.mxu0 0
        %975 = vmatpush2.bf16.msra.mxu0 0
        %976 = vmatprep.subr.bf16.mxu0 0
        %977 = vmatpush2.bf16.msra.mxu0 0
        %978 = vmatprep.subr.bf16.mxu0 0
        %979 = vmatpush2.bf16.msra.mxu0 0
        %980 = vmatprep.subr.bf16.mxu0 0
        %981 = vmatpush2.bf16.msra.mxu0 0
        %982 = vmatprep.subr.bf16.mxu0 0
        %983 = vmatpush2.bf16.msra.mxu0 0
        %984 = vmatprep.subr.bf16.mxu0 0
        %985 = vmatpush2.bf16.msra.mxu0 0
        %986 = vmatprep.mubr.bf16.mxu0 0
        %987 = vmatmul.mubr.bf16.gmra.mxu0 %v949
        %v988 = vpop.f32.mrf.mxu0
        %v989 = vadd.f32 0.0, %v988
        %v990 = vpop.f32.mrf.mxu0
        %v991 = vpop.f32.mrf.mxu0
        %v992 = vadd.f32 0.0, %v991
        %v993 = vpop.f32.mrf.mxu0
        %994 = vdwg.mxu0
        %997 = vrot.lane.b32.xlu0 %v743, 32
        %v998 = vpop.permute.xlu0 %997
        %999 = vrot.lane.b32.xlu0 %v746, 32
        %v1000 = vpop.permute.xlu0 %999
        %1005 = vrot.lane.b32.xlu0 %v866, 64
        %v1006 = vpop.permute.xlu0 %1005
        %1007 = vrot.lane.b32.xlu0 %v869, 64
        %v1008 = vpop.permute.xlu0 %1007
        %1013 = vrot.lane.b32.xlu0 %v989, 96
        %v1014 = vpop.permute.xlu0 %1013
        %1015 = vrot.lane.b32.xlu0 %v992, 96
        %v1016 = vpop.permute.xlu0 %1015
        %v1019 = vsel %vm503, %v617, %v998
        %v1020 = vsel %vm503, %v620, %v1000
        %vm1021 = vcmask 523264
        %v1022 = vsel %vm1021, %v1019, %v1006
        %v1023 = vsel %vm1021, %v1020, %v1008
        %vm1024 = vcmask 785408
        %v1025 = vsel %vm1024, %v1022, %v1014
        %v1026 = vsel %vm1024, %v1023, %v1016
        %v1027 = vpack.c.bf16 %v1026, %v1025
        %v1028 = vld [vmem:[%s5] sm:$0xff]
        %v1029 = vld [vmem:[%s5 + $0x8] sm:$0xff]
        %v1030 = vld [vmem:[%s5 + $0x10] sm:$0xff]
        %v1031 = vld [vmem:[%s5 + $0x18] sm:$0xff]
        %v1032 = vld [vmem:[%s5 + $0x20] sm:$0xff]
        %v1033 = vld [vmem:[%s5 + $0x28] sm:$0xff]
        %v1034 = vld [vmem:[%s5 + $0x30] sm:$0xff]
        %v1035 = vld [vmem:[%s5 + $0x38] sm:$0xff]
        %v1036 = vld [vmem:[%s5 + $0x40] sm:$0xff]
        %v1037 = vld [vmem:[%s5 + $0x48] sm:$0xff]
        %v1038 = vld [vmem:[%s5 + $0x50] sm:$0xff]
        %v1039 = vld [vmem:[%s5 + $0x58] sm:$0xff]
        %v1040 = vld [vmem:[%s5 + $0x60] sm:$0xff]
        %v1041 = vld [vmem:[%s5 + $0x68] sm:$0xff]
        %v1042 = vld [vmem:[%s5 + $0x70] sm:$0xff]
        %v1043 = vld [vmem:[%s5 + $0x78] sm:$0xff]
        %v1044 = vpack.c.bf16 %v1029, %v1028
        %v1045 = vpack.c.bf16 %v1031, %v1030
        %v1046 = vpack.c.bf16 %v1033, %v1032
        %v1047 = vpack.c.bf16 %v1035, %v1034
        %v1048 = vpack.c.bf16 %v1037, %v1036
        %v1049 = vpack.c.bf16 %v1039, %v1038
        %v1050 = vpack.c.bf16 %v1041, %v1040
        %v1051 = vpack.c.bf16 %v1043, %v1042
        %v1052 = vld [vmem:[%s6] sm:$0x1]
        %v1054 = vlaneseq
        %v1055 = vshrl.u32 %v1054, 7
        %v1056 = vsub.s32 0, %v1055
        %v1057 = vrot.slane %v1052, %v1056
        %1059 = vmatprep.subr.bf16.mxu0 0
        %1060 = vmatpush1.bf16.msra.mxu0 %v1051
        %1061 = vmatprep.subr.bf16.mxu0 0
        %1062 = vmatpush1.bf16.msra.mxu0 %v1050
        %1063 = vmatprep.subr.bf16.mxu0 0
        %1064 = vmatpush1.bf16.msra.mxu0 %v1049
        %1065 = vmatprep.subr.bf16.mxu0 0
        %1066 = vmatpush1.bf16.msra.mxu0 %v1048
        %1067 = vmatprep.subr.bf16.mxu0 0
        %1068 = vmatpush1.bf16.msra.mxu0 %v1047
        %1069 = vmatprep.subr.bf16.mxu0 0
        %1070 = vmatpush1.bf16.msra.mxu0 %v1046
        %1071 = vmatprep.subr.bf16.mxu0 0
        %1072 = vmatpush1.bf16.msra.mxu0 %v1045
        %1073 = vmatprep.subr.bf16.mxu0 0
        %1074 = vmatpush1.bf16.msra.mxu0 %v1044
        %1075 = vmatprep.subr.bf16.mxu0 0
        %1076 = vmatpush2.bf16.msra.mxu0 0
        %1077 = vmatprep.subr.bf16.mxu0 0
        %1078 = vmatpush2.bf16.msra.mxu0 0
        %1079 = vmatprep.subr.bf16.mxu0 0
        %1080 = vmatpush2.bf16.msra.mxu0 0
        %1081 = vmatprep.subr.bf16.mxu0 0
        %1082 = vmatpush2.bf16.msra.mxu0 0
        %1083 = vmatprep.subr.bf16.mxu0 0
        %1084 = vmatpush2.bf16.msra.mxu0 0
        %1085 = vmatprep.subr.bf16.mxu0 0
        %1086 = vmatpush2.bf16.msra.mxu0 0
        %1087 = vmatprep.subr.bf16.mxu0 0
        %1088 = vmatpush2.bf16.msra.mxu0 0
        %1089 = vmatprep.subr.bf16.mxu0 0
        %1090 = vmatpush2.bf16.msra.mxu0 0
        %1091 = vmatprep.mubr.bf16.mxu0 0
        %1092 = vmatmul.mubr.bf16.gmra.mxu0 %v1027
        %v1093 = vpop.f32.mrf.mxu0
        %v1094 = vadd.f32 %v1057, %v1093
        %v1095 = vpop.f32.mrf.mxu0
        %v1096 = vpop.f32.mrf.mxu0
        %v1097 = vadd.f32 %v1057, %v1096
        %v1098 = vpop.f32.mrf.mxu0
        %1099 = vdwg.mxu0
        %v1100 = vmax.f32 %v1094, 0.0
        %v1101 = vmax.f32 %v1097, 0.0
        %v1102 = vpack.c.bf16 %v1101, %v1100
        %v1103 = vld [vmem:[%s7] sm:$0xff]
        %v1104 = vld [vmem:[%s7 + $0x8] sm:$0xff]
        %v1105 = vld [vmem:[%s7 + $0x10] sm:$0xff]
        %v1106 = vld [vmem:[%s7 + $0x18] sm:$0xff]
        %v1107 = vld [vmem:[%s7 + $0x20] sm:$0xff]
        %v1108 = vld [vmem:[%s7 + $0x28] sm:$0xff]
        %v1109 = vld [vmem:[%s7 + $0x30] sm:$0xff]
        %v1110 = vld [vmem:[%s7 + $0x38] sm:$0xff]
        %v1111 = vld [vmem:[%s7 + $0x40] sm:$0xff]
        %v1112 = vld [vmem:[%s7 + $0x48] sm:$0xff]
        %v1113 = vld [vmem:[%s7 + $0x50] sm:$0xff]
        %v1114 = vld [vmem:[%s7 + $0x58] sm:$0xff]
        %v1115 = vld [vmem:[%s7 + $0x60] sm:$0xff]
        %v1116 = vld [vmem:[%s7 + $0x68] sm:$0xff]
        %v1117 = vld [vmem:[%s7 + $0x70] sm:$0xff]
        %v1118 = vld [vmem:[%s7 + $0x78] sm:$0xff]
        %v1119 = vpack.c.bf16 %v1104, %v1103
        %v1120 = vpack.c.bf16 %v1106, %v1105
        %v1121 = vpack.c.bf16 %v1108, %v1107
        %v1122 = vpack.c.bf16 %v1110, %v1109
        %v1123 = vpack.c.bf16 %v1112, %v1111
        %v1124 = vpack.c.bf16 %v1114, %v1113
        %v1125 = vpack.c.bf16 %v1116, %v1115
        %v1126 = vpack.c.bf16 %v1118, %v1117
        %v1127 = vld [vmem:[%s355] sm:$0x1]
        %v1129 = vlaneseq
        %v1130 = vshrl.u32 %v1129, 7
        %v1131 = vsub.s32 0, %v1130
        %v1132 = vrot.slane %v1127, %v1131
        %1134 = vmatprep.subr.bf16.mxu0 0
        %1135 = vmatpush1.bf16.msra.mxu0 %v1126
        %1136 = vmatprep.subr.bf16.mxu0 0
        %1137 = vmatpush1.bf16.msra.mxu0 %v1125
        %1138 = vmatprep.subr.bf16.mxu0 0
        %1139 = vmatpush1.bf16.msra.mxu0 %v1124
        %1140 = vmatprep.subr.bf16.mxu0 0
        %1141 = vmatpush1.bf16.msra.mxu0 %v1123
        %1142 = vmatprep.subr.bf16.mxu0 0
        %1143 = vmatpush1.bf16.msra.mxu0 %v1122
        %1144 = vmatprep.subr.bf16.mxu0 0
        %1145 = vmatpush1.bf16.msra.mxu0 %v1121
        %1146 = vmatprep.subr.bf16.mxu0 0
        %1147 = vmatpush1.bf16.msra.mxu0 %v1120
        %1148 = vmatprep.subr.bf16.mxu0 0
        %1149 = vmatpush1.bf16.msra.mxu0 %v1119
        %1150 = vmatprep.subr.bf16.mxu0 0
        %1151 = vmatpush2.bf16.msra.mxu0 0
        %1152 = vmatprep.subr.bf16.mxu0 0
        %1153 = vmatpush2.bf16.msra.mxu0 0
        %1154 = vmatprep.subr.bf16.mxu0 0
        %1155 = vmatpush2.bf16.msra.mxu0 0
        %1156 = vmatprep.subr.bf16.mxu0 0
        %1157 = vmatpush2.bf16.msra.mxu0 0
        %1158 = vmatprep.subr.bf16.mxu0 0
        %1159 = vmatpush2.bf16.msra.mxu0 0
        %1160 = vmatprep.subr.bf16.mxu0 0
        %1161 = vmatpush2.bf16.msra.mxu0 0
        %1162 = vmatprep.subr.bf16.mxu0 0
        %1163 = vmatpush2.bf16.msra.mxu0 0
        %1164 = vmatprep.subr.bf16.mxu0 0
        %1165 = vmatpush2.bf16.msra.mxu0 0
        %1166 = vmatprep.mubr.bf16.mxu0 0
        %1167 = vmatmul.mubr.bf16.gmra.mxu0 %v1102
        %v1168 = vpop.f32.mrf.mxu0
        %v1169 = vadd.f32 %v1132, %v1168
        %v1170 = vpop.f32.mrf.mxu0
        %v1171 = vpop.f32.mrf.mxu0
        %v1172 = vadd.f32 %v1132, %v1171
        %v1173 = vpop.f32.mrf.mxu0
        %1174 = vdwg.mxu0
        %1175 = vst [vmem:[%s345] sm:$0xff] %v1169
        %1176 = vst [vmem:[%s345 + $0x8] sm:$0xff] %v1172
        %s1177 = sand.u32 %s235, 1
        %s1178 = scalar_lea.sflag [#allocation3], %s1177
        %s1179 = sand.u32 %s235, 1
        %s1180 = smul.addr %s1179, 16
        %s1181 = scalar_lea.vmem [#allocation2], %s1180
        // Predicated region
        $region57: #{multidcp_forward.3} parent=55 // pred_check
          %p1182 = pneg %p245
        $region58: #{multidcp_forward.3} parent=55 // pred_check_branch
          %1184 = sbr.rel (%p1182) target = $region60
        $region59: #{multidcp_forward.3} parent=55 // pred_region
          %s1186 = ssub.s32 256, 256
          %1187 = vsyncadd %s1178, %s1186
          %s1188 = smul.addr %s23, 2
          %s1189 = smul.addr %s1188, 128
          %s1190 = scalar_lea.hbm %s9, %s1189
          %s1191 = sshll.u32 %s1181, 4
          %s1192 = int_to_ptr.vmem [resolvable:$true] %s1191
          %1197 = dma.vmem_to_hbm [thread:$0]  %s1192, 256, %s1190, %s1178, 128, 128, 8
        $region60: #{multidcp_forward.3} parent=55 // pred_fallthru
          _
      $region56: #{multidcp_forward.3} parent=5 // pred_fallthru
        _
      %p1198 = scmp.le.s32.totalorder 2, %s18
      // Predicated region
      $region61: #{multidcp_forward.3} parent=5 // pred_check
        %p1199 = pneg %p1198
      $region62: #{multidcp_forward.3} parent=5 // pred_check_branch
        %1201 = sbr.rel (%p1199) target = $region64
      $region63: #{multidcp_forward.3} parent=5 // pred_region
        %s1202 = ssub.s32 %s18, 2
        // Predicated region
        $region65: #{multidcp_forward.3} parent=63 // pred_check
          %p1203 = pneg %p251
        $region66: #{multidcp_forward.3} parent=63 // pred_check_branch
          %1205 = sbr.rel (%p1203) target = $region68
        $region67: #{multidcp_forward.3} parent=63 // pred_region
          %s1206 = sand.u32 %s236, 1
          %s1207 = scalar_lea.sflag [#allocation3], %s1206
          %s1208 = sand.u32 %s236, 1
          %s1209 = smul.addr %s1208, 16
          %s1210 = scalar_lea.vmem [#allocation2], %s1209
          %1211 = dma.done %s1207, 256
        $region68: #{multidcp_forward.3} parent=63 // pred_fallthru
          _
      $region64: #{multidcp_forward.3} parent=5 // pred_fallthru
        _
    $region6: #{multidcp_forward.3} parent=1 // loop_footer
      %s22 = sadd.s32 1, %s18
    $region7: #{multidcp_forward.3} parent=1 // loop_footer_branch
      %17 = sbr.rel target = $region3
    $region8: #{multidcp_forward.3} parent=1 // loop_exit
      _
    %1212 = vsyncpa [#allocation3], 1
    %s1213 = scalar_lea.sflag [#allocation3], 1
    %1214 = vsyncpa %s1213, 1

</llo_original>
